<compile_context>
chip_gen: v5e
topology: v5e:2x2
jax: 0.10.0
libtpu: 0.0.40
codegen_flags: <defaults>
</compile_context>

<pallas_src>
import jax
import jax.numpy as jnp
from jax.experimental import pallas as pl
from jax.experimental.pallas import tpu as pltpu


# ---------------------------- Pallas kernels ----------------------------

def _conv_bn_relu_kernel(p_ref, w_ref, b_ref, g_ref, bt_ref, o_ref):
    # p_ref : (M, 9*Cin)  im2col patches, M = N*H*W
    # w_ref : (9*Cin, Cout)
    # b/g/bt: (1, Cout)   conv bias, BN gamma, BN beta
    # o_ref : (M, Cout)
    y = jnp.dot(p_ref[...], w_ref[...], preferred_element_type=jnp.float32)
    y = y + b_ref[...]
    mean = jnp.mean(y, axis=0, keepdims=True)                 # batch stats
    var = jnp.mean(jnp.square(y - mean), axis=0, keepdims=True)
    out = (y - mean) * jax.lax.rsqrt(var + 1e-5) * g_ref[...] + bt_ref[...]
    o_ref[...] = jnp.maximum(out, 0.0)


def _conv_bn_res_relu_kernel(p_ref, w_ref, b_ref, g_ref, bt_ref, r_ref, o_ref):
    # Same as above plus a residual add (r_ref: (M, Cout)) before the ReLU.
    y = jnp.dot(p_ref[...], w_ref[...], preferred_element_type=jnp.float32)
    y = y + b_ref[...]
    mean = jnp.mean(y, axis=0, keepdims=True)
    var = jnp.mean(jnp.square(y - mean), axis=0, keepdims=True)
    out = (y - mean) * jax.lax.rsqrt(var + 1e-5) * g_ref[...] + bt_ref[...]
    out = out + r_ref[...]
    o_ref[...] = jnp.maximum(out, 0.0)


# ---------------------------- Wrappers ----------------------------

def _im2col(x):
    """(N,H,W,Cin) -> (N*H*W, 9*Cin) patches for a 3x3 SAME conv.

    Emitted as a single XLA fusion (pad + 9 window slices + concat + reshape)
    producing one contiguous operand; column order is (kh, kw, cin), matching
    w.reshape(9*Cin, Cout) for HWIO weights.
    """
    n, h, w, c = x.shape
    xp = jnp.pad(x, ((0, 0), (1, 1), (1, 1), (0, 0)))
    cols = [xp[:, kh:kh + h, kw:kw + w, :] for kh in range(3) for kw in range(3)]
    return jnp.concatenate(cols, axis=-1).reshape(n * h * w, 9 * c)


def conv_bn_relu(x, w, b, gamma, beta, residual=None):
    """Fused 3x3 conv (pad=1) + bias + training-mode BN + (residual) + ReLU.

    x: (N,H,W,Cin) f32; w: (3,3,Cin,Cout); b/gamma/beta: (Cout,);
    residual: optional (N,H,W,Cout).  Returns (N,H,W,Cout) f32.
    One pallas_call, no grid (everything fits VMEM at these shapes).
    """
    n, h, wd, cin = x.shape
    cout = w.shape[-1]
    m = n * h * wd

    patches = _im2col(x)
    args = [patches,
            w.reshape(9 * cin, cout),
            b.reshape(1, cout),
            gamma.reshape(1, cout),
            beta.reshape(1, cout)]
    kernel = _conv_bn_relu_kernel
    if residual is not None:
        kernel = _conv_bn_res_relu_kernel
        args.append(residual.reshape(m, cout))

    vmem = pl.BlockSpec(memory_space=pltpu.MemorySpace.VMEM)
    out = pl.pallas_call(
        kernel,
        out_shape=jax.ShapeDtypeStruct((m, cout), jnp.float32),
        in_specs=[vmem] * len(args),
        out_specs=vmem,
    )(*args)
    return out.reshape(n, h, wd, cout)


def maxpool2(x):
    # nn.MaxPool2d(2) on NHWC (even spatial dims). Cheap data-movement glue.
    n, h, w, c = x.shape
    return x.reshape(n, h // 2, 2, w // 2, 2, c).max(axis=(2, 4))


def conv_block(x, p):
    # ConvBlock: Conv(in,out) -> Conv(out,out) -> conv3 -> bn -> +x1 -> relu
    x1 = conv_bn_relu(x, p['w1'], p['b1'], p['g1'], p['bt1'])
    y = conv_bn_relu(x1, p['w2'], p['b2'], p['g2'], p['bt2'])
    y = conv_bn_relu(y, p['w3'], p['b3'], p['g3'], p['bt3'], residual=x1)
    return y


def encoder_forward_nchw(x_nchw, params):
    x = jnp.transpose(x_nchw, (0, 2, 3, 1))        # NCHW -> NHWC
    res = []
    for i, p in enumerate(params):
        if i > 0:
            x = maxpool2(x)
        x = conv_block(x, p)
        res.append(jnp.transpose(x, (0, 3, 1, 2)))  # back to NCHW
    return res


# ---------------------------- Parameters ----------------------------

def init_params(key, in_ch=3, out_ch=8, depth=3):
    params = []
    for _ in range(depth):
        key, k1, k2, k3, kb1, kb2, kb3 = jax.random.split(key, 7)
        p = {
            'w1': 0.1 * jax.random.normal(k1, (3, 3, in_ch, out_ch), jnp.float32),
            'b1': 0.01 * jax.random.normal(kb1, (out_ch,), jnp.float32),
            'g1': jnp.ones((out_ch,), jnp.float32),
            'bt1': jnp.zeros((out_ch,), jnp.float32),
            'w2': 0.1 * jax.random.normal(k2, (3, 3, out_ch, out_ch), jnp.float32),
            'b2': 0.01 * jax.random.normal(kb2, (out_ch,), jnp.float32),
            'g2': jnp.ones((out_ch,), jnp.float32),
            'bt2': jnp.zeros((out_ch,), jnp.float32),
            'w3': 0.1 * jax.random.normal(k3, (3, 3, out_ch, out_ch), jnp.float32),
            'b3': 0.01 * jax.random.normal(kb3, (out_ch,), jnp.float32),
            'g3': jnp.ones((out_ch,), jnp.float32),
            'bt3': jnp.zeros((out_ch,), jnp.float32),
        }
        params.append(p)
        in_ch = out_ch
        out_ch *= 2
    return params


# ---------------------------- Pure-JAX reference ----------------------------
# Uses XLA's conv at default precision (same MXU precision class as the
# Pallas kernel) so the comparison isolates structural correctness.

def _ref_conv3x3(x, w, b):
    out = jax.lax.conv_general_dilated(
        x, w, window_strides=(1, 1), padding='SAME',
        dimension_numbers=('NHWC', 'HWIO', 'NHWC'))
    return out + b


def _ref_bn_relu(y, gamma, beta, residual=None):
    m = jnp.mean(y, axis=(0, 1, 2), keepdims=True)
    v = jnp.mean(jnp.square(y - m), axis=(0, 1, 2), keepdims=True)
    out = (y - m) * jax.lax.rsqrt(v + 1e-5) * gamma + beta
    if residual is not None:
        out = out + residual
    return jnp.maximum(out, 0.0)


def encoder_forward_ref(x_nchw, params):
    x = jnp.transpose(x_nchw, (0, 2, 3, 1))
    res = []
    for i, p in enumerate(params):
        if i > 0:
            x = maxpool2(x)
        x1 = _ref_bn_relu(_ref_conv3x3(x, p['w1'], p['b1']), p['g1'], p['bt1'])
        y = _ref_bn_relu(_ref_conv3x3(x1, p['w2'], p['b2']), p['g2'], p['bt2'])
        y = _ref_conv3x3(y, p['w3'], p['b3'])
        y = _ref_bn_relu(y, p['g3'], p['bt3'], residual=x1)
        x = y
        res.append(jnp.transpose(x, (0, 3, 1, 2)))
    return res


# ---------------------------- Main ----------------------------

if __name__ == "__main__":
    key = jax.random.PRNGKey(0)
    kx, kp = jax.random.split(key)

    N, C, H, W = 2, 3, 16, 16          # small NCHW input, like the torch module
    depth, base_out = 3, 8             # channels: 8 -> 16 -> 32; spatial 16 -> 8 -> 4

    x_nchw = jax.random.normal(kx, (N, C, H, W), jnp.float32)
    params = init_params(kp, in_ch=C, out_ch=base_out, depth=depth)

    fwd = jax.jit(encoder_forward_nchw)
    outs = fwd(x_nchw, params)
    outs = jax.block_until_ready(outs)

    refs = encoder_forward_ref(x_nchw, params)
    # Both paths use default (non-HIGHEST) MXU precision; tolerance covers the
    # residual bf16-pass rounding-order differences across 9 conv layers while
    # still catching any structural bug (wrong tap / BN / residual / ReLU).
    for lvl, (o, r) in enumerate(zip(outs, refs)):
        assert o.shape == r.shape, (o.shape, r.shape)
        err = float(jnp.max(jnp.abs(o - r)))
        assert err < 3e-2, f"level {lvl} mismatch, max abs err = {err}"

    print("KERNEL_OK")
</pallas_src>

<mosaic_0001>
module attributes {stable_mosaic.version = 11 : i64} {
  func.func @_conv_bn_relu_kernel(%arg0: memref<512x27xf32, #tpu.memory_space<vmem>>, %arg1: memref<27x8xf32, #tpu.memory_space<vmem>>, %arg2: memref<1x8xf32, #tpu.memory_space<vmem>>, %arg3: memref<1x8xf32, #tpu.memory_space<vmem>>, %arg4: memref<1x8xf32, #tpu.memory_space<vmem>>, %arg5: memref<512x8xf32, #tpu.memory_space<vmem>>) attributes {dimension_semantics = [], scalar_prefetch = 0 : i64, scratch_operands = 0 : i64, tpu.core_type = #tpu.core_type<tc>} {
    %c0 = arith.constant 0 : index
    %c0_0 = arith.constant 0 : index
    %0 = vector.load %arg0[%c0, %c0_0] : memref<512x27xf32, #tpu.memory_space<vmem>>, vector<512x27xf32>
    %c0_1 = arith.constant 0 : index
    %c0_2 = arith.constant 0 : index
    %1 = vector.load %arg1[%c0_1, %c0_2] : memref<27x8xf32, #tpu.memory_space<vmem>>, vector<27x8xf32>
    %cst = arith.constant dense<0.000000e+00> : vector<512x8xf32>
    %2 = tpu.matmul %0, %1, %cst {dimension_numbers = #tpu.dot_dimension_numbers<[1], [0], [0], [1], [0, 0, 1, 1], [], []>} : vector<512x27xf32>, vector<27x8xf32>, vector<512x8xf32> -> vector<512x8xf32>
    %c0_3 = arith.constant 0 : index
    %c0_4 = arith.constant 0 : index
    %3 = vector.load %arg2[%c0_3, %c0_4] : memref<1x8xf32, #tpu.memory_space<vmem>>, vector<1x8xf32>
    %4 = vector.broadcast %3 : vector<1x8xf32> to vector<512x8xf32>
    %5 = arith.addf %2, %4 : vector<512x8xf32>
    %cst_5 = arith.constant dense<0.000000e+00> : vector<8xf32>
    %6 = vector.multi_reduction <add>, %5, %cst_5 [0] : vector<512x8xf32> to vector<8xf32>
    %7 = vector.shape_cast %6 : vector<8xf32> to vector<1x8xf32>
    %cst_6 = arith.constant 5.120000e+02 : f32
    %8 = vector.broadcast %cst_6 : f32 to vector<1x8xf32>
    %9 = arith.divf %7, %8 : vector<1x8xf32>
    %10 = vector.broadcast %9 : vector<1x8xf32> to vector<512x8xf32>
    %11 = arith.subf %5, %10 : vector<512x8xf32>
    %12 = arith.mulf %11, %11 : vector<512x8xf32>
    %cst_7 = arith.constant dense<0.000000e+00> : vector<8xf32>
    %13 = vector.multi_reduction <add>, %12, %cst_7 [0] : vector<512x8xf32> to vector<8xf32>
    %14 = vector.shape_cast %13 : vector<8xf32> to vector<1x8xf32>
    %cst_8 = arith.constant 5.120000e+02 : f32
    %15 = vector.broadcast %cst_8 : f32 to vector<1x8xf32>
    %16 = arith.divf %14, %15 : vector<1x8xf32>
    %17 = vector.broadcast %9 : vector<1x8xf32> to vector<512x8xf32>
    %18 = arith.subf %5, %17 : vector<512x8xf32>
    %cst_9 = arith.constant 9.99999974E-6 : f32
    %19 = vector.broadcast %cst_9 : f32 to vector<1x8xf32>
    %20 = arith.addf %16, %19 : vector<1x8xf32>
    %21 = math.rsqrt %20 : vector<1x8xf32>
    %22 = vector.broadcast %21 : vector<1x8xf32> to vector<512x8xf32>
    %23 = arith.mulf %18, %22 : vector<512x8xf32>
    %c0_10 = arith.constant 0 : index
    %c0_11 = arith.constant 0 : index
    %24 = vector.load %arg3[%c0_10, %c0_11] : memref<1x8xf32, #tpu.memory_space<vmem>>, vector<1x8xf32>
    %25 = vector.broadcast %24 : vector<1x8xf32> to vector<512x8xf32>
    %26 = arith.mulf %23, %25 : vector<512x8xf32>
    %c0_12 = arith.constant 0 : index
    %c0_13 = arith.constant 0 : index
    %27 = vector.load %arg4[%c0_12, %c0_13] : memref<1x8xf32, #tpu.memory_space<vmem>>, vector<1x8xf32>
    %28 = vector.broadcast %27 : vector<1x8xf32> to vector<512x8xf32>
    %29 = arith.addf %26, %28 : vector<512x8xf32>
    %cst_14 = arith.constant 0.000000e+00 : f32
    %30 = vector.broadcast %cst_14 : f32 to vector<512x8xf32>
    %31 = arith.maximumf %29, %30 : vector<512x8xf32>
    %c0_15 = arith.constant 0 : index
    %c0_16 = arith.constant 0 : index
    %32 = vector.load %arg5[%c0_15, %c0_16] : memref<512x8xf32, #tpu.memory_space<vmem>>, vector<512x8xf32>
    tpu.vector_store %arg5[%c0_15, %c0_16], %31 {strides = array<i32>} : memref<512x8xf32, #tpu.memory_space<vmem>>, vector<512x8xf32>,
    return
  }
}

module attributes {stable_mosaic.version = 11 : i64} {
  func.func @_conv_bn_relu_kernel(%arg0: memref<512x72xf32, #tpu.memory_space<vmem>>, %arg1: memref<72x8xf32, #tpu.memory_space<vmem>>, %arg2: memref<1x8xf32, #tpu.memory_space<vmem>>, %arg3: memref<1x8xf32, #tpu.memory_space<vmem>>, %arg4: memref<1x8xf32, #tpu.memory_space<vmem>>, %arg5: memref<512x8xf32, #tpu.memory_space<vmem>>) attributes {dimension_semantics = [], scalar_prefetch = 0 : i64, scratch_operands = 0 : i64, tpu.core_type = #tpu.core_type<tc>} {
    %c0 = arith.constant 0 : index
    %c0_0 = arith.constant 0 : index
    %0 = vector.load %arg0[%c0, %c0_0] : memref<512x72xf32, #tpu.memory_space<vmem>>, vector<512x72xf32>
    %c0_1 = arith.constant 0 : index
    %c0_2 = arith.constant 0 : index
    %1 = vector.load %arg1[%c0_1, %c0_2] : memref<72x8xf32, #tpu.memory_space<vmem>>, vector<72x8xf32>
    %cst = arith.constant dense<0.000000e+00> : vector<512x8xf32>
    %2 = tpu.matmul %0, %1, %cst {dimension_numbers = #tpu.dot_dimension_numbers<[1], [0], [0], [1], [0, 0, 1, 1], [], []>} : vector<512x72xf32>, vector<72x8xf32>, vector<512x8xf32> -> vector<512x8xf32>
    %c0_3 = arith.constant 0 : index
    %c0_4 = arith.constant 0 : index
    %3 = vector.load %arg2[%c0_3, %c0_4] : memref<1x8xf32, #tpu.memory_space<vmem>>, vector<1x8xf32>
    %4 = vector.broadcast %3 : vector<1x8xf32> to vector<512x8xf32>
    %5 = arith.addf %2, %4 : vector<512x8xf32>
    %cst_5 = arith.constant dense<0.000000e+00> : vector<8xf32>
    %6 = vector.multi_reduction <add>, %5, %cst_5 [0] : vector<512x8xf32> to vector<8xf32>
    %7 = vector.shape_cast %6 : vector<8xf32> to vector<1x8xf32>
    %cst_6 = arith.constant 5.120000e+02 : f32
    %8 = vector.broadcast %cst_6 : f32 to vector<1x8xf32>
    %9 = arith.divf %7, %8 : vector<1x8xf32>
    %10 = vector.broadcast %9 : vector<1x8xf32> to vector<512x8xf32>
    %11 = arith.subf %5, %10 : vector<512x8xf32>
    %12 = arith.mulf %11, %11 : vector<512x8xf32>
    %cst_7 = arith.constant dense<0.000000e+00> : vector<8xf32>
    %13 = vector.multi_reduction <add>, %12, %cst_7 [0] : vector<512x8xf32> to vector<8xf32>
    %14 = vector.shape_cast %13 : vector<8xf32> to vector<1x8xf32>
    %cst_8 = arith.constant 5.120000e+02 : f32
    %15 = vector.broadcast %cst_8 : f32 to vector<1x8xf32>
    %16 = arith.divf %14, %15 : vector<1x8xf32>
    %17 = vector.broadcast %9 : vector<1x8xf32> to vector<512x8xf32>
    %18 = arith.subf %5, %17 : vector<512x8xf32>
    %cst_9 = arith.constant 9.99999974E-6 : f32
    %19 = vector.broadcast %cst_9 : f32 to vector<1x8xf32>
    %20 = arith.addf %16, %19 : vector<1x8xf32>
    %21 = math.rsqrt %20 : vector<1x8xf32>
    %22 = vector.broadcast %21 : vector<1x8xf32> to vector<512x8xf32>
    %23 = arith.mulf %18, %22 : vector<512x8xf32>
    %c0_10 = arith.constant 0 : index
    %c0_11 = arith.constant 0 : index
    %24 = vector.load %arg3[%c0_10, %c0_11] : memref<1x8xf32, #tpu.memory_space<vmem>>, vector<1x8xf32>
    %25 = vector.broadcast %24 : vector<1x8xf32> to vector<512x8xf32>
    %26 = arith.mulf %23, %25 : vector<512x8xf32>
    %c0_12 = arith.constant 0 : index
    %c0_13 = arith.constant 0 : index
    %27 = vector.load %arg4[%c0_12, %c0_13] : memref<1x8xf32, #tpu.memory_space<vmem>>, vector<1x8xf32>
    %28 = vector.broadcast %27 : vector<1x8xf32> to vector<512x8xf32>
    %29 = arith.addf %26, %28 : vector<512x8xf32>
    %cst_14 = arith.constant 0.000000e+00 : f32
    %30 = vector.broadcast %cst_14 : f32 to vector<512x8xf32>
    %31 = arith.maximumf %29, %30 : vector<512x8xf32>
    %c0_15 = arith.constant 0 : index
    %c0_16 = arith.constant 0 : index
    %32 = vector.load %arg5[%c0_15, %c0_16] : memref<512x8xf32, #tpu.memory_space<vmem>>, vector<512x8xf32>
    tpu.vector_store %arg5[%c0_15, %c0_16], %31 {strides = array<i32>} : memref<512x8xf32, #tpu.memory_space<vmem>>, vector<512x8xf32>,
    return
  }
}

module attributes {stable_mosaic.version = 11 : i64} {
  func.func @_conv_bn_res_relu_kernel(%arg0: memref<512x72xf32, #tpu.memory_space<vmem>>, %arg1: memref<72x8xf32, #tpu.memory_space<vmem>>, %arg2: memref<1x8xf32, #tpu.memory_space<vmem>>, %arg3: memref<1x8xf32, #tpu.memory_space<vmem>>, %arg4: memref<1x8xf32, #tpu.memory_space<vmem>>, %arg5: memref<512x8xf32, #tpu.memory_space<vmem>>, %arg6: memref<512x8xf32, #tpu.memory_space<vmem>>) attributes {dimension_semantics = [], scalar_prefetch = 0 : i64, scratch_operands = 0 : i64, tpu.core_type = #tpu.core_type<tc>} {
    %c0 = arith.constant 0 : index
    %c0_0 = arith.constant 0 : index
    %0 = vector.load %arg0[%c0, %c0_0] : memref<512x72xf32, #tpu.memory_space<vmem>>, vector<512x72xf32>
    %c0_1 = arith.constant 0 : index
    %c0_2 = arith.constant 0 : index
    %1 = vector.load %arg1[%c0_1, %c0_2] : memref<72x8xf32, #tpu.memory_space<vmem>>, vector<72x8xf32>
    %cst = arith.constant dense<0.000000e+00> : vector<512x8xf32>
    %2 = tpu.matmul %0, %1, %cst {dimension_numbers = #tpu.dot_dimension_numbers<[1], [0], [0], [1], [0, 0, 1, 1], [], []>} : vector<512x72xf32>, vector<72x8xf32>, vector<512x8xf32> -> vector<512x8xf32>
    %c0_3 = arith.constant 0 : index
    %c0_4 = arith.constant 0 : index
    %3 = vector.load %arg2[%c0_3, %c0_4] : memref<1x8xf32, #tpu.memory_space<vmem>>, vector<1x8xf32>
    %4 = vector.broadcast %3 : vector<1x8xf32> to vector<512x8xf32>
    %5 = arith.addf %2, %4 : vector<512x8xf32>
    %cst_5 = arith.constant dense<0.000000e+00> : vector<8xf32>
    %6 = vector.multi_reduction <add>, %5, %cst_5 [0] : vector<512x8xf32> to vector<8xf32>
    %7 = vector.shape_cast %6 : vector<8xf32> to vector<1x8xf32>
    %cst_6 = arith.constant 5.120000e+02 : f32
    %8 = vector.broadcast %cst_6 : f32 to vector<1x8xf32>
    %9 = arith.divf %7, %8 : vector<1x8xf32>
    %10 = vector.broadcast %9 : vector<1x8xf32> to vector<512x8xf32>
    %11 = arith.subf %5, %10 : vector<512x8xf32>
    %12 = arith.mulf %11, %11 : vector<512x8xf32>
    %cst_7 = arith.constant dense<0.000000e+00> : vector<8xf32>
    %13 = vector.multi_reduction <add>, %12, %cst_7 [0] : vector<512x8xf32> to vector<8xf32>
    %14 = vector.shape_cast %13 : vector<8xf32> to vector<1x8xf32>
    %cst_8 = arith.constant 5.120000e+02 : f32
    %15 = vector.broadcast %cst_8 : f32 to vector<1x8xf32>
    %16 = arith.divf %14, %15 : vector<1x8xf32>
    %17 = vector.broadcast %9 : vector<1x8xf32> to vector<512x8xf32>
    %18 = arith.subf %5, %17 : vector<512x8xf32>
    %cst_9 = arith.constant 9.99999974E-6 : f32
    %19 = vector.broadcast %cst_9 : f32 to vector<1x8xf32>
    %20 = arith.addf %16, %19 : vector<1x8xf32>
    %21 = math.rsqrt %20 : vector<1x8xf32>
    %22 = vector.broadcast %21 : vector<1x8xf32> to vector<512x8xf32>
    %23 = arith.mulf %18, %22 : vector<512x8xf32>
    %c0_10 = arith.constant 0 : index
    %c0_11 = arith.constant 0 : index
    %24 = vector.load %arg3[%c0_10, %c0_11] : memref<1x8xf32, #tpu.memory_space<vmem>>, vector<1x8xf32>
    %25 = vector.broadcast %24 : vector<1x8xf32> to vector<512x8xf32>
    %26 = arith.mulf %23, %25 : vector<512x8xf32>
    %c0_12 = arith.constant 0 : index
    %c0_13 = arith.constant 0 : index
    %27 = vector.load %arg4[%c0_12, %c0_13] : memref<1x8xf32, #tpu.memory_space<vmem>>, vector<1x8xf32>
    %28 = vector.broadcast %27 : vector<1x8xf32> to vector<512x8xf32>
    %29 = arith.addf %26, %28 : vector<512x8xf32>
    %c0_14 = arith.constant 0 : index
    %c0_15 = arith.constant 0 : index
    %30 = vector.load %arg5[%c0_14, %c0_15] : memref<512x8xf32, #tpu.memory_space<vmem>>, vector<512x8xf32>
    %31 = arith.addf %29, %30 : vector<512x8xf32>
    %cst_16 = arith.constant 0.000000e+00 : f32
    %32 = vector.broadcast %cst_16 : f32 to vector<512x8xf32>
    %33 = arith.maximumf %31, %32 : vector<512x8xf32>
    %c0_17 = arith.constant 0 : index
    %c0_18 = arith.constant 0 : index
    %34 = vector.load %arg6[%c0_17, %c0_18] : memref<512x8xf32, #tpu.memory_space<vmem>>, vector<512x8xf32>
    tpu.vector_store %arg6[%c0_17, %c0_18], %33 {strides = array<i32>} : memref<512x8xf32, #tpu.memory_space<vmem>>, vector<512x8xf32>,
    return
  }
}

module attributes {stable_mosaic.version = 11 : i64} {
  func.func @_conv_bn_relu_kernel(%arg0: memref<128x72xf32, #tpu.memory_space<vmem>>, %arg1: memref<72x16xf32, #tpu.memory_space<vmem>>, %arg2: memref<1x16xf32, #tpu.memory_space<vmem>>, %arg3: memref<1x16xf32, #tpu.memory_space<vmem>>, %arg4: memref<1x16xf32, #tpu.memory_space<vmem>>, %arg5: memref<128x16xf32, #tpu.memory_space<vmem>>) attributes {dimension_semantics = [], scalar_prefetch = 0 : i64, scratch_operands = 0 : i64, tpu.core_type = #tpu.core_type<tc>} {
    %c0 = arith.constant 0 : index
    %c0_0 = arith.constant 0 : index
    %0 = vector.load %arg0[%c0, %c0_0] : memref<128x72xf32, #tpu.memory_space<vmem>>, vector<128x72xf32>
    %c0_1 = arith.constant 0 : index
    %c0_2 = arith.constant 0 : index
    %1 = vector.load %arg1[%c0_1, %c0_2] : memref<72x16xf32, #tpu.memory_space<vmem>>, vector<72x16xf32>
    %cst = arith.constant dense<0.000000e+00> : vector<128x16xf32>
    %2 = tpu.matmul %0, %1, %cst {dimension_numbers = #tpu.dot_dimension_numbers<[1], [0], [0], [1], [0, 0, 1, 1], [], []>} : vector<128x72xf32>, vector<72x16xf32>, vector<128x16xf32> -> vector<128x16xf32>
    %c0_3 = arith.constant 0 : index
    %c0_4 = arith.constant 0 : index
    %3 = vector.load %arg2[%c0_3, %c0_4] : memref<1x16xf32, #tpu.memory_space<vmem>>, vector<1x16xf32>
    %4 = vector.broadcast %3 : vector<1x16xf32> to vector<128x16xf32>
    %5 = arith.addf %2, %4 : vector<128x16xf32>
    %cst_5 = arith.constant dense<0.000000e+00> : vector<16xf32>
    %6 = vector.multi_reduction <add>, %5, %cst_5 [0] : vector<128x16xf32> to vector<16xf32>
    %7 = vector.shape_cast %6 : vector<16xf32> to vector<1x16xf32>
    %cst_6 = arith.constant 1.280000e+02 : f32
    %8 = vector.broadcast %cst_6 : f32 to vector<1x16xf32>
    %9 = arith.divf %7, %8 : vector<1x16xf32>
    %10 = vector.broadcast %9 : vector<1x16xf32> to vector<128x16xf32>
    %11 = arith.subf %5, %10 : vector<128x16xf32>
    %12 = arith.mulf %11, %11 : vector<128x16xf32>
    %cst_7 = arith.constant dense<0.000000e+00> : vector<16xf32>
    %13 = vector.multi_reduction <add>, %12, %cst_7 [0] : vector<128x16xf32> to vector<16xf32>
    %14 = vector.shape_cast %13 : vector<16xf32> to vector<1x16xf32>
    %cst_8 = arith.constant 1.280000e+02 : f32
    %15 = vector.broadcast %cst_8 : f32 to vector<1x16xf32>
    %16 = arith.divf %14, %15 : vector<1x16xf32>
    %17 = vector.broadcast %9 : vector<1x16xf32> to vector<128x16xf32>
    %18 = arith.subf %5, %17 : vector<128x16xf32>
    %cst_9 = arith.constant 9.99999974E-6 : f32
    %19 = vector.broadcast %cst_9 : f32 to vector<1x16xf32>
    %20 = arith.addf %16, %19 : vector<1x16xf32>
    %21 = math.rsqrt %20 : vector<1x16xf32>
    %22 = vector.broadcast %21 : vector<1x16xf32> to vector<128x16xf32>
    %23 = arith.mulf %18, %22 : vector<128x16xf32>
    %c0_10 = arith.constant 0 : index
    %c0_11 = arith.constant 0 : index
    %24 = vector.load %arg3[%c0_10, %c0_11] : memref<1x16xf32, #tpu.memory_space<vmem>>, vector<1x16xf32>
    %25 = vector.broadcast %24 : vector<1x16xf32> to vector<128x16xf32>
    %26 = arith.mulf %23, %25 : vector<128x16xf32>
    %c0_12 = arith.constant 0 : index
    %c0_13 = arith.constant 0 : index
    %27 = vector.load %arg4[%c0_12, %c0_13] : memref<1x16xf32, #tpu.memory_space<vmem>>, vector<1x16xf32>
    %28 = vector.broadcast %27 : vector<1x16xf32> to vector<128x16xf32>
    %29 = arith.addf %26, %28 : vector<128x16xf32>
    %cst_14 = arith.constant 0.000000e+00 : f32
    %30 = vector.broadcast %cst_14 : f32 to vector<128x16xf32>
    %31 = arith.maximumf %29, %30 : vector<128x16xf32>
    %c0_15 = arith.constant 0 : index
    %c0_16 = arith.constant 0 : index
    %32 = vector.load %arg5[%c0_15, %c0_16] : memref<128x16xf32, #tpu.memory_space<vmem>>, vector<128x16xf32>
    tpu.vector_store %arg5[%c0_15, %c0_16], %31 {strides = array<i32>} : memref<128x16xf32, #tpu.memory_space<vmem>>, vector<128x16xf32>,
    return
  }
}

module attributes {stable_mosaic.version = 11 : i64} {
  func.func @_conv_bn_relu_kernel(%arg0: memref<128x144xf32, #tpu.memory_space<vmem>>, %arg1: memref<144x16xf32, #tpu.memory_space<vmem>>, %arg2: memref<1x16xf32, #tpu.memory_space<vmem>>, %arg3: memref<1x16xf32, #tpu.memory_space<vmem>>, %arg4: memref<1x16xf32, #tpu.memory_space<vmem>>, %arg5: memref<128x16xf32, #tpu.memory_space<vmem>>) attributes {dimension_semantics = [], scalar_prefetch = 0 : i64, scratch_operands = 0 : i64, tpu.core_type = #tpu.core_type<tc>} {
    %c0 = arith.constant 0 : index
    %c0_0 = arith.constant 0 : index
    %0 = vector.load %arg0[%c0, %c0_0] : memref<128x144xf32, #tpu.memory_space<vmem>>, vector<128x144xf32>
    %c0_1 = arith.constant 0 : index
    %c0_2 = arith.constant 0 : index
    %1 = vector.load %arg1[%c0_1, %c0_2] : memref<144x16xf32, #tpu.memory_space<vmem>>, vector<144x16xf32>
    %cst = arith.constant dense<0.000000e+00> : vector<128x16xf32>
    %2 = tpu.matmul %0, %1, %cst {dimension_numbers = #tpu.dot_dimension_numbers<[1], [0], [0], [1], [0, 0, 1, 1], [], []>} : vector<128x144xf32>, vector<144x16xf32>, vector<128x16xf32> -> vector<128x16xf32>
    %c0_3 = arith.constant 0 : index
    %c0_4 = arith.constant 0 : index
    %3 = vector.load %arg2[%c0_3, %c0_4] : memref<1x16xf32, #tpu.memory_space<vmem>>, vector<1x16xf32>
    %4 = vector.broadcast %3 : vector<1x16xf32> to vector<128x16xf32>
    %5 = arith.addf %2, %4 : vector<128x16xf32>
    %cst_5 = arith.constant dense<0.000000e+00> : vector<16xf32>
    %6 = vector.multi_reduction <add>, %5, %cst_5 [0] : vector<128x16xf32> to vector<16xf32>
    %7 = vector.shape_cast %6 : vector<16xf32> to vector<1x16xf32>
    %cst_6 = arith.constant 1.280000e+02 : f32
    %8 = vector.broadcast %cst_6 : f32 to vector<1x16xf32>
    %9 = arith.divf %7, %8 : vector<1x16xf32>
    %10 = vector.broadcast %9 : vector<1x16xf32> to vector<128x16xf32>
    %11 = arith.subf %5, %10 : vector<128x16xf32>
    %12 = arith.mulf %11, %11 : vector<128x16xf32>
    %cst_7 = arith.constant dense<0.000000e+00> : vector<16xf32>
    %13 = vector.multi_reduction <add>, %12, %cst_7 [0] : vector<128x16xf32> to vector<16xf32>
    %14 = vector.shape_cast %13 : vector<16xf32> to vector<1x16xf32>
    %cst_8 = arith.constant 1.280000e+02 : f32
    %15 = vector.broadcast %cst_8 : f32 to vector<1x16xf32>
    %16 = arith.divf %14, %15 : vector<1x16xf32>
    %17 = vector.broadcast %9 : vector<1x16xf32> to vector<128x16xf32>
    %18 = arith.subf %5, %17 : vector<128x16xf32>
    %cst_9 = arith.constant 9.99999974E-6 : f32
    %19 = vector.broadcast %cst_9 : f32 to vector<1x16xf32>
    %20 = arith.addf %16, %19 : vector<1x16xf32>
    %21 = math.rsqrt %20 : vector<1x16xf32>
    %22 = vector.broadcast %21 : vector<1x16xf32> to vector<128x16xf32>
    %23 = arith.mulf %18, %22 : vector<128x16xf32>
    %c0_10 = arith.constant 0 : index
    %c0_11 = arith.constant 0 : index
    %24 = vector.load %arg3[%c0_10, %c0_11] : memref<1x16xf32, #tpu.memory_space<vmem>>, vector<1x16xf32>
    %25 = vector.broadcast %24 : vector<1x16xf32> to vector<128x16xf32>
    %26 = arith.mulf %23, %25 : vector<128x16xf32>
    %c0_12 = arith.constant 0 : index
    %c0_13 = arith.constant 0 : index
    %27 = vector.load %arg4[%c0_12, %c0_13] : memref<1x16xf32, #tpu.memory_space<vmem>>, vector<1x16xf32>
    %28 = vector.broadcast %27 : vector<1x16xf32> to vector<128x16xf32>
    %29 = arith.addf %26, %28 : vector<128x16xf32>
    %cst_14 = arith.constant 0.000000e+00 : f32
    %30 = vector.broadcast %cst_14 : f32 to vector<128x16xf32>
    %31 = arith.maximumf %29, %30 : vector<128x16xf32>
    %c0_15 = arith.constant 0 : index
    %c0_16 = arith.constant 0 : index
    %32 = vector.load %arg5[%c0_15, %c0_16] : memref<128x16xf32, #tpu.memory_space<vmem>>, vector<128x16xf32>
    tpu.vector_store %arg5[%c0_15, %c0_16], %31 {strides = array<i32>} : memref<128x16xf32, #tpu.memory_space<vmem>>, vector<128x16xf32>,
    return
  }
}

module attributes {stable_mosaic.version = 11 : i64} {
  func.func @_conv_bn_res_relu_kernel(%arg0: memref<128x144xf32, #tpu.memory_space<vmem>>, %arg1: memref<144x16xf32, #tpu.memory_space<vmem>>, %arg2: memref<1x16xf32, #tpu.memory_space<vmem>>, %arg3: memref<1x16xf32, #tpu.memory_space<vmem>>, %arg4: memref<1x16xf32, #tpu.memory_space<vmem>>, %arg5: memref<128x16xf32, #tpu.memory_space<vmem>>, %arg6: memref<128x16xf32, #tpu.memory_space<vmem>>) attributes {dimension_semantics = [], scalar_prefetch = 0 : i64, scratch_operands = 0 : i64, tpu.core_type = #tpu.core_type<tc>} {
    %c0 = arith.constant 0 : index
    %c0_0 = arith.constant 0 : index
    %0 = vector.load %arg0[%c0, %c0_0] : memref<128x144xf32, #tpu.memory_space<vmem>>, vector<128x144xf32>
    %c0_1 = arith.constant 0 : index
    %c0_2 = arith.constant 0 : index
    %1 = vector.load %arg1[%c0_1, %c0_2] : memref<144x16xf32, #tpu.memory_space<vmem>>, vector<144x16xf32>
    %cst = arith.constant dense<0.000000e+00> : vector<128x16xf32>
    %2 = tpu.matmul %0, %1, %cst {dimension_numbers = #tpu.dot_dimension_numbers<[1], [0], [0], [1], [0, 0, 1, 1], [], []>} : vector<128x144xf32>, vector<144x16xf32>, vector<128x16xf32> -> vector<128x16xf32>
    %c0_3 = arith.constant 0 : index
    %c0_4 = arith.constant 0 : index
    %3 = vector.load %arg2[%c0_3, %c0_4] : memref<1x16xf32, #tpu.memory_space<vmem>>, vector<1x16xf32>
    %4 = vector.broadcast %3 : vector<1x16xf32> to vector<128x16xf32>
    %5 = arith.addf %2, %4 : vector<128x16xf32>
    %cst_5 = arith.constant dense<0.000000e+00> : vector<16xf32>
    %6 = vector.multi_reduction <add>, %5, %cst_5 [0] : vector<128x16xf32> to vector<16xf32>
    %7 = vector.shape_cast %6 : vector<16xf32> to vector<1x16xf32>
    %cst_6 = arith.constant 1.280000e+02 : f32
    %8 = vector.broadcast %cst_6 : f32 to vector<1x16xf32>
    %9 = arith.divf %7, %8 : vector<1x16xf32>
    %10 = vector.broadcast %9 : vector<1x16xf32> to vector<128x16xf32>
    %11 = arith.subf %5, %10 : vector<128x16xf32>
    %12 = arith.mulf %11, %11 : vector<128x16xf32>
    %cst_7 = arith.constant dense<0.000000e+00> : vector<16xf32>
    %13 = vector.multi_reduction <add>, %12, %cst_7 [0] : vector<128x16xf32> to vector<16xf32>
    %14 = vector.shape_cast %13 : vector<16xf32> to vector<1x16xf32>
    %cst_8 = arith.constant 1.280000e+02 : f32
    %15 = vector.broadcast %cst_8 : f32 to vector<1x16xf32>
    %16 = arith.divf %14, %15 : vector<1x16xf32>
    %17 = vector.broadcast %9 : vector<1x16xf32> to vector<128x16xf32>
    %18 = arith.subf %5, %17 : vector<128x16xf32>
    %cst_9 = arith.constant 9.99999974E-6 : f32
    %19 = vector.broadcast %cst_9 : f32 to vector<1x16xf32>
    %20 = arith.addf %16, %19 : vector<1x16xf32>
    %21 = math.rsqrt %20 : vector<1x16xf32>
    %22 = vector.broadcast %21 : vector<1x16xf32> to vector<128x16xf32>
    %23 = arith.mulf %18, %22 : vector<128x16xf32>
    %c0_10 = arith.constant 0 : index
    %c0_11 = arith.constant 0 : index
    %24 = vector.load %arg3[%c0_10, %c0_11] : memref<1x16xf32, #tpu.memory_space<vmem>>, vector<1x16xf32>
    %25 = vector.broadcast %24 : vector<1x16xf32> to vector<128x16xf32>
    %26 = arith.mulf %23, %25 : vector<128x16xf32>
    %c0_12 = arith.constant 0 : index
    %c0_13 = arith.constant 0 : index
    %27 = vector.load %arg4[%c0_12, %c0_13] : memref<1x16xf32, #tpu.memory_space<vmem>>, vector<1x16xf32>
    %28 = vector.broadcast %27 : vector<1x16xf32> to vector<128x16xf32>
    %29 = arith.addf %26, %28 : vector<128x16xf32>
    %c0_14 = arith.constant 0 : index
    %c0_15 = arith.constant 0 : index
    %30 = vector.load %arg5[%c0_14, %c0_15] : memref<128x16xf32, #tpu.memory_space<vmem>>, vector<128x16xf32>
    %31 = arith.addf %29, %30 : vector<128x16xf32>
    %cst_16 = arith.constant 0.000000e+00 : f32
    %32 = vector.broadcast %cst_16 : f32 to vector<128x16xf32>
    %33 = arith.maximumf %31, %32 : vector<128x16xf32>
    %c0_17 = arith.constant 0 : index
    %c0_18 = arith.constant 0 : index
    %34 = vector.load %arg6[%c0_17, %c0_18] : memref<128x16xf32, #tpu.memory_space<vmem>>, vector<128x16xf32>
    tpu.vector_store %arg6[%c0_17, %c0_18], %33 {strides = array<i32>} : memref<128x16xf32, #tpu.memory_space<vmem>>, vector<128x16xf32>,
    return
  }
}

module attributes {stable_mosaic.version = 11 : i64} {
  func.func @_conv_bn_relu_kernel(%arg0: memref<32x144xf32, #tpu.memory_space<vmem>>, %arg1: memref<144x32xf32, #tpu.memory_space<vmem>>, %arg2: memref<1x32xf32, #tpu.memory_space<vmem>>, %arg3: memref<1x32xf32, #tpu.memory_space<vmem>>, %arg4: memref<1x32xf32, #tpu.memory_space<vmem>>, %arg5: memref<32x32xf32, #tpu.memory_space<vmem>>) attributes {dimension_semantics = [], scalar_prefetch = 0 : i64, scratch_operands = 0 : i64, tpu.core_type = #tpu.core_type<tc>} {
    %c0 = arith.constant 0 : index
    %c0_0 = arith.constant 0 : index
    %0 = vector.load %arg0[%c0, %c0_0] : memref<32x144xf32, #tpu.memory_space<vmem>>, vector<32x144xf32>
    %c0_1 = arith.constant 0 : index
    %c0_2 = arith.constant 0 : index
    %1 = vector.load %arg1[%c0_1, %c0_2] : memref<144x32xf32, #tpu.memory_space<vmem>>, vector<144x32xf32>
    %cst = arith.constant dense<0.000000e+00> : vector<32x32xf32>
    %2 = tpu.matmul %0, %1, %cst {dimension_numbers = #tpu.dot_dimension_numbers<[1], [0], [0], [1], [0, 0, 1, 1], [], []>} : vector<32x144xf32>, vector<144x32xf32>, vector<32x32xf32> -> vector<32x32xf32>
    %c0_3 = arith.constant 0 : index
    %c0_4 = arith.constant 0 : index
    %3 = vector.load %arg2[%c0_3, %c0_4] : memref<1x32xf32, #tpu.memory_space<vmem>>, vector<1x32xf32>
    %4 = vector.broadcast %3 : vector<1x32xf32> to vector<32x32xf32>
    %5 = arith.addf %2, %4 : vector<32x32xf32>
    %cst_5 = arith.constant dense<0.000000e+00> : vector<32xf32>
    %6 = vector.multi_reduction <add>, %5, %cst_5 [0] : vector<32x32xf32> to vector<32xf32>
    %7 = vector.shape_cast %6 : vector<32xf32> to vector<1x32xf32>
    %cst_6 = arith.constant 3.200000e+01 : f32
    %8 = vector.broadcast %cst_6 : f32 to vector<1x32xf32>
    %9 = arith.divf %7, %8 : vector<1x32xf32>
    %10 = vector.broadcast %9 : vector<1x32xf32> to vector<32x32xf32>
    %11 = arith.subf %5, %10 : vector<32x32xf32>
    %12 = arith.mulf %11, %11 : vector<32x32xf32>
    %cst_7 = arith.constant dense<0.000000e+00> : vector<32xf32>
    %13 = vector.multi_reduction <add>, %12, %cst_7 [0] : vector<32x32xf32> to vector<32xf32>
    %14 = vector.shape_cast %13 : vector<32xf32> to vector<1x32xf32>
    %cst_8 = arith.constant 3.200000e+01 : f32
    %15 = vector.broadcast %cst_8 : f32 to vector<1x32xf32>
    %16 = arith.divf %14, %15 : vector<1x32xf32>
    %17 = vector.broadcast %9 : vector<1x32xf32> to vector<32x32xf32>
    %18 = arith.subf %5, %17 : vector<32x32xf32>
    %cst_9 = arith.constant 9.99999974E-6 : f32
    %19 = vector.broadcast %cst_9 : f32 to vector<1x32xf32>
    %20 = arith.addf %16, %19 : vector<1x32xf32>
    %21 = math.rsqrt %20 : vector<1x32xf32>
    %22 = vector.broadcast %21 : vector<1x32xf32> to vector<32x32xf32>
    %23 = arith.mulf %18, %22 : vector<32x32xf32>
    %c0_10 = arith.constant 0 : index
    %c0_11 = arith.constant 0 : index
    %24 = vector.load %arg3[%c0_10, %c0_11] : memref<1x32xf32, #tpu.memory_space<vmem>>, vector<1x32xf32>
    %25 = vector.broadcast %24 : vector<1x32xf32> to vector<32x32xf32>
    %26 = arith.mulf %23, %25 : vector<32x32xf32>
    %c0_12 = arith.constant 0 : index
    %c0_13 = arith.constant 0 : index
    %27 = vector.load %arg4[%c0_12, %c0_13] : memref<1x32xf32, #tpu.memory_space<vmem>>, vector<1x32xf32>
    %28 = vector.broadcast %27 : vector<1x32xf32> to vector<32x32xf32>
    %29 = arith.addf %26, %28 : vector<32x32xf32>
    %cst_14 = arith.constant 0.000000e+00 : f32
    %30 = vector.broadcast %cst_14 : f32 to vector<32x32xf32>
    %31 = arith.maximumf %29, %30 : vector<32x32xf32>
    %c0_15 = arith.constant 0 : index
    %c0_16 = arith.constant 0 : index
    %32 = vector.load %arg5[%c0_15, %c0_16] : memref<32x32xf32, #tpu.memory_space<vmem>>, vector<32x32xf32>
    tpu.vector_store %arg5[%c0_15, %c0_16], %31 {strides = array<i32>} : memref<32x32xf32, #tpu.memory_space<vmem>>, vector<32x32xf32>,
    return
  }
}

module attributes {stable_mosaic.version = 11 : i64} {
  func.func @_conv_bn_relu_kernel(%arg0: memref<32x288xf32, #tpu.memory_space<vmem>>, %arg1: memref<288x32xf32, #tpu.memory_space<vmem>>, %arg2: memref<1x32xf32, #tpu.memory_space<vmem>>, %arg3: memref<1x32xf32, #tpu.memory_space<vmem>>, %arg4: memref<1x32xf32, #tpu.memory_space<vmem>>, %arg5: memref<32x32xf32, #tpu.memory_space<vmem>>) attributes {dimension_semantics = [], scalar_prefetch = 0 : i64, scratch_operands = 0 : i64, tpu.core_type = #tpu.core_type<tc>} {
    %c0 = arith.constant 0 : index
    %c0_0 = arith.constant 0 : index
    %0 = vector.load %arg0[%c0, %c0_0] : memref<32x288xf32, #tpu.memory_space<vmem>>, vector<32x288xf32>
    %c0_1 = arith.constant 0 : index
    %c0_2 = arith.constant 0 : index
    %1 = vector.load %arg1[%c0_1, %c0_2] : memref<288x32xf32, #tpu.memory_space<vmem>>, vector<288x32xf32>
    %cst = arith.constant dense<0.000000e+00> : vector<32x32xf32>
    %2 = tpu.matmul %0, %1, %cst {dimension_numbers = #tpu.dot_dimension_numbers<[1], [0], [0], [1], [0, 0, 1, 1], [], []>} : vector<32x288xf32>, vector<288x32xf32>, vector<32x32xf32> -> vector<32x32xf32>
    %c0_3 = arith.constant 0 : index
    %c0_4 = arith.constant 0 : index
    %3 = vector.load %arg2[%c0_3, %c0_4] : memref<1x32xf32, #tpu.memory_space<vmem>>, vector<1x32xf32>
    %4 = vector.broadcast %3 : vector<1x32xf32> to vector<32x32xf32>
    %5 = arith.addf %2, %4 : vector<32x32xf32>
    %cst_5 = arith.constant dense<0.000000e+00> : vector<32xf32>
    %6 = vector.multi_reduction <add>, %5, %cst_5 [0] : vector<32x32xf32> to vector<32xf32>
    %7 = vector.shape_cast %6 : vector<32xf32> to vector<1x32xf32>
    %cst_6 = arith.constant 3.200000e+01 : f32
    %8 = vector.broadcast %cst_6 : f32 to vector<1x32xf32>
    %9 = arith.divf %7, %8 : vector<1x32xf32>
    %10 = vector.broadcast %9 : vector<1x32xf32> to vector<32x32xf32>
    %11 = arith.subf %5, %10 : vector<32x32xf32>
    %12 = arith.mulf %11, %11 : vector<32x32xf32>
    %cst_7 = arith.constant dense<0.000000e+00> : vector<32xf32>
    %13 = vector.multi_reduction <add>, %12, %cst_7 [0] : vector<32x32xf32> to vector<32xf32>
    %14 = vector.shape_cast %13 : vector<32xf32> to vector<1x32xf32>
    %cst_8 = arith.constant 3.200000e+01 : f32
    %15 = vector.broadcast %cst_8 : f32 to vector<1x32xf32>
    %16 = arith.divf %14, %15 : vector<1x32xf32>
    %17 = vector.broadcast %9 : vector<1x32xf32> to vector<32x32xf32>
    %18 = arith.subf %5, %17 : vector<32x32xf32>
    %cst_9 = arith.constant 9.99999974E-6 : f32
    %19 = vector.broadcast %cst_9 : f32 to vector<1x32xf32>
    %20 = arith.addf %16, %19 : vector<1x32xf32>
    %21 = math.rsqrt %20 : vector<1x32xf32>
    %22 = vector.broadcast %21 : vector<1x32xf32> to vector<32x32xf32>
    %23 = arith.mulf %18, %22 : vector<32x32xf32>
    %c0_10 = arith.constant 0 : index
    %c0_11 = arith.constant 0 : index
    %24 = vector.load %arg3[%c0_10, %c0_11] : memref<1x32xf32, #tpu.memory_space<vmem>>, vector<1x32xf32>
    %25 = vector.broadcast %24 : vector<1x32xf32> to vector<32x32xf32>
    %26 = arith.mulf %23, %25 : vector<32x32xf32>
    %c0_12 = arith.constant 0 : index
    %c0_13 = arith.constant 0 : index
    %27 = vector.load %arg4[%c0_12, %c0_13] : memref<1x32xf32, #tpu.memory_space<vmem>>, vector<1x32xf32>
    %28 = vector.broadcast %27 : vector<1x32xf32> to vector<32x32xf32>
    %29 = arith.addf %26, %28 : vector<32x32xf32>
    %cst_14 = arith.constant 0.000000e+00 : f32
    %30 = vector.broadcast %cst_14 : f32 to vector<32x32xf32>
    %31 = arith.maximumf %29, %30 : vector<32x32xf32>
    %c0_15 = arith.constant 0 : index
    %c0_16 = arith.constant 0 : index
    %32 = vector.load %arg5[%c0_15, %c0_16] : memref<32x32xf32, #tpu.memory_space<vmem>>, vector<32x32xf32>
    tpu.vector_store %arg5[%c0_15, %c0_16], %31 {strides = array<i32>} : memref<32x32xf32, #tpu.memory_space<vmem>>, vector<32x32xf32>,
    return
  }
}

module attributes {stable_mosaic.version = 11 : i64} {
  func.func @_conv_bn_res_relu_kernel(%arg0: memref<32x288xf32, #tpu.memory_space<vmem>>, %arg1: memref<288x32xf32, #tpu.memory_space<vmem>>, %arg2: memref<1x32xf32, #tpu.memory_space<vmem>>, %arg3: memref<1x32xf32, #tpu.memory_space<vmem>>, %arg4: memref<1x32xf32, #tpu.memory_space<vmem>>, %arg5: memref<32x32xf32, #tpu.memory_space<vmem>>, %arg6: memref<32x32xf32, #tpu.memory_space<vmem>>) attributes {dimension_semantics = [], scalar_prefetch = 0 : i64, scratch_operands = 0 : i64, tpu.core_type = #tpu.core_type<tc>} {
    %c0 = arith.constant 0 : index
    %c0_0 = arith.constant 0 : index
    %0 = vector.load %arg0[%c0, %c0_0] : memref<32x288xf32, #tpu.memory_space<vmem>>, vector<32x288xf32>
    %c0_1 = arith.constant 0 : index
    %c0_2 = arith.constant 0 : index
    %1 = vector.load %arg1[%c0_1, %c0_2] : memref<288x32xf32, #tpu.memory_space<vmem>>, vector<288x32xf32>
    %cst = arith.constant dense<0.000000e+00> : vector<32x32xf32>
    %2 = tpu.matmul %0, %1, %cst {dimension_numbers = #tpu.dot_dimension_numbers<[1], [0], [0], [1], [0, 0, 1, 1], [], []>} : vector<32x288xf32>, vector<288x32xf32>, vector<32x32xf32> -> vector<32x32xf32>
    %c0_3 = arith.constant 0 : index
    %c0_4 = arith.constant 0 : index
    %3 = vector.load %arg2[%c0_3, %c0_4] : memref<1x32xf32, #tpu.memory_space<vmem>>, vector<1x32xf32>
    %4 = vector.broadcast %3 : vector<1x32xf32> to vector<32x32xf32>
    %5 = arith.addf %2, %4 : vector<32x32xf32>
    %cst_5 = arith.constant dense<0.000000e+00> : vector<32xf32>
    %6 = vector.multi_reduction <add>, %5, %cst_5 [0] : vector<32x32xf32> to vector<32xf32>
    %7 = vector.shape_cast %6 : vector<32xf32> to vector<1x32xf32>
    %cst_6 = arith.constant 3.200000e+01 : f32
    %8 = vector.broadcast %cst_6 : f32 to vector<1x32xf32>
    %9 = arith.divf %7, %8 : vector<1x32xf32>
    %10 = vector.broadcast %9 : vector<1x32xf32> to vector<32x32xf32>
    %11 = arith.subf %5, %10 : vector<32x32xf32>
    %12 = arith.mulf %11, %11 : vector<32x32xf32>
    %cst_7 = arith.constant dense<0.000000e+00> : vector<32xf32>
    %13 = vector.multi_reduction <add>, %12, %cst_7 [0] : vector<32x32xf32> to vector<32xf32>
    %14 = vector.shape_cast %13 : vector<32xf32> to vector<1x32xf32>
    %cst_8 = arith.constant 3.200000e+01 : f32
    %15 = vector.broadcast %cst_8 : f32 to vector<1x32xf32>
    %16 = arith.divf %14, %15 : vector<1x32xf32>
    %17 = vector.broadcast %9 : vector<1x32xf32> to vector<32x32xf32>
    %18 = arith.subf %5, %17 : vector<32x32xf32>
    %cst_9 = arith.constant 9.99999974E-6 : f32
    %19 = vector.broadcast %cst_9 : f32 to vector<1x32xf32>
    %20 = arith.addf %16, %19 : vector<1x32xf32>
    %21 = math.rsqrt %20 : vector<1x32xf32>
    %22 = vector.broadcast %21 : vector<1x32xf32> to vector<32x32xf32>
    %23 = arith.mulf %18, %22 : vector<32x32xf32>
    %c0_10 = arith.constant 0 : index
    %c0_11 = arith.constant 0 : index
    %24 = vector.load %arg3[%c0_10, %c0_11] : memref<1x32xf32, #tpu.memory_space<vmem>>, vector<1x32xf32>
    %25 = vector.broadcast %24 : vector<1x32xf32> to vector<32x32xf32>
    %26 = arith.mulf %23, %25 : vector<32x32xf32>
    %c0_12 = arith.constant 0 : index
    %c0_13 = arith.constant 0 : index
    %27 = vector.load %arg4[%c0_12, %c0_13] : memref<1x32xf32, #tpu.memory_space<vmem>>, vector<1x32xf32>
    %28 = vector.broadcast %27 : vector<1x32xf32> to vector<32x32xf32>
    %29 = arith.addf %26, %28 : vector<32x32xf32>
    %c0_14 = arith.constant 0 : index
    %c0_15 = arith.constant 0 : index
    %30 = vector.load %arg5[%c0_14, %c0_15] : memref<32x32xf32, #tpu.memory_space<vmem>>, vector<32x32xf32>
    %31 = arith.addf %29, %30 : vector<32x32xf32>
    %cst_16 = arith.constant 0.000000e+00 : f32
    %32 = vector.broadcast %cst_16 : f32 to vector<32x32xf32>
    %33 = arith.maximumf %31, %32 : vector<32x32xf32>
    %c0_17 = arith.constant 0 : index
    %c0_18 = arith.constant 0 : index
    %34 = vector.load %arg6[%c0_17, %c0_18] : memref<32x32xf32, #tpu.memory_space<vmem>>, vector<32x32xf32>
    tpu.vector_store %arg6[%c0_17, %c0_18], %33 {strides = array<i32>} : memref<32x32xf32, #tpu.memory_space<vmem>>, vector<32x32xf32>,
    return
  }
}

</mosaic_0001>

<llo_original>
// kernel: encoder_forward_nchw.9
$region0: #{encoder_forward_nchw.9}
  #allocation0 [shape = 'u32[]', space=smem, size = 0x4, offset = 0x4, fixed_abs, tag = 'smem constant byte address 0x4 - core index']
  #allocation1 [shape = 'u32[72,128]{1,0:T(1,128)}', space=vmem, size = 0x9000, scoped, tag = 'internal scratch']
  %s0 = inlined_call_operand.vmem [shape: f32[512,27], index: 0, kind: input, shape index: {}]
  %s1 = inlined_call_operand.vmem [shape: f32[27,8], index: 1, kind: input, shape index: {}]
  %s2 = inlined_call_operand.vmem [shape: f32[1,8], index: 2, kind: input, shape index: {}]
  %s3 = inlined_call_operand.vmem [shape: f32[1,8], index: 3, kind: input, shape index: {}]
  %s4 = inlined_call_operand.vmem [shape: f32[1,8], index: 4, kind: input, shape index: {}]
  %s5 = inlined_call_operand.vmem [shape: f32[512,8], index: 5, kind: output, shape index: {}]
  %s6 = sld [smem:[#allocation0]]
  $region30: #{encoder_forward_nchw.9} parent=0
    _
  %s8 = ssub.s32 1, %s6
  %s9 = scalar_select 0, %s8, %s6
  // Predicated region
  $region2: #{encoder_forward_nchw.9} parent=0 // pred_check
    _
  $region3: #{encoder_forward_nchw.9} parent=0 // pred_check_branch
    %11 = sbr.rel (0) target = $region5
  $region4: #{encoder_forward_nchw.9} parent=0 // pred_region
    _
  $region5: #{encoder_forward_nchw.9} parent=0 // pred_fallthru
    _
  // Predicated region
  $region6: #{encoder_forward_nchw.9} parent=0 // pred_check
    _
  $region7: #{encoder_forward_nchw.9} parent=0 // pred_check_branch
    %13 = sbr.rel (0) target = $region9
  $region8: #{encoder_forward_nchw.9} parent=0 // pred_region
    _
  $region9: #{encoder_forward_nchw.9} parent=0 // pred_fallthru
    _
  // Predicated region
  $region10: #{encoder_forward_nchw.9} parent=0 // pred_check
    _
  $region11: #{encoder_forward_nchw.9} parent=0 // pred_check_branch
    %15 = sbr.rel (0) target = $region13
  $region12: #{encoder_forward_nchw.9} parent=0 // pred_region
    _
  $region13: #{encoder_forward_nchw.9} parent=0 // pred_fallthru
    _
  // Predicated region
  $region14: #{encoder_forward_nchw.9} parent=0 // pred_check
    _
  $region15: #{encoder_forward_nchw.9} parent=0 // pred_check_branch
    %17 = sbr.rel (0) target = $region17
  $region16: #{encoder_forward_nchw.9} parent=0 // pred_region
    _
  $region17: #{encoder_forward_nchw.9} parent=0 // pred_fallthru
    _
  // Predicated region
  $region18: #{encoder_forward_nchw.9} parent=0 // pred_check
    _
  $region19: #{encoder_forward_nchw.9} parent=0 // pred_check_branch
    %19 = sbr.rel (0) target = $region21
  $region20: #{encoder_forward_nchw.9} parent=0 // pred_region
    _
  $region21: #{encoder_forward_nchw.9} parent=0 // pred_fallthru
    _
  %v20 = vld [vmem:[%s0] sm:$0xff]
  %v21 = vld [vmem:[%s0 + $0x8] sm:$0xff]
  %v22 = vld [vmem:[%s0 + $0x10] sm:$0xff]
  %v23 = vld [vmem:[%s0 + $0x18] sm:$0xff]
  %v24 = vld [vmem:[%s0 + $0x20] sm:$0xff]
  %v25 = vld [vmem:[%s0 + $0x28] sm:$0xff]
  %v26 = vld [vmem:[%s0 + $0x30] sm:$0xff]
  %v27 = vld [vmem:[%s0 + $0x38] sm:$0xff]
  %v28 = vld [vmem:[%s0 + $0x40] sm:$0xff]
  %v29 = vld [vmem:[%s0 + $0x48] sm:$0xff]
  %v30 = vld [vmem:[%s0 + $0x50] sm:$0xff]
  %v31 = vld [vmem:[%s0 + $0x58] sm:$0xff]
  %v32 = vld [vmem:[%s0 + $0x60] sm:$0xff]
  %v33 = vld [vmem:[%s0 + $0x68] sm:$0xff]
  %v34 = vld [vmem:[%s0 + $0x70] sm:$0xff]
  %v35 = vld [vmem:[%s0 + $0x78] sm:$0xff]
  %v36 = vld [vmem:[%s0 + $0x80] sm:$0xff]
  %v37 = vld [vmem:[%s0 + $0x88] sm:$0xff]
  %v38 = vld [vmem:[%s0 + $0x90] sm:$0xff]
  %v39 = vld [vmem:[%s0 + $0x98] sm:$0xff]
  %v40 = vld [vmem:[%s0 + $0xa0] sm:$0xff]
  %v41 = vld [vmem:[%s0 + $0xa8] sm:$0xff]
  %v42 = vld [vmem:[%s0 + $0xb0] sm:$0xff]
  %v43 = vld [vmem:[%s0 + $0xb8] sm:$0xff]
  %v44 = vld [vmem:[%s0 + $0xc0] sm:$0xff]
  %v45 = vld [vmem:[%s0 + $0xc8] sm:$0xff]
  %v46 = vld [vmem:[%s0 + $0xd0] sm:$0xff]
  %v47 = vld [vmem:[%s0 + $0xd8] sm:$0xff]
  %v48 = vld [vmem:[%s0 + $0xe0] sm:$0xff]
  %v49 = vld [vmem:[%s0 + $0xe8] sm:$0xff]
  %v50 = vld [vmem:[%s0 + $0xf0] sm:$0xff]
  %v51 = vld [vmem:[%s0 + $0xf8] sm:$0xff]
  %v52 = vld [vmem:[%s0 + $0x100] sm:$0xff]
  %v53 = vld [vmem:[%s0 + $0x108] sm:$0xff]
  %v54 = vld [vmem:[%s0 + $0x110] sm:$0xff]
  %v55 = vld [vmem:[%s0 + $0x118] sm:$0xff]
  %v56 = vld [vmem:[%s0 + $0x120] sm:$0xff]
  %v57 = vld [vmem:[%s0 + $0x128] sm:$0xff]
  %v58 = vld [vmem:[%s0 + $0x130] sm:$0xff]
  %v59 = vld [vmem:[%s0 + $0x138] sm:$0xff]
  %v60 = vld [vmem:[%s0 + $0x140] sm:$0xff]
  %v61 = vld [vmem:[%s0 + $0x148] sm:$0xff]
  %v62 = vld [vmem:[%s0 + $0x150] sm:$0xff]
  %v63 = vld [vmem:[%s0 + $0x158] sm:$0xff]
  %v64 = vld [vmem:[%s0 + $0x160] sm:$0xff]
  %v65 = vld [vmem:[%s0 + $0x168] sm:$0xff]
  %v66 = vld [vmem:[%s0 + $0x170] sm:$0xff]
  %v67 = vld [vmem:[%s0 + $0x178] sm:$0xff]
  %v68 = vld [vmem:[%s0 + $0x180] sm:$0xff]
  %v69 = vld [vmem:[%s0 + $0x188] sm:$0xff]
  %v70 = vld [vmem:[%s0 + $0x190] sm:$0xff]
  %v71 = vld [vmem:[%s0 + $0x198] sm:$0xff]
  %v72 = vld [vmem:[%s0 + $0x1a0] sm:$0xff]
  %v73 = vld [vmem:[%s0 + $0x1a8] sm:$0xff]
  %v74 = vld [vmem:[%s0 + $0x1b0] sm:$0xff]
  %v75 = vld [vmem:[%s0 + $0x1b8] sm:$0xff]
  %v76 = vld [vmem:[%s0 + $0x1c0] sm:$0xff]
  %v77 = vld [vmem:[%s0 + $0x1c8] sm:$0xff]
  %v78 = vld [vmem:[%s0 + $0x1d0] sm:$0xff]
  %v79 = vld [vmem:[%s0 + $0x1d8] sm:$0xff]
  %v80 = vld [vmem:[%s0 + $0x1e0] sm:$0xff]
  %v81 = vld [vmem:[%s0 + $0x1e8] sm:$0xff]
  %v82 = vld [vmem:[%s0 + $0x1f0] sm:$0xff]
  %v83 = vld [vmem:[%s0 + $0x1f8] sm:$0xff]
  %v84 = vld [vmem:[%s1] sm:$0xff]
  %v85 = vld [vmem:[%s1 + $0x8] sm:$0xff]
  %v86 = vld [vmem:[%s1 + $0x10] sm:$0xff]
  %v87 = vld [vmem:[%s1 + $0x18] sm:$0x7]
  %v88 = vld [vmem:[%s2] sm:$0x1]
  %v90 = vperm.slane %v88, 0
  %vm92 = vcmask 220160
  %v94 = vsel %vm92, %v20, 0
  %v97 = vsel %vm92, %v21, 0
  %v100 = vsel %vm92, %v22, 0
  %v103 = vsel %vm92, %v23, 0
  %v106 = vsel %vm92, %v24, 0
  %v109 = vsel %vm92, %v25, 0
  %v112 = vsel %vm92, %v26, 0
  %v115 = vsel %vm92, %v27, 0
  %v118 = vsel %vm92, %v28, 0
  %v121 = vsel %vm92, %v29, 0
  %v124 = vsel %vm92, %v30, 0
  %v127 = vsel %vm92, %v31, 0
  %v130 = vsel %vm92, %v32, 0
  %v133 = vsel %vm92, %v33, 0
  %v136 = vsel %vm92, %v34, 0
  %v139 = vsel %vm92, %v35, 0
  %v142 = vsel %vm92, %v36, 0
  %v145 = vsel %vm92, %v37, 0
  %v148 = vsel %vm92, %v38, 0
  %v151 = vsel %vm92, %v39, 0
  %v154 = vsel %vm92, %v40, 0
  %v157 = vsel %vm92, %v41, 0
  %v160 = vsel %vm92, %v42, 0
  %v163 = vsel %vm92, %v43, 0
  %v166 = vsel %vm92, %v44, 0
  %v169 = vsel %vm92, %v45, 0
  %v172 = vsel %vm92, %v46, 0
  %v175 = vsel %vm92, %v47, 0
  %v178 = vsel %vm92, %v48, 0
  %v181 = vsel %vm92, %v49, 0
  %v184 = vsel %vm92, %v50, 0
  %v187 = vsel %vm92, %v51, 0
  %v190 = vsel %vm92, %v52, 0
  %v193 = vsel %vm92, %v53, 0
  %v196 = vsel %vm92, %v54, 0
  %v199 = vsel %vm92, %v55, 0
  %v202 = vsel %vm92, %v56, 0
  %v205 = vsel %vm92, %v57, 0
  %v208 = vsel %vm92, %v58, 0
  %v211 = vsel %vm92, %v59, 0
  %v214 = vsel %vm92, %v60, 0
  %v217 = vsel %vm92, %v61, 0
  %v220 = vsel %vm92, %v62, 0
  %v223 = vsel %vm92, %v63, 0
  %v226 = vsel %vm92, %v64, 0
  %v229 = vsel %vm92, %v65, 0
  %v232 = vsel %vm92, %v66, 0
  %v235 = vsel %vm92, %v67, 0
  %v238 = vsel %vm92, %v68, 0
  %v241 = vsel %vm92, %v69, 0
  %v244 = vsel %vm92, %v70, 0
  %v247 = vsel %vm92, %v71, 0
  %v250 = vsel %vm92, %v72, 0
  %v253 = vsel %vm92, %v73, 0
  %v256 = vsel %vm92, %v74, 0
  %v259 = vsel %vm92, %v75, 0
  %v262 = vsel %vm92, %v76, 0
  %v265 = vsel %vm92, %v77, 0
  %v268 = vsel %vm92, %v78, 0
  %v271 = vsel %vm92, %v79, 0
  %v274 = vsel %vm92, %v80, 0
  %v277 = vsel %vm92, %v81, 0
  %v280 = vsel %vm92, %v82, 0
  %v283 = vsel %vm92, %v83, 0
  %vm285 = vcmask 1042432
  %v287 = vsel %vm285, %v87, 0
  %289 = vmatpush.msra.mxu0 0.0
  %290 = vmatpush.msra.mxu0 0.0
  %291 = vmatpush.msra.mxu0 0.0
  %292 = vmatpush.msra.mxu0 0.0
  %293 = vmatpush.msra.mxu0 0.0
  %294 = vmatpush.msra.mxu0 0.0
  %295 = vmatpush.msra.mxu0 0.0
  %296 = vmatpush.msra.mxu0 0.0
  %297 = vmatpush.msra.mxu0 0.0
  %298 = vmatpush.msra.mxu0 0.0
  %299 = vmatpush.msra.mxu0 0.0
  %300 = vmatpush.msra.mxu0 0.0
  %301 = vmatpush.msra.mxu0 %v287
  %302 = vmatpush.msra.mxu0 %v86
  %303 = vmatpush.msra.mxu0 %v85
  %304 = vmatpush.msra.mxu0 %v84
  %305 = vmatmul.f32.gmra.mxu0 %v94
  %v306 = vpop.f32.mrf.mxu0
  %v307 = vadd.f32 %v90, %v306
  %308 = vmatmul.f32.gmra.mxu0 %v97
  %v309 = vpop.f32.mrf.mxu0
  %v310 = vadd.f32 %v90, %v309
  %311 = vmatmul.f32.gmra.mxu0 %v100
  %v312 = vpop.f32.mrf.mxu0
  %v313 = vadd.f32 %v90, %v312
  %314 = vmatmul.f32.gmra.mxu0 %v103
  %v315 = vpop.f32.mrf.mxu0
  %v316 = vadd.f32 %v90, %v315
  %317 = vmatmul.f32.gmra.mxu0 %v106
  %v318 = vpop.f32.mrf.mxu0
  %v319 = vadd.f32 %v90, %v318
  %320 = vmatmul.f32.gmra.mxu0 %v109
  %v321 = vpop.f32.mrf.mxu0
  %v322 = vadd.f32 %v90, %v321
  %323 = vmatmul.f32.gmra.mxu0 %v112
  %v324 = vpop.f32.mrf.mxu0
  %v325 = vadd.f32 %v90, %v324
  %326 = vmatmul.f32.gmra.mxu0 %v115
  %v327 = vpop.f32.mrf.mxu0
  %v328 = vadd.f32 %v90, %v327
  %329 = vmatmul.f32.gmra.mxu0 %v118
  %v330 = vpop.f32.mrf.mxu0
  %v331 = vadd.f32 %v90, %v330
  %332 = vmatmul.f32.gmra.mxu0 %v121
  %v333 = vpop.f32.mrf.mxu0
  %v334 = vadd.f32 %v90, %v333
  %335 = vmatmul.f32.gmra.mxu0 %v124
  %v336 = vpop.f32.mrf.mxu0
  %v337 = vadd.f32 %v90, %v336
  %338 = vmatmul.f32.gmra.mxu0 %v127
  %v339 = vpop.f32.mrf.mxu0
  %v340 = vadd.f32 %v90, %v339
  %341 = vmatmul.f32.gmra.mxu0 %v130
  %v342 = vpop.f32.mrf.mxu0
  %v343 = vadd.f32 %v90, %v342
  %344 = vmatmul.f32.gmra.mxu0 %v133
  %v345 = vpop.f32.mrf.mxu0
  %v346 = vadd.f32 %v90, %v345
  %347 = vmatmul.f32.gmra.mxu0 %v136
  %v348 = vpop.f32.mrf.mxu0
  %v349 = vadd.f32 %v90, %v348
  %350 = vmatmul.f32.gmra.mxu0 %v139
  %v351 = vpop.f32.mrf.mxu0
  %v352 = vadd.f32 %v90, %v351
  %353 = vmatmul.f32.gmra.mxu0 %v142
  %v354 = vpop.f32.mrf.mxu0
  %v355 = vadd.f32 %v90, %v354
  %356 = vmatmul.f32.gmra.mxu0 %v145
  %v357 = vpop.f32.mrf.mxu0
  %v358 = vadd.f32 %v90, %v357
  %359 = vmatmul.f32.gmra.mxu0 %v148
  %v360 = vpop.f32.mrf.mxu0
  %v361 = vadd.f32 %v90, %v360
  %362 = vmatmul.f32.gmra.mxu0 %v151
  %v363 = vpop.f32.mrf.mxu0
  %v364 = vadd.f32 %v90, %v363
  %365 = vmatmul.f32.gmra.mxu0 %v154
  %v366 = vpop.f32.mrf.mxu0
  %v367 = vadd.f32 %v90, %v366
  %368 = vmatmul.f32.gmra.mxu0 %v157
  %v369 = vpop.f32.mrf.mxu0
  %v370 = vadd.f32 %v90, %v369
  %371 = vmatmul.f32.gmra.mxu0 %v160
  %v372 = vpop.f32.mrf.mxu0
  %v373 = vadd.f32 %v90, %v372
  %374 = vmatmul.f32.gmra.mxu0 %v163
  %v375 = vpop.f32.mrf.mxu0
  %v376 = vadd.f32 %v90, %v375
  %377 = vmatmul.f32.gmra.mxu0 %v166
  %v378 = vpop.f32.mrf.mxu0
  %v379 = vadd.f32 %v90, %v378
  %380 = vmatmul.f32.gmra.mxu0 %v169
  %v381 = vpop.f32.mrf.mxu0
  %v382 = vadd.f32 %v90, %v381
  %383 = vmatmul.f32.gmra.mxu0 %v172
  %v384 = vpop.f32.mrf.mxu0
  %v385 = vadd.f32 %v90, %v384
  %386 = vmatmul.f32.gmra.mxu0 %v175
  %v387 = vpop.f32.mrf.mxu0
  %v388 = vadd.f32 %v90, %v387
  %389 = vmatmul.f32.gmra.mxu0 %v178
  %v390 = vpop.f32.mrf.mxu0
  %v391 = vadd.f32 %v90, %v390
  %392 = vmatmul.f32.gmra.mxu0 %v181
  %v393 = vpop.f32.mrf.mxu0
  %v394 = vadd.f32 %v90, %v393
  %395 = vmatmul.f32.gmra.mxu0 %v184
  %v396 = vpop.f32.mrf.mxu0
  %v397 = vadd.f32 %v90, %v396
  %398 = vmatmul.f32.gmra.mxu0 %v187
  %v399 = vpop.f32.mrf.mxu0
  %v400 = vadd.f32 %v90, %v399
  %401 = vmatmul.f32.gmra.mxu0 %v190
  %v402 = vpop.f32.mrf.mxu0
  %v403 = vadd.f32 %v90, %v402
  %404 = vmatmul.f32.gmra.mxu0 %v193
  %v405 = vpop.f32.mrf.mxu0
  %v406 = vadd.f32 %v90, %v405
  %407 = vmatmul.f32.gmra.mxu0 %v196
  %v408 = vpop.f32.mrf.mxu0
  %v409 = vadd.f32 %v90, %v408
  %410 = vmatmul.f32.gmra.mxu0 %v199
  %v411 = vpop.f32.mrf.mxu0
  %v412 = vadd.f32 %v90, %v411
  %413 = vmatmul.f32.gmra.mxu0 %v202
  %v414 = vpop.f32.mrf.mxu0
  %v415 = vadd.f32 %v90, %v414
  %416 = vmatmul.f32.gmra.mxu0 %v205
  %v417 = vpop.f32.mrf.mxu0
  %v418 = vadd.f32 %v90, %v417
  %419 = vmatmul.f32.gmra.mxu0 %v208
  %v420 = vpop.f32.mrf.mxu0
  %v421 = vadd.f32 %v90, %v420
  %422 = vmatmul.f32.gmra.mxu0 %v211
  %v423 = vpop.f32.mrf.mxu0
  %v424 = vadd.f32 %v90, %v423
  %425 = vmatmul.f32.gmra.mxu0 %v214
  %v426 = vpop.f32.mrf.mxu0
  %v427 = vadd.f32 %v90, %v426
  %428 = vmatmul.f32.gmra.mxu0 %v217
  %v429 = vpop.f32.mrf.mxu0
  %v430 = vadd.f32 %v90, %v429
  %431 = vmatmul.f32.gmra.mxu0 %v220
  %v432 = vpop.f32.mrf.mxu0
  %v433 = vadd.f32 %v90, %v432
  %434 = vmatmul.f32.gmra.mxu0 %v223
  %v435 = vpop.f32.mrf.mxu0
  %v436 = vadd.f32 %v90, %v435
  %437 = vmatmul.f32.gmra.mxu0 %v226
  %v438 = vpop.f32.mrf.mxu0
  %v439 = vadd.f32 %v90, %v438
  %440 = vmatmul.f32.gmra.mxu0 %v229
  %v441 = vpop.f32.mrf.mxu0
  %v442 = vadd.f32 %v90, %v441
  %443 = vmatmul.f32.gmra.mxu0 %v232
  %v444 = vpop.f32.mrf.mxu0
  %v445 = vadd.f32 %v90, %v444
  %446 = vmatmul.f32.gmra.mxu0 %v235
  %v447 = vpop.f32.mrf.mxu0
  %v448 = vadd.f32 %v90, %v447
  %449 = vmatmul.f32.gmra.mxu0 %v238
  %v450 = vpop.f32.mrf.mxu0
  %v451 = vadd.f32 %v90, %v450
  %452 = vmatmul.f32.gmra.mxu0 %v241
  %v453 = vpop.f32.mrf.mxu0
  %v454 = vadd.f32 %v90, %v453
  %455 = vmatmul.f32.gmra.mxu0 %v244
  %v456 = vpop.f32.mrf.mxu0
  %v457 = vadd.f32 %v90, %v456
  %458 = vmatmul.f32.gmra.mxu0 %v247
  %v459 = vpop.f32.mrf.mxu0
  %v460 = vadd.f32 %v90, %v459
  %461 = vmatmul.f32.gmra.mxu0 %v250
  %v462 = vpop.f32.mrf.mxu0
  %v463 = vadd.f32 %v90, %v462
  %464 = vmatmul.f32.gmra.mxu0 %v253
  %v465 = vpop.f32.mrf.mxu0
  %v466 = vadd.f32 %v90, %v465
  %467 = vmatmul.f32.gmra.mxu0 %v256
  %v468 = vpop.f32.mrf.mxu0
  %v469 = vadd.f32 %v90, %v468
  %470 = vmatmul.f32.gmra.mxu0 %v259
  %v471 = vpop.f32.mrf.mxu0
  %v472 = vadd.f32 %v90, %v471
  %473 = vmatmul.f32.gmra.mxu0 %v262
  %v474 = vpop.f32.mrf.mxu0
  %v475 = vadd.f32 %v90, %v474
  %476 = vmatmul.f32.gmra.mxu0 %v265
  %v477 = vpop.f32.mrf.mxu0
  %v478 = vadd.f32 %v90, %v477
  %479 = vmatmul.f32.gmra.mxu0 %v268
  %v480 = vpop.f32.mrf.mxu0
  %v481 = vadd.f32 %v90, %v480
  %482 = vmatmul.f32.gmra.mxu0 %v271
  %v483 = vpop.f32.mrf.mxu0
  %v484 = vadd.f32 %v90, %v483
  %485 = vmatmul.f32.gmra.mxu0 %v274
  %v486 = vpop.f32.mrf.mxu0
  %v487 = vadd.f32 %v90, %v486
  %488 = vmatmul.f32.gmra.mxu0 %v277
  %v489 = vpop.f32.mrf.mxu0
  %v490 = vadd.f32 %v90, %v489
  %491 = vmatmul.f32.gmra.mxu0 %v280
  %v492 = vpop.f32.mrf.mxu0
  %v493 = vadd.f32 %v90, %v492
  %494 = vmatmul.f32.gmra.mxu0 %v283
  %v495 = vpop.f32.mrf.mxu0
  %v496 = vadd.f32 %v90, %v495
  %497 = vdwg.mxu0
  %vm498 = vcmask 64512
  %v499 = vsel %vm498, %v307, 0.0
  %v500 = vsel %vm498, %v310, 0.0
  %v501 = vadd.f32 %v499, %v500
  %v502 = vsel %vm498, %v313, 0.0
  %v503 = vadd.f32 %v501, %v502
  %v504 = vsel %vm498, %v316, 0.0
  %v505 = vadd.f32 %v503, %v504
  %v506 = vsel %vm498, %v319, 0.0
  %v507 = vadd.f32 %v505, %v506
  %v508 = vsel %vm498, %v322, 0.0
  %v509 = vadd.f32 %v507, %v508
  %v510 = vsel %vm498, %v325, 0.0
  %v511 = vadd.f32 %v509, %v510
  %v512 = vsel %vm498, %v328, 0.0
  %v513 = vadd.f32 %v511, %v512
  %v514 = vsel %vm498, %v331, 0.0
  %v515 = vadd.f32 %v513, %v514
  %v516 = vsel %vm498, %v334, 0.0
  %v517 = vadd.f32 %v515, %v516
  %v518 = vsel %vm498, %v337, 0.0
  %v519 = vadd.f32 %v517, %v518
  %v520 = vsel %vm498, %v340, 0.0
  %v521 = vadd.f32 %v519, %v520
  %v522 = vsel %vm498, %v343, 0.0
  %v523 = vadd.f32 %v521, %v522
  %v524 = vsel %vm498, %v346, 0.0
  %v525 = vadd.f32 %v523, %v524
  %v526 = vsel %vm498, %v349, 0.0
  %v527 = vadd.f32 %v525, %v526
  %v528 = vsel %vm498, %v352, 0.0
  %v529 = vadd.f32 %v527, %v528
  %v530 = vsel %vm498, %v355, 0.0
  %v531 = vadd.f32 %v529, %v530
  %v532 = vsel %vm498, %v358, 0.0
  %v533 = vadd.f32 %v531, %v532
  %v534 = vsel %vm498, %v361, 0.0
  %v535 = vadd.f32 %v533, %v534
  %v536 = vsel %vm498, %v364, 0.0
  %v537 = vadd.f32 %v535, %v536
  %v538 = vsel %vm498, %v367, 0.0
  %v539 = vadd.f32 %v537, %v538
  %v540 = vsel %vm498, %v370, 0.0
  %v541 = vadd.f32 %v539, %v540
  %v542 = vsel %vm498, %v373, 0.0
  %v543 = vadd.f32 %v541, %v542
  %v544 = vsel %vm498, %v376, 0.0
  %v545 = vadd.f32 %v543, %v544
  %v546 = vsel %vm498, %v379, 0.0
  %v547 = vadd.f32 %v545, %v546
  %v548 = vsel %vm498, %v382, 0.0
  %v549 = vadd.f32 %v547, %v548
  %v550 = vsel %vm498, %v385, 0.0
  %v551 = vadd.f32 %v549, %v550
  %v552 = vsel %vm498, %v388, 0.0
  %v553 = vadd.f32 %v551, %v552
  %v554 = vsel %vm498, %v391, 0.0
  %v555 = vadd.f32 %v553, %v554
  %v556 = vsel %vm498, %v394, 0.0
  %v557 = vadd.f32 %v555, %v556
  %v558 = vsel %vm498, %v397, 0.0
  %v559 = vadd.f32 %v557, %v558
  %v560 = vsel %vm498, %v400, 0.0
  %v561 = vadd.f32 %v559, %v560
  %v562 = vsel %vm498, %v403, 0.0
  %v563 = vadd.f32 %v561, %v562
  %v564 = vsel %vm498, %v406, 0.0
  %v565 = vadd.f32 %v563, %v564
  %v566 = vsel %vm498, %v409, 0.0
  %v567 = vadd.f32 %v565, %v566
  %v568 = vsel %vm498, %v412, 0.0
  %v569 = vadd.f32 %v567, %v568
  %v570 = vsel %vm498, %v415, 0.0
  %v571 = vadd.f32 %v569, %v570
  %v572 = vsel %vm498, %v418, 0.0
  %v573 = vadd.f32 %v571, %v572
  %v574 = vsel %vm498, %v421, 0.0
  %v575 = vadd.f32 %v573, %v574
  %v576 = vsel %vm498, %v424, 0.0
  %v577 = vadd.f32 %v575, %v576
  %v578 = vsel %vm498, %v427, 0.0
  %v579 = vadd.f32 %v577, %v578
  %v580 = vsel %vm498, %v430, 0.0
  %v581 = vadd.f32 %v579, %v580
  %v582 = vsel %vm498, %v433, 0.0
  %v583 = vadd.f32 %v581, %v582
  %v584 = vsel %vm498, %v436, 0.0
  %v585 = vadd.f32 %v583, %v584
  %v586 = vsel %vm498, %v439, 0.0
  %v587 = vadd.f32 %v585, %v586
  %v588 = vsel %vm498, %v442, 0.0
  %v589 = vadd.f32 %v587, %v588
  %v590 = vsel %vm498, %v445, 0.0
  %v591 = vadd.f32 %v589, %v590
  %v592 = vsel %vm498, %v448, 0.0
  %v593 = vadd.f32 %v591, %v592
  %v594 = vsel %vm498, %v451, 0.0
  %v595 = vadd.f32 %v593, %v594
  %v596 = vsel %vm498, %v454, 0.0
  %v597 = vadd.f32 %v595, %v596
  %v598 = vsel %vm498, %v457, 0.0
  %v599 = vadd.f32 %v597, %v598
  %v600 = vsel %vm498, %v460, 0.0
  %v601 = vadd.f32 %v599, %v600
  %v602 = vsel %vm498, %v463, 0.0
  %v603 = vadd.f32 %v601, %v602
  %v604 = vsel %vm498, %v466, 0.0
  %v605 = vadd.f32 %v603, %v604
  %v606 = vsel %vm498, %v469, 0.0
  %v607 = vadd.f32 %v605, %v606
  %v608 = vsel %vm498, %v472, 0.0
  %v609 = vadd.f32 %v607, %v608
  %v610 = vsel %vm498, %v475, 0.0
  %v611 = vadd.f32 %v609, %v610
  %v612 = vsel %vm498, %v478, 0.0
  %v613 = vadd.f32 %v611, %v612
  %v614 = vsel %vm498, %v481, 0.0
  %v615 = vadd.f32 %v613, %v614
  %v616 = vsel %vm498, %v484, 0.0
  %v617 = vadd.f32 %v615, %v616
  %v618 = vsel %vm498, %v487, 0.0
  %v619 = vadd.f32 %v617, %v618
  %v620 = vsel %vm498, %v490, 0.0
  %v621 = vadd.f32 %v619, %v620
  %v622 = vsel %vm498, %v493, 0.0
  %v623 = vadd.f32 %v621, %v622
  %v624 = vsel %vm498, %v496, 0.0
  %v625 = vadd.f32 %v623, %v624
  %v626 = vrot.slane %v625, 4
  %v627 = vadd.f32 %v625, %v626
  %v628 = vrot.slane %v627, 2
  %v629 = vadd.f32 %v627, %v628
  %v630 = vrot.slane %v629, 1
  %v631 = vadd.f32 %v629, %v630
  %v632 = vrcp.pop 512.0
  %v633 = vmul.f32 512.0, %v632
  %v634 = vsub.f32 1.0, %v633
  %v635 = vmul.f32 %v632, %v634
  %v636 = vadd.f32 %v632, %v635
  %vm637 = vweird.f32 %v632
  %v638 = vsel %vm637, %v632, %v636
  %v639 = vmul.f32 %v631, %v638
  %v640 = vsub.f32 %v307, %v639
  %v641 = vsub.f32 %v310, %v639
  %v642 = vsub.f32 %v313, %v639
  %v643 = vsub.f32 %v316, %v639
  %v644 = vsub.f32 %v319, %v639
  %v645 = vsub.f32 %v322, %v639
  %v646 = vsub.f32 %v325, %v639
  %v647 = vsub.f32 %v328, %v639
  %v648 = vsub.f32 %v331, %v639
  %v649 = vsub.f32 %v334, %v639
  %v650 = vsub.f32 %v337, %v639
  %v651 = vsub.f32 %v340, %v639
  %v652 = vsub.f32 %v343, %v639
  %v653 = vsub.f32 %v346, %v639
  %v654 = vsub.f32 %v349, %v639
  %v655 = vsub.f32 %v352, %v639
  %v656 = vsub.f32 %v355, %v639
  %v657 = vsub.f32 %v358, %v639
  %v658 = vsub.f32 %v361, %v639
  %v659 = vsub.f32 %v364, %v639
  %v660 = vsub.f32 %v367, %v639
  %v661 = vsub.f32 %v370, %v639
  %v662 = vsub.f32 %v373, %v639
  %v663 = vsub.f32 %v376, %v639
  %v664 = vsub.f32 %v379, %v639
  %v665 = vsub.f32 %v382, %v639
  %v666 = vsub.f32 %v385, %v639
  %v667 = vsub.f32 %v388, %v639
  %v668 = vsub.f32 %v391, %v639
  %v669 = vsub.f32 %v394, %v639
  %v670 = vsub.f32 %v397, %v639
  %v671 = vsub.f32 %v400, %v639
  %v672 = vsub.f32 %v403, %v639
  %v673 = vsub.f32 %v406, %v639
  %v674 = vsub.f32 %v409, %v639
  %v675 = vsub.f32 %v412, %v639
  %v676 = vsub.f32 %v415, %v639
  %v677 = vsub.f32 %v418, %v639
  %v678 = vsub.f32 %v421, %v639
  %v679 = vsub.f32 %v424, %v639
  %v680 = vsub.f32 %v427, %v639
  %v681 = vsub.f32 %v430, %v639
  %v682 = vsub.f32 %v433, %v639
  %v683 = vsub.f32 %v436, %v639
  %v684 = vsub.f32 %v439, %v639
  %v685 = vsub.f32 %v442, %v639
  %v686 = vsub.f32 %v445, %v639
  %v687 = vsub.f32 %v448, %v639
  %v688 = vsub.f32 %v451, %v639
  %v689 = vsub.f32 %v454, %v639
  %v690 = vsub.f32 %v457, %v639
  %v691 = vsub.f32 %v460, %v639
  %v692 = vsub.f32 %v463, %v639
  %v693 = vsub.f32 %v466, %v639
  %v694 = vsub.f32 %v469, %v639
  %v695 = vsub.f32 %v472, %v639
  %v696 = vsub.f32 %v475, %v639
  %v697 = vsub.f32 %v478, %v639
  %v698 = vsub.f32 %v481, %v639
  %v699 = vsub.f32 %v484, %v639
  %v700 = vsub.f32 %v487, %v639
  %v701 = vsub.f32 %v490, %v639
  %v702 = vsub.f32 %v493, %v639
  %v703 = vsub.f32 %v496, %v639
  %v704 = vmul.f32 %v640, %v640
  %v705 = vmul.f32 %v641, %v641
  %v706 = vmul.f32 %v642, %v642
  %v707 = vmul.f32 %v643, %v643
  %v708 = vmul.f32 %v644, %v644
  %v709 = vmul.f32 %v645, %v645
  %v710 = vmul.f32 %v646, %v646
  %v711 = vmul.f32 %v647, %v647
  %v712 = vmul.f32 %v648, %v648
  %v713 = vmul.f32 %v649, %v649
  %v714 = vmul.f32 %v650, %v650
  %v715 = vmul.f32 %v651, %v651
  %v716 = vmul.f32 %v652, %v652
  %v717 = vmul.f32 %v653, %v653
  %v718 = vmul.f32 %v654, %v654
  %v719 = vmul.f32 %v655, %v655
  %v720 = vmul.f32 %v656, %v656
  %v721 = vmul.f32 %v657, %v657
  %v722 = vmul.f32 %v658, %v658
  %v723 = vmul.f32 %v659, %v659
  %v724 = vmul.f32 %v660, %v660
  %v725 = vmul.f32 %v661, %v661
  %v726 = vmul.f32 %v662, %v662
  %v727 = vmul.f32 %v663, %v663
  %v728 = vmul.f32 %v664, %v664
  %v729 = vmul.f32 %v665, %v665
  %v730 = vmul.f32 %v666, %v666
  %v731 = vmul.f32 %v667, %v667
  %v732 = vmul.f32 %v668, %v668
  %v733 = vmul.f32 %v669, %v669
  %v734 = vmul.f32 %v670, %v670
  %v735 = vmul.f32 %v671, %v671
  %v736 = vmul.f32 %v672, %v672
  %v737 = vmul.f32 %v673, %v673
  %v738 = vmul.f32 %v674, %v674
  %v739 = vmul.f32 %v675, %v675
  %v740 = vmul.f32 %v676, %v676
  %v741 = vmul.f32 %v677, %v677
  %v742 = vmul.f32 %v678, %v678
  %v743 = vmul.f32 %v679, %v679
  %v744 = vmul.f32 %v680, %v680
  %v745 = vmul.f32 %v681, %v681
  %v746 = vmul.f32 %v682, %v682
  %v747 = vmul.f32 %v683, %v683
  %v748 = vmul.f32 %v684, %v684
  %v749 = vmul.f32 %v685, %v685
  %v750 = vmul.f32 %v686, %v686
  %v751 = vmul.f32 %v687, %v687
  %v752 = vmul.f32 %v688, %v688
  %v753 = vmul.f32 %v689, %v689
  %v754 = vmul.f32 %v690, %v690
  %v755 = vmul.f32 %v691, %v691
  %v756 = vmul.f32 %v692, %v692
  %v757 = vmul.f32 %v693, %v693
  %v758 = vmul.f32 %v694, %v694
  %v759 = vmul.f32 %v695, %v695
  %v760 = vmul.f32 %v696, %v696
  %v761 = vmul.f32 %v697, %v697
  %v762 = vmul.f32 %v698, %v698
  %v763 = vmul.f32 %v699, %v699
  %v764 = vmul.f32 %v700, %v700
  %v765 = vmul.f32 %v701, %v701
  %v766 = vmul.f32 %v702, %v702
  %v767 = vmul.f32 %v703, %v703
  %v768 = vsel %vm498, %v704, 0.0
  %v769 = vsel %vm498, %v705, 0.0
  %v770 = vadd.f32 %v768, %v769
  %v771 = vsel %vm498, %v706, 0.0
  %v772 = vadd.f32 %v770, %v771
  %v773 = vsel %vm498, %v707, 0.0
  %v774 = vadd.f32 %v772, %v773
  %v775 = vsel %vm498, %v708, 0.0
  %v776 = vadd.f32 %v774, %v775
  %v777 = vsel %vm498, %v709, 0.0
  %v778 = vadd.f32 %v776, %v777
  %v779 = vsel %vm498, %v710, 0.0
  %v780 = vadd.f32 %v778, %v779
  %v781 = vsel %vm498, %v711, 0.0
  %v782 = vadd.f32 %v780, %v781
  %v783 = vsel %vm498, %v712, 0.0
  %v784 = vadd.f32 %v782, %v783
  %v785 = vsel %vm498, %v713, 0.0
  %v786 = vadd.f32 %v784, %v785
  %v787 = vsel %vm498, %v714, 0.0
  %v788 = vadd.f32 %v786, %v787
  %v789 = vsel %vm498, %v715, 0.0
  %v790 = vadd.f32 %v788, %v789
  %v791 = vsel %vm498, %v716, 0.0
  %v792 = vadd.f32 %v790, %v791
  %v793 = vsel %vm498, %v717, 0.0
  %v794 = vadd.f32 %v792, %v793
  %v795 = vsel %vm498, %v718, 0.0
  %v796 = vadd.f32 %v794, %v795
  %v797 = vsel %vm498, %v719, 0.0
  %v798 = vadd.f32 %v796, %v797
  %v799 = vsel %vm498, %v720, 0.0
  %v800 = vadd.f32 %v798, %v799
  %v801 = vsel %vm498, %v721, 0.0
  %v802 = vadd.f32 %v800, %v801
  %v803 = vsel %vm498, %v722, 0.0
  %v804 = vadd.f32 %v802, %v803
  %v805 = vsel %vm498, %v723, 0.0
  %v806 = vadd.f32 %v804, %v805
  %v807 = vsel %vm498, %v724, 0.0
  %v808 = vadd.f32 %v806, %v807
  %v809 = vsel %vm498, %v725, 0.0
  %v810 = vadd.f32 %v808, %v809
  %v811 = vsel %vm498, %v726, 0.0
  %v812 = vadd.f32 %v810, %v811
  %v813 = vsel %vm498, %v727, 0.0
  %v814 = vadd.f32 %v812, %v813
  %v815 = vsel %vm498, %v728, 0.0
  %v816 = vadd.f32 %v814, %v815
  %v817 = vsel %vm498, %v729, 0.0
  %v818 = vadd.f32 %v816, %v817
  %v819 = vsel %vm498, %v730, 0.0
  %v820 = vadd.f32 %v818, %v819
  %v821 = vsel %vm498, %v731, 0.0
  %v822 = vadd.f32 %v820, %v821
  %v823 = vsel %vm498, %v732, 0.0
  %v824 = vadd.f32 %v822, %v823
  %v825 = vsel %vm498, %v733, 0.0
  %v826 = vadd.f32 %v824, %v825
  %v827 = vsel %vm498, %v734, 0.0
  %v828 = vadd.f32 %v826, %v827
  %v829 = vsel %vm498, %v735, 0.0
  %v830 = vadd.f32 %v828, %v829
  %v831 = vsel %vm498, %v736, 0.0
  %v832 = vadd.f32 %v830, %v831
  %v833 = vsel %vm498, %v737, 0.0
  %v834 = vadd.f32 %v832, %v833
  %v835 = vsel %vm498, %v738, 0.0
  %v836 = vadd.f32 %v834, %v835
  %v837 = vsel %vm498, %v739, 0.0
  %v838 = vadd.f32 %v836, %v837
  %v839 = vsel %vm498, %v740, 0.0
  %v840 = vadd.f32 %v838, %v839
  %v841 = vsel %vm498, %v741, 0.0
  %v842 = vadd.f32 %v840, %v841
  %v843 = vsel %vm498, %v742, 0.0
  %v844 = vadd.f32 %v842, %v843
  %v845 = vsel %vm498, %v743, 0.0
  %v846 = vadd.f32 %v844, %v845
  %v847 = vsel %vm498, %v744, 0.0
  %v848 = vadd.f32 %v846, %v847
  %v849 = vsel %vm498, %v745, 0.0
  %v850 = vadd.f32 %v848, %v849
  %v851 = vsel %vm498, %v746, 0.0
  %v852 = vadd.f32 %v850, %v851
  %v853 = vsel %vm498, %v747, 0.0
  %v854 = vadd.f32 %v852, %v853
  %v855 = vsel %vm498, %v748, 0.0
  %v856 = vadd.f32 %v854, %v855
  %v857 = vsel %vm498, %v749, 0.0
  %v858 = vadd.f32 %v856, %v857
  %v859 = vsel %vm498, %v750, 0.0
  %v860 = vadd.f32 %v858, %v859
  %v861 = vsel %vm498, %v751, 0.0
  %v862 = vadd.f32 %v860, %v861
  %v863 = vsel %vm498, %v752, 0.0
  %v864 = vadd.f32 %v862, %v863
  %v865 = vsel %vm498, %v753, 0.0
  %v866 = vadd.f32 %v864, %v865
  %v867 = vsel %vm498, %v754, 0.0
  %v868 = vadd.f32 %v866, %v867
  %v869 = vsel %vm498, %v755, 0.0
  %v870 = vadd.f32 %v868, %v869
  %v871 = vsel %vm498, %v756, 0.0
  %v872 = vadd.f32 %v870, %v871
  %v873 = vsel %vm498, %v757, 0.0
  %v874 = vadd.f32 %v872, %v873
  %v875 = vsel %vm498, %v758, 0.0
  %v876 = vadd.f32 %v874, %v875
  %v877 = vsel %vm498, %v759, 0.0
  %v878 = vadd.f32 %v876, %v877
  %v879 = vsel %vm498, %v760, 0.0
  %v880 = vadd.f32 %v878, %v879
  %v881 = vsel %vm498, %v761, 0.0
  %v882 = vadd.f32 %v880, %v881
  %v883 = vsel %vm498, %v762, 0.0
  %v884 = vadd.f32 %v882, %v883
  %v885 = vsel %vm498, %v763, 0.0
  %v886 = vadd.f32 %v884, %v885
  %v887 = vsel %vm498, %v764, 0.0
  %v888 = vadd.f32 %v886, %v887
  %v889 = vsel %vm498, %v765, 0.0
  %v890 = vadd.f32 %v888, %v889
  %v891 = vsel %vm498, %v766, 0.0
  %v892 = vadd.f32 %v890, %v891
  %v893 = vsel %vm498, %v767, 0.0
  %v894 = vadd.f32 %v892, %v893
  %v895 = vrot.slane %v894, 4
  %v896 = vadd.f32 %v894, %v895
  %v897 = vrot.slane %v896, 2
  %v898 = vadd.f32 %v896, %v897
  %v899 = vrot.slane %v898, 1
  %v900 = vadd.f32 %v898, %v899
  %v901 = vmul.f32 %v900, %v638
  %v902 = vadd.f32 %v901, 1e-05
  %v903 = vrsqrt.pop %v902
  %v904 = vmul.f32 %v903, %v902
  %v905 = vmul.f32 %v904, %v903
  %v906 = vmul.f32 0.5, %v905
  %v907 = vsub.f32 1.5, %v906
  %v908 = vmul.f32 %v903, %v907
  %vm909 = vweird.f32 %v902
  %vm910 = vweird.f32 %v903
  %vm911 = vmor %vm909, %vm910
  %v912 = vsel %vm911, %v903, %v908
  %v913 = vmul.f32 %v640, %v912
  %v914 = vmul.f32 %v641, %v912
  %v915 = vmul.f32 %v642, %v912
  %v916 = vmul.f32 %v643, %v912
  %v917 = vmul.f32 %v644, %v912
  %v918 = vmul.f32 %v645, %v912
  %v919 = vmul.f32 %v646, %v912
  %v920 = vmul.f32 %v647, %v912
  %v921 = vmul.f32 %v648, %v912
  %v922 = vmul.f32 %v649, %v912
  %v923 = vmul.f32 %v650, %v912
  %v924 = vmul.f32 %v651, %v912
  %v925 = vmul.f32 %v652, %v912
  %v926 = vmul.f32 %v653, %v912
  %v927 = vmul.f32 %v654, %v912
  %v928 = vmul.f32 %v655, %v912
  %v929 = vmul.f32 %v656, %v912
  %v930 = vmul.f32 %v657, %v912
  %v931 = vmul.f32 %v658, %v912
  %v932 = vmul.f32 %v659, %v912
  %v933 = vmul.f32 %v660, %v912
  %v934 = vmul.f32 %v661, %v912
  %v935 = vmul.f32 %v662, %v912
  %v936 = vmul.f32 %v663, %v912
  %v937 = vmul.f32 %v664, %v912
  %v938 = vmul.f32 %v665, %v912
  %v939 = vmul.f32 %v666, %v912
  %v940 = vmul.f32 %v667, %v912
  %v941 = vmul.f32 %v668, %v912
  %v942 = vmul.f32 %v669, %v912
  %v943 = vmul.f32 %v670, %v912
  %v944 = vmul.f32 %v671, %v912
  %v945 = vmul.f32 %v672, %v912
  %v946 = vmul.f32 %v673, %v912
  %v947 = vmul.f32 %v674, %v912
  %v948 = vmul.f32 %v675, %v912
  %v949 = vmul.f32 %v676, %v912
  %v950 = vmul.f32 %v677, %v912
  %v951 = vmul.f32 %v678, %v912
  %v952 = vmul.f32 %v679, %v912
  %v953 = vmul.f32 %v680, %v912
  %v954 = vmul.f32 %v681, %v912
  %v955 = vmul.f32 %v682, %v912
  %v956 = vmul.f32 %v683, %v912
  %v957 = vmul.f32 %v684, %v912
  %v958 = vmul.f32 %v685, %v912
  %v959 = vmul.f32 %v686, %v912
  %v960 = vmul.f32 %v687, %v912
  %v961 = vmul.f32 %v688, %v912
  %v962 = vmul.f32 %v689, %v912
  %v963 = vmul.f32 %v690, %v912
  %v964 = vmul.f32 %v691, %v912
  %v965 = vmul.f32 %v692, %v912
  %v966 = vmul.f32 %v693, %v912
  %v967 = vmul.f32 %v694, %v912
  %v968 = vmul.f32 %v695, %v912
  %v969 = vmul.f32 %v696, %v912
  %v970 = vmul.f32 %v697, %v912
  %v971 = vmul.f32 %v698, %v912
  %v972 = vmul.f32 %v699, %v912
  %v973 = vmul.f32 %v700, %v912
  %v974 = vmul.f32 %v701, %v912
  %v975 = vmul.f32 %v702, %v912
  %v976 = vmul.f32 %v703, %v912
  %v977 = vld [vmem:[%s3] sm:$0x1]
  %v979 = vperm.slane %v977, 0
  %v981 = vmul.f32 %v913, %v979
  %v982 = vmul.f32 %v914, %v979
  %v983 = vmul.f32 %v915, %v979
  %v984 = vmul.f32 %v916, %v979
  %v985 = vmul.f32 %v917, %v979
  %v986 = vmul.f32 %v918, %v979
  %v987 = vmul.f32 %v919, %v979
  %v988 = vmul.f32 %v920, %v979
  %v989 = vmul.f32 %v921, %v979
  %v990 = vmul.f32 %v922, %v979
  %v991 = vmul.f32 %v923, %v979
  %v992 = vmul.f32 %v924, %v979
  %v993 = vmul.f32 %v925, %v979
  %v994 = vmul.f32 %v926, %v979
  %v995 = vmul.f32 %v927, %v979
  %v996 = vmul.f32 %v928, %v979
  %v997 = vmul.f32 %v929, %v979
  %v998 = vmul.f32 %v930, %v979
  %v999 = vmul.f32 %v931, %v979
  %v1000 = vmul.f32 %v932, %v979
  %v1001 = vmul.f32 %v933, %v979
  %v1002 = vmul.f32 %v934, %v979
  %v1003 = vmul.f32 %v935, %v979
  %v1004 = vmul.f32 %v936, %v979
  %v1005 = vmul.f32 %v937, %v979
  %v1006 = vmul.f32 %v938, %v979
  %v1007 = vmul.f32 %v939, %v979
  %v1008 = vmul.f32 %v940, %v979
  %v1009 = vmul.f32 %v941, %v979
  %v1010 = vmul.f32 %v942, %v979
  %v1011 = vmul.f32 %v943, %v979
  %v1012 = vmul.f32 %v944, %v979
  %v1013 = vmul.f32 %v945, %v979
  %v1014 = vmul.f32 %v946, %v979
  %v1015 = vmul.f32 %v947, %v979
  %v1016 = vmul.f32 %v948, %v979
  %v1017 = vmul.f32 %v949, %v979
  %v1018 = vmul.f32 %v950, %v979
  %v1019 = vmul.f32 %v951, %v979
  %v1020 = vmul.f32 %v952, %v979
  %v1021 = vmul.f32 %v953, %v979
  %v1022 = vmul.f32 %v954, %v979
  %v1023 = vmul.f32 %v955, %v979
  %v1024 = vmul.f32 %v956, %v979
  %v1025 = vmul.f32 %v957, %v979
  %v1026 = vmul.f32 %v958, %v979
  %v1027 = vmul.f32 %v959, %v979
  %v1028 = vmul.f32 %v960, %v979
  %v1029 = vmul.f32 %v961, %v979
  %v1030 = vmul.f32 %v962, %v979
  %v1031 = vmul.f32 %v963, %v979
  %v1032 = vmul.f32 %v964, %v979
  %v1033 = vmul.f32 %v965, %v979
  %v1034 = vmul.f32 %v966, %v979
  %v1035 = vmul.f32 %v967, %v979
  %v1036 = vmul.f32 %v968, %v979
  %v1037 = vmul.f32 %v969, %v979
  %v1038 = vmul.f32 %v970, %v979
  %v1039 = vmul.f32 %v971, %v979
  %v1040 = vmul.f32 %v972, %v979
  %v1041 = vmul.f32 %v973, %v979
  %v1042 = vmul.f32 %v974, %v979
  %v1043 = vmul.f32 %v975, %v979
  %v1044 = vmul.f32 %v976, %v979
  %v1045 = vld [vmem:[%s4] sm:$0x1]
  %v1047 = vperm.slane %v1045, 0
  %v1049 = vadd.f32 %v981, %v1047
  %v1050 = vadd.f32 %v982, %v1047
  %v1051 = vadd.f32 %v983, %v1047
  %v1052 = vadd.f32 %v984, %v1047
  %v1053 = vadd.f32 %v985, %v1047
  %v1054 = vadd.f32 %v986, %v1047
  %v1055 = vadd.f32 %v987, %v1047
  %v1056 = vadd.f32 %v988, %v1047
  %v1057 = vadd.f32 %v989, %v1047
  %v1058 = vadd.f32 %v990, %v1047
  %v1059 = vadd.f32 %v991, %v1047
  %v1060 = vadd.f32 %v992, %v1047
  %v1061 = vadd.f32 %v993, %v1047
  %v1062 = vadd.f32 %v994, %v1047
  %v1063 = vadd.f32 %v995, %v1047
  %v1064 = vadd.f32 %v996, %v1047
  %v1065 = vadd.f32 %v997, %v1047
  %v1066 = vadd.f32 %v998, %v1047
  %v1067 = vadd.f32 %v999, %v1047
  %v1068 = vadd.f32 %v1000, %v1047
  %v1069 = vadd.f32 %v1001, %v1047
  %v1070 = vadd.f32 %v1002, %v1047
  %v1071 = vadd.f32 %v1003, %v1047
  %v1072 = vadd.f32 %v1004, %v1047
  %v1073 = vadd.f32 %v1005, %v1047
  %v1074 = vadd.f32 %v1006, %v1047
  %v1075 = vadd.f32 %v1007, %v1047
  %v1076 = vadd.f32 %v1008, %v1047
  %v1077 = vadd.f32 %v1009, %v1047
  %v1078 = vadd.f32 %v1010, %v1047
  %v1079 = vadd.f32 %v1011, %v1047
  %v1080 = vadd.f32 %v1012, %v1047
  %v1081 = vadd.f32 %v1013, %v1047
  %v1082 = vadd.f32 %v1014, %v1047
  %v1083 = vadd.f32 %v1015, %v1047
  %v1084 = vadd.f32 %v1016, %v1047
  %v1085 = vadd.f32 %v1017, %v1047
  %v1086 = vadd.f32 %v1018, %v1047
  %v1087 = vadd.f32 %v1019, %v1047
  %v1088 = vadd.f32 %v1020, %v1047
  %v1089 = vadd.f32 %v1021, %v1047
  %v1090 = vadd.f32 %v1022, %v1047
  %v1091 = vadd.f32 %v1023, %v1047
  %v1092 = vadd.f32 %v1024, %v1047
  %v1093 = vadd.f32 %v1025, %v1047
  %v1094 = vadd.f32 %v1026, %v1047
  %v1095 = vadd.f32 %v1027, %v1047
  %v1096 = vadd.f32 %v1028, %v1047
  %v1097 = vadd.f32 %v1029, %v1047
  %v1098 = vadd.f32 %v1030, %v1047
  %v1099 = vadd.f32 %v1031, %v1047
  %v1100 = vadd.f32 %v1032, %v1047
  %v1101 = vadd.f32 %v1033, %v1047
  %v1102 = vadd.f32 %v1034, %v1047
  %v1103 = vadd.f32 %v1035, %v1047
  %v1104 = vadd.f32 %v1036, %v1047
  %v1105 = vadd.f32 %v1037, %v1047
  %v1106 = vadd.f32 %v1038, %v1047
  %v1107 = vadd.f32 %v1039, %v1047
  %v1108 = vadd.f32 %v1040, %v1047
  %v1109 = vadd.f32 %v1041, %v1047
  %v1110 = vadd.f32 %v1042, %v1047
  %v1111 = vadd.f32 %v1043, %v1047
  %v1112 = vadd.f32 %v1044, %v1047
  %v1113 = vmax.f32 %v1049, 0.0
  %v1114 = vmax.f32 %v1050, 0.0
  %v1115 = vmax.f32 %v1051, 0.0
  %v1116 = vmax.f32 %v1052, 0.0
  %v1117 = vmax.f32 %v1053, 0.0
  %v1118 = vmax.f32 %v1054, 0.0
  %v1119 = vmax.f32 %v1055, 0.0
  %v1120 = vmax.f32 %v1056, 0.0
  %v1121 = vmax.f32 %v1057, 0.0
  %v1122 = vmax.f32 %v1058, 0.0
  %v1123 = vmax.f32 %v1059, 0.0
  %v1124 = vmax.f32 %v1060, 0.0
  %v1125 = vmax.f32 %v1061, 0.0
  %v1126 = vmax.f32 %v1062, 0.0
  %v1127 = vmax.f32 %v1063, 0.0
  %v1128 = vmax.f32 %v1064, 0.0
  %v1129 = vmax.f32 %v1065, 0.0
  %v1130 = vmax.f32 %v1066, 0.0
  %v1131 = vmax.f32 %v1067, 0.0
  %v1132 = vmax.f32 %v1068, 0.0
  %v1133 = vmax.f32 %v1069, 0.0
  %v1134 = vmax.f32 %v1070, 0.0
  %v1135 = vmax.f32 %v1071, 0.0
  %v1136 = vmax.f32 %v1072, 0.0
  %v1137 = vmax.f32 %v1073, 0.0
  %v1138 = vmax.f32 %v1074, 0.0
  %v1139 = vmax.f32 %v1075, 0.0
  %v1140 = vmax.f32 %v1076, 0.0
  %v1141 = vmax.f32 %v1077, 0.0
  %v1142 = vmax.f32 %v1078, 0.0
  %v1143 = vmax.f32 %v1079, 0.0
  %v1144 = vmax.f32 %v1080, 0.0
  %v1145 = vmax.f32 %v1081, 0.0
  %v1146 = vmax.f32 %v1082, 0.0
  %v1147 = vmax.f32 %v1083, 0.0
  %v1148 = vmax.f32 %v1084, 0.0
  %v1149 = vmax.f32 %v1085, 0.0
  %v1150 = vmax.f32 %v1086, 0.0
  %v1151 = vmax.f32 %v1087, 0.0
  %v1152 = vmax.f32 %v1088, 0.0
  %v1153 = vmax.f32 %v1089, 0.0
  %v1154 = vmax.f32 %v1090, 0.0
  %v1155 = vmax.f32 %v1091, 0.0
  %v1156 = vmax.f32 %v1092, 0.0
  %v1157 = vmax.f32 %v1093, 0.0
  %v1158 = vmax.f32 %v1094, 0.0
  %v1159 = vmax.f32 %v1095, 0.0
  %v1160 = vmax.f32 %v1096, 0.0
  %v1161 = vmax.f32 %v1097, 0.0
  %v1162 = vmax.f32 %v1098, 0.0
  %v1163 = vmax.f32 %v1099, 0.0
  %v1164 = vmax.f32 %v1100, 0.0
  %v1165 = vmax.f32 %v1101, 0.0
  %v1166 = vmax.f32 %v1102, 0.0
  %v1167 = vmax.f32 %v1103, 0.0
  %v1168 = vmax.f32 %v1104, 0.0
  %v1169 = vmax.f32 %v1105, 0.0
  %v1170 = vmax.f32 %v1106, 0.0
  %v1171 = vmax.f32 %v1107, 0.0
  %v1172 = vmax.f32 %v1108, 0.0
  %v1173 = vmax.f32 %v1109, 0.0
  %v1174 = vmax.f32 %v1110, 0.0
  %v1175 = vmax.f32 %v1111, 0.0
  %v1176 = vmax.f32 %v1112, 0.0
  %1177 = vst.msk [vmem:[%s5] sm:$0xff] %vm498, %v1113
  %1178 = vst.msk [vmem:[%s5 + $0x8] sm:$0xff] %vm498, %v1114
  %1179 = vst.msk [vmem:[%s5 + $0x10] sm:$0xff] %vm498, %v1115
  %1180 = vst.msk [vmem:[%s5 + $0x18] sm:$0xff] %vm498, %v1116
  %1181 = vst.msk [vmem:[%s5 + $0x20] sm:$0xff] %vm498, %v1117
  %1182 = vst.msk [vmem:[%s5 + $0x28] sm:$0xff] %vm498, %v1118
  %1183 = vst.msk [vmem:[%s5 + $0x30] sm:$0xff] %vm498, %v1119
  %1184 = vst.msk [vmem:[%s5 + $0x38] sm:$0xff] %vm498, %v1120
  %1185 = vst.msk [vmem:[%s5 + $0x40] sm:$0xff] %vm498, %v1121
  %1186 = vst.msk [vmem:[%s5 + $0x48] sm:$0xff] %vm498, %v1122
  %1187 = vst.msk [vmem:[%s5 + $0x50] sm:$0xff] %vm498, %v1123
  %1188 = vst.msk [vmem:[%s5 + $0x58] sm:$0xff] %vm498, %v1124
  %1189 = vst.msk [vmem:[%s5 + $0x60] sm:$0xff] %vm498, %v1125
  %1190 = vst.msk [vmem:[%s5 + $0x68] sm:$0xff] %vm498, %v1126
  %1191 = vst.msk [vmem:[%s5 + $0x70] sm:$0xff] %vm498, %v1127
  %1192 = vst.msk [vmem:[%s5 + $0x78] sm:$0xff] %vm498, %v1128
  %1193 = vst.msk [vmem:[%s5 + $0x80] sm:$0xff] %vm498, %v1129
  %1194 = vst.msk [vmem:[%s5 + $0x88] sm:$0xff] %vm498, %v1130
  %1195 = vst.msk [vmem:[%s5 + $0x90] sm:$0xff] %vm498, %v1131
  %1196 = vst.msk [vmem:[%s5 + $0x98] sm:$0xff] %vm498, %v1132
  %1197 = vst.msk [vmem:[%s5 + $0xa0] sm:$0xff] %vm498, %v1133
  %1198 = vst.msk [vmem:[%s5 + $0xa8] sm:$0xff] %vm498, %v1134
  %1199 = vst.msk [vmem:[%s5 + $0xb0] sm:$0xff] %vm498, %v1135
  %1200 = vst.msk [vmem:[%s5 + $0xb8] sm:$0xff] %vm498, %v1136
  %1201 = vst.msk [vmem:[%s5 + $0xc0] sm:$0xff] %vm498, %v1137
  %1202 = vst.msk [vmem:[%s5 + $0xc8] sm:$0xff] %vm498, %v1138
  %1203 = vst.msk [vmem:[%s5 + $0xd0] sm:$0xff] %vm498, %v1139
  %1204 = vst.msk [vmem:[%s5 + $0xd8] sm:$0xff] %vm498, %v1140
  %1205 = vst.msk [vmem:[%s5 + $0xe0] sm:$0xff] %vm498, %v1141
  %1206 = vst.msk [vmem:[%s5 + $0xe8] sm:$0xff] %vm498, %v1142
  %1207 = vst.msk [vmem:[%s5 + $0xf0] sm:$0xff] %vm498, %v1143
  %1208 = vst.msk [vmem:[%s5 + $0xf8] sm:$0xff] %vm498, %v1144
  %1209 = vst.msk [vmem:[%s5 + $0x100] sm:$0xff] %vm498, %v1145
  %1210 = vst.msk [vmem:[%s5 + $0x108] sm:$0xff] %vm498, %v1146
  %1211 = vst.msk [vmem:[%s5 + $0x110] sm:$0xff] %vm498, %v1147
  %1212 = vst.msk [vmem:[%s5 + $0x118] sm:$0xff] %vm498, %v1148
  %1213 = vst.msk [vmem:[%s5 + $0x120] sm:$0xff] %vm498, %v1149
  %1214 = vst.msk [vmem:[%s5 + $0x128] sm:$0xff] %vm498, %v1150
  %1215 = vst.msk [vmem:[%s5 + $0x130] sm:$0xff] %vm498, %v1151
  %1216 = vst.msk [vmem:[%s5 + $0x138] sm:$0xff] %vm498, %v1152
  %1217 = vst.msk [vmem:[%s5 + $0x140] sm:$0xff] %vm498, %v1153
  %1218 = vst.msk [vmem:[%s5 + $0x148] sm:$0xff] %vm498, %v1154
  %1219 = vst.msk [vmem:[%s5 + $0x150] sm:$0xff] %vm498, %v1155
  %1220 = vst.msk [vmem:[%s5 + $0x158] sm:$0xff] %vm498, %v1156
  %1221 = vst.msk [vmem:[%s5 + $0x160] sm:$0xff] %vm498, %v1157
  %1222 = vst.msk [vmem:[%s5 + $0x168] sm:$0xff] %vm498, %v1158
  %1223 = vst.msk [vmem:[%s5 + $0x170] sm:$0xff] %vm498, %v1159
  %1224 = vst.msk [vmem:[%s5 + $0x178] sm:$0xff] %vm498, %v1160
  %1225 = vst.msk [vmem:[%s5 + $0x180] sm:$0xff] %vm498, %v1161
  %1226 = vst.msk [vmem:[%s5 + $0x188] sm:$0xff] %vm498, %v1162
  %1227 = vst.msk [vmem:[%s5 + $0x190] sm:$0xff] %vm498, %v1163
  %1228 = vst.msk [vmem:[%s5 + $0x198] sm:$0xff] %vm498, %v1164
  %1229 = vst.msk [vmem:[%s5 + $0x1a0] sm:$0xff] %vm498, %v1165
  %1230 = vst.msk [vmem:[%s5 + $0x1a8] sm:$0xff] %vm498, %v1166
  %1231 = vst.msk [vmem:[%s5 + $0x1b0] sm:$0xff] %vm498, %v1167
  %1232 = vst.msk [vmem:[%s5 + $0x1b8] sm:$0xff] %vm498, %v1168
  %1233 = vst.msk [vmem:[%s5 + $0x1c0] sm:$0xff] %vm498, %v1169
  %1234 = vst.msk [vmem:[%s5 + $0x1c8] sm:$0xff] %vm498, %v1170
  %1235 = vst.msk [vmem:[%s5 + $0x1d0] sm:$0xff] %vm498, %v1171
  %1236 = vst.msk [vmem:[%s5 + $0x1d8] sm:$0xff] %vm498, %v1172
  %1237 = vst.msk [vmem:[%s5 + $0x1e0] sm:$0xff] %vm498, %v1173
  %1238 = vst.msk [vmem:[%s5 + $0x1e8] sm:$0xff] %vm498, %v1174
  %1239 = vst.msk [vmem:[%s5 + $0x1f0] sm:$0xff] %vm498, %v1175
  %1240 = vst.msk [vmem:[%s5 + $0x1f8] sm:$0xff] %vm498, %v1176
  // Predicated region
  $region22: #{encoder_forward_nchw.9} parent=0 // pred_check
    _
  $region23: #{encoder_forward_nchw.9} parent=0 // pred_check_branch
    %1242 = sbr.rel (0) target = $region25
  $region24: #{encoder_forward_nchw.9} parent=0 // pred_region
    _
  $region25: #{encoder_forward_nchw.9} parent=0 // pred_fallthru
    _
  // Predicated region
  $region26: #{encoder_forward_nchw.9} parent=0 // pred_check
    _
  $region27: #{encoder_forward_nchw.9} parent=0 // pred_check_branch
    %1244 = sbr.rel (0) target = $region29
  $region28: #{encoder_forward_nchw.9} parent=0 // pred_region
    _
  $region29: #{encoder_forward_nchw.9} parent=0 // pred_fallthru
    _

// kernel: encoder_forward_nchw.10
$region0: #{encoder_forward_nchw.10}
  #allocation0 [shape = 'u32[]', space=smem, size = 0x4, offset = 0x4, fixed_abs, tag = 'smem constant byte address 0x4 - core index']
  #allocation1 [shape = 'u32[72,128]{1,0:T(1,128)}', space=vmem, size = 0x9000, scoped, tag = 'internal scratch']
  %s0 = inlined_call_operand.vmem [shape: f32[512,72], index: 0, kind: input, shape index: {}]
  %s1 = inlined_call_operand.vmem [shape: f32[72,8], index: 1, kind: input, shape index: {}]
  %s2 = inlined_call_operand.vmem [shape: f32[1,8], index: 2, kind: input, shape index: {}]
  %s3 = inlined_call_operand.vmem [shape: f32[1,8], index: 3, kind: input, shape index: {}]
  %s4 = inlined_call_operand.vmem [shape: f32[1,8], index: 4, kind: input, shape index: {}]
  %s5 = inlined_call_operand.vmem [shape: f32[512,8], index: 5, kind: output, shape index: {}]
  %s6 = sld [smem:[#allocation0]]
  $region30: #{encoder_forward_nchw.10} parent=0
    _
  %s8 = ssub.s32 1, %s6
  %s9 = scalar_select 0, %s8, %s6
  // Predicated region
  $region2: #{encoder_forward_nchw.10} parent=0 // pred_check
    _
  $region3: #{encoder_forward_nchw.10} parent=0 // pred_check_branch
    %11 = sbr.rel (0) target = $region5
  $region4: #{encoder_forward_nchw.10} parent=0 // pred_region
    _
  $region5: #{encoder_forward_nchw.10} parent=0 // pred_fallthru
    _
  // Predicated region
  $region6: #{encoder_forward_nchw.10} parent=0 // pred_check
    _
  $region7: #{encoder_forward_nchw.10} parent=0 // pred_check_branch
    %13 = sbr.rel (0) target = $region9
  $region8: #{encoder_forward_nchw.10} parent=0 // pred_region
    _
  $region9: #{encoder_forward_nchw.10} parent=0 // pred_fallthru
    _
  // Predicated region
  $region10: #{encoder_forward_nchw.10} parent=0 // pred_check
    _
  $region11: #{encoder_forward_nchw.10} parent=0 // pred_check_branch
    %15 = sbr.rel (0) target = $region13
  $region12: #{encoder_forward_nchw.10} parent=0 // pred_region
    _
  $region13: #{encoder_forward_nchw.10} parent=0 // pred_fallthru
    _
  // Predicated region
  $region14: #{encoder_forward_nchw.10} parent=0 // pred_check
    _
  $region15: #{encoder_forward_nchw.10} parent=0 // pred_check_branch
    %17 = sbr.rel (0) target = $region17
  $region16: #{encoder_forward_nchw.10} parent=0 // pred_region
    _
  $region17: #{encoder_forward_nchw.10} parent=0 // pred_fallthru
    _
  // Predicated region
  $region18: #{encoder_forward_nchw.10} parent=0 // pred_check
    _
  $region19: #{encoder_forward_nchw.10} parent=0 // pred_check_branch
    %19 = sbr.rel (0) target = $region21
  $region20: #{encoder_forward_nchw.10} parent=0 // pred_region
    _
  $region21: #{encoder_forward_nchw.10} parent=0 // pred_fallthru
    _
  %v20 = vld [vmem:[%s0] sm:$0xff]
  %v21 = vld [vmem:[%s0 + $0x8] sm:$0xff]
  %v22 = vld [vmem:[%s0 + $0x10] sm:$0xff]
  %v23 = vld [vmem:[%s0 + $0x18] sm:$0xff]
  %v24 = vld [vmem:[%s0 + $0x20] sm:$0xff]
  %v25 = vld [vmem:[%s0 + $0x28] sm:$0xff]
  %v26 = vld [vmem:[%s0 + $0x30] sm:$0xff]
  %v27 = vld [vmem:[%s0 + $0x38] sm:$0xff]
  %v28 = vld [vmem:[%s0 + $0x40] sm:$0xff]
  %v29 = vld [vmem:[%s0 + $0x48] sm:$0xff]
  %v30 = vld [vmem:[%s0 + $0x50] sm:$0xff]
  %v31 = vld [vmem:[%s0 + $0x58] sm:$0xff]
  %v32 = vld [vmem:[%s0 + $0x60] sm:$0xff]
  %v33 = vld [vmem:[%s0 + $0x68] sm:$0xff]
  %v34 = vld [vmem:[%s0 + $0x70] sm:$0xff]
  %v35 = vld [vmem:[%s0 + $0x78] sm:$0xff]
  %v36 = vld [vmem:[%s0 + $0x80] sm:$0xff]
  %v37 = vld [vmem:[%s0 + $0x88] sm:$0xff]
  %v38 = vld [vmem:[%s0 + $0x90] sm:$0xff]
  %v39 = vld [vmem:[%s0 + $0x98] sm:$0xff]
  %v40 = vld [vmem:[%s0 + $0xa0] sm:$0xff]
  %v41 = vld [vmem:[%s0 + $0xa8] sm:$0xff]
  %v42 = vld [vmem:[%s0 + $0xb0] sm:$0xff]
  %v43 = vld [vmem:[%s0 + $0xb8] sm:$0xff]
  %v44 = vld [vmem:[%s0 + $0xc0] sm:$0xff]
  %v45 = vld [vmem:[%s0 + $0xc8] sm:$0xff]
  %v46 = vld [vmem:[%s0 + $0xd0] sm:$0xff]
  %v47 = vld [vmem:[%s0 + $0xd8] sm:$0xff]
  %v48 = vld [vmem:[%s0 + $0xe0] sm:$0xff]
  %v49 = vld [vmem:[%s0 + $0xe8] sm:$0xff]
  %v50 = vld [vmem:[%s0 + $0xf0] sm:$0xff]
  %v51 = vld [vmem:[%s0 + $0xf8] sm:$0xff]
  %v52 = vld [vmem:[%s0 + $0x100] sm:$0xff]
  %v53 = vld [vmem:[%s0 + $0x108] sm:$0xff]
  %v54 = vld [vmem:[%s0 + $0x110] sm:$0xff]
  %v55 = vld [vmem:[%s0 + $0x118] sm:$0xff]
  %v56 = vld [vmem:[%s0 + $0x120] sm:$0xff]
  %v57 = vld [vmem:[%s0 + $0x128] sm:$0xff]
  %v58 = vld [vmem:[%s0 + $0x130] sm:$0xff]
  %v59 = vld [vmem:[%s0 + $0x138] sm:$0xff]
  %v60 = vld [vmem:[%s0 + $0x140] sm:$0xff]
  %v61 = vld [vmem:[%s0 + $0x148] sm:$0xff]
  %v62 = vld [vmem:[%s0 + $0x150] sm:$0xff]
  %v63 = vld [vmem:[%s0 + $0x158] sm:$0xff]
  %v64 = vld [vmem:[%s0 + $0x160] sm:$0xff]
  %v65 = vld [vmem:[%s0 + $0x168] sm:$0xff]
  %v66 = vld [vmem:[%s0 + $0x170] sm:$0xff]
  %v67 = vld [vmem:[%s0 + $0x178] sm:$0xff]
  %v68 = vld [vmem:[%s0 + $0x180] sm:$0xff]
  %v69 = vld [vmem:[%s0 + $0x188] sm:$0xff]
  %v70 = vld [vmem:[%s0 + $0x190] sm:$0xff]
  %v71 = vld [vmem:[%s0 + $0x198] sm:$0xff]
  %v72 = vld [vmem:[%s0 + $0x1a0] sm:$0xff]
  %v73 = vld [vmem:[%s0 + $0x1a8] sm:$0xff]
  %v74 = vld [vmem:[%s0 + $0x1b0] sm:$0xff]
  %v75 = vld [vmem:[%s0 + $0x1b8] sm:$0xff]
  %v76 = vld [vmem:[%s0 + $0x1c0] sm:$0xff]
  %v77 = vld [vmem:[%s0 + $0x1c8] sm:$0xff]
  %v78 = vld [vmem:[%s0 + $0x1d0] sm:$0xff]
  %v79 = vld [vmem:[%s0 + $0x1d8] sm:$0xff]
  %v80 = vld [vmem:[%s0 + $0x1e0] sm:$0xff]
  %v81 = vld [vmem:[%s0 + $0x1e8] sm:$0xff]
  %v82 = vld [vmem:[%s0 + $0x1f0] sm:$0xff]
  %v83 = vld [vmem:[%s0 + $0x1f8] sm:$0xff]
  %v84 = vld [vmem:[%s1] sm:$0xff]
  %v85 = vld [vmem:[%s1 + $0x8] sm:$0xff]
  %v86 = vld [vmem:[%s1 + $0x10] sm:$0xff]
  %v87 = vld [vmem:[%s1 + $0x18] sm:$0xff]
  %v88 = vld [vmem:[%s1 + $0x20] sm:$0xff]
  %v89 = vld [vmem:[%s1 + $0x28] sm:$0xff]
  %v90 = vld [vmem:[%s1 + $0x30] sm:$0xff]
  %v91 = vld [vmem:[%s1 + $0x38] sm:$0xff]
  %v92 = vld [vmem:[%s1 + $0x40] sm:$0xff]
  %v93 = vld [vmem:[%s2] sm:$0x1]
  %v95 = vperm.slane %v93, 0
  %vm97 = vcmask 588800
  %v99 = vsel %vm97, %v20, 0
  %v102 = vsel %vm97, %v21, 0
  %v105 = vsel %vm97, %v22, 0
  %v108 = vsel %vm97, %v23, 0
  %v111 = vsel %vm97, %v24, 0
  %v114 = vsel %vm97, %v25, 0
  %v117 = vsel %vm97, %v26, 0
  %v120 = vsel %vm97, %v27, 0
  %v123 = vsel %vm97, %v28, 0
  %v126 = vsel %vm97, %v29, 0
  %v129 = vsel %vm97, %v30, 0
  %v132 = vsel %vm97, %v31, 0
  %v135 = vsel %vm97, %v32, 0
  %v138 = vsel %vm97, %v33, 0
  %v141 = vsel %vm97, %v34, 0
  %v144 = vsel %vm97, %v35, 0
  %v147 = vsel %vm97, %v36, 0
  %v150 = vsel %vm97, %v37, 0
  %v153 = vsel %vm97, %v38, 0
  %v156 = vsel %vm97, %v39, 0
  %v159 = vsel %vm97, %v40, 0
  %v162 = vsel %vm97, %v41, 0
  %v165 = vsel %vm97, %v42, 0
  %v168 = vsel %vm97, %v43, 0
  %v171 = vsel %vm97, %v44, 0
  %v174 = vsel %vm97, %v45, 0
  %v177 = vsel %vm97, %v46, 0
  %v180 = vsel %vm97, %v47, 0
  %v183 = vsel %vm97, %v48, 0
  %v186 = vsel %vm97, %v49, 0
  %v189 = vsel %vm97, %v50, 0
  %v192 = vsel %vm97, %v51, 0
  %v195 = vsel %vm97, %v52, 0
  %v198 = vsel %vm97, %v53, 0
  %v201 = vsel %vm97, %v54, 0
  %v204 = vsel %vm97, %v55, 0
  %v207 = vsel %vm97, %v56, 0
  %v210 = vsel %vm97, %v57, 0
  %v213 = vsel %vm97, %v58, 0
  %v216 = vsel %vm97, %v59, 0
  %v219 = vsel %vm97, %v60, 0
  %v222 = vsel %vm97, %v61, 0
  %v225 = vsel %vm97, %v62, 0
  %v228 = vsel %vm97, %v63, 0
  %v231 = vsel %vm97, %v64, 0
  %v234 = vsel %vm97, %v65, 0
  %v237 = vsel %vm97, %v66, 0
  %v240 = vsel %vm97, %v67, 0
  %v243 = vsel %vm97, %v68, 0
  %v246 = vsel %vm97, %v69, 0
  %v249 = vsel %vm97, %v70, 0
  %v252 = vsel %vm97, %v71, 0
  %v255 = vsel %vm97, %v72, 0
  %v258 = vsel %vm97, %v73, 0
  %v261 = vsel %vm97, %v74, 0
  %v264 = vsel %vm97, %v75, 0
  %v267 = vsel %vm97, %v76, 0
  %v270 = vsel %vm97, %v77, 0
  %v273 = vsel %vm97, %v78, 0
  %v276 = vsel %vm97, %v79, 0
  %v279 = vsel %vm97, %v80, 0
  %v282 = vsel %vm97, %v81, 0
  %v285 = vsel %vm97, %v82, 0
  %v288 = vsel %vm97, %v83, 0
  %290 = vmatpush.msra.mxu0 0.0
  %291 = vmatpush.msra.mxu0 0.0
  %292 = vmatpush.msra.mxu0 0.0
  %293 = vmatpush.msra.mxu0 0.0
  %294 = vmatpush.msra.mxu0 0.0
  %295 = vmatpush.msra.mxu0 0.0
  %296 = vmatpush.msra.mxu0 0.0
  %297 = vmatpush.msra.mxu0 %v92
  %298 = vmatpush.msra.mxu0 %v91
  %299 = vmatpush.msra.mxu0 %v90
  %300 = vmatpush.msra.mxu0 %v89
  %301 = vmatpush.msra.mxu0 %v88
  %302 = vmatpush.msra.mxu0 %v87
  %303 = vmatpush.msra.mxu0 %v86
  %304 = vmatpush.msra.mxu0 %v85
  %305 = vmatpush.msra.mxu0 %v84
  %306 = vmatmul.f32.gmra.mxu0 %v99
  %v307 = vpop.f32.mrf.mxu0
  %v308 = vadd.f32 %v95, %v307
  %309 = vmatmul.f32.gmra.mxu0 %v102
  %v310 = vpop.f32.mrf.mxu0
  %v311 = vadd.f32 %v95, %v310
  %312 = vmatmul.f32.gmra.mxu0 %v105
  %v313 = vpop.f32.mrf.mxu0
  %v314 = vadd.f32 %v95, %v313
  %315 = vmatmul.f32.gmra.mxu0 %v108
  %v316 = vpop.f32.mrf.mxu0
  %v317 = vadd.f32 %v95, %v316
  %318 = vmatmul.f32.gmra.mxu0 %v111
  %v319 = vpop.f32.mrf.mxu0
  %v320 = vadd.f32 %v95, %v319
  %321 = vmatmul.f32.gmra.mxu0 %v114
  %v322 = vpop.f32.mrf.mxu0
  %v323 = vadd.f32 %v95, %v322
  %324 = vmatmul.f32.gmra.mxu0 %v117
  %v325 = vpop.f32.mrf.mxu0
  %v326 = vadd.f32 %v95, %v325
  %327 = vmatmul.f32.gmra.mxu0 %v120
  %v328 = vpop.f32.mrf.mxu0
  %v329 = vadd.f32 %v95, %v328
  %330 = vmatmul.f32.gmra.mxu0 %v123
  %v331 = vpop.f32.mrf.mxu0
  %v332 = vadd.f32 %v95, %v331
  %333 = vmatmul.f32.gmra.mxu0 %v126
  %v334 = vpop.f32.mrf.mxu0
  %v335 = vadd.f32 %v95, %v334
  %336 = vmatmul.f32.gmra.mxu0 %v129
  %v337 = vpop.f32.mrf.mxu0
  %v338 = vadd.f32 %v95, %v337
  %339 = vmatmul.f32.gmra.mxu0 %v132
  %v340 = vpop.f32.mrf.mxu0
  %v341 = vadd.f32 %v95, %v340
  %342 = vmatmul.f32.gmra.mxu0 %v135
  %v343 = vpop.f32.mrf.mxu0
  %v344 = vadd.f32 %v95, %v343
  %345 = vmatmul.f32.gmra.mxu0 %v138
  %v346 = vpop.f32.mrf.mxu0
  %v347 = vadd.f32 %v95, %v346
  %348 = vmatmul.f32.gmra.mxu0 %v141
  %v349 = vpop.f32.mrf.mxu0
  %v350 = vadd.f32 %v95, %v349
  %351 = vmatmul.f32.gmra.mxu0 %v144
  %v352 = vpop.f32.mrf.mxu0
  %v353 = vadd.f32 %v95, %v352
  %354 = vmatmul.f32.gmra.mxu0 %v147
  %v355 = vpop.f32.mrf.mxu0
  %v356 = vadd.f32 %v95, %v355
  %357 = vmatmul.f32.gmra.mxu0 %v150
  %v358 = vpop.f32.mrf.mxu0
  %v359 = vadd.f32 %v95, %v358
  %360 = vmatmul.f32.gmra.mxu0 %v153
  %v361 = vpop.f32.mrf.mxu0
  %v362 = vadd.f32 %v95, %v361
  %363 = vmatmul.f32.gmra.mxu0 %v156
  %v364 = vpop.f32.mrf.mxu0
  %v365 = vadd.f32 %v95, %v364
  %366 = vmatmul.f32.gmra.mxu0 %v159
  %v367 = vpop.f32.mrf.mxu0
  %v368 = vadd.f32 %v95, %v367
  %369 = vmatmul.f32.gmra.mxu0 %v162
  %v370 = vpop.f32.mrf.mxu0
  %v371 = vadd.f32 %v95, %v370
  %372 = vmatmul.f32.gmra.mxu0 %v165
  %v373 = vpop.f32.mrf.mxu0
  %v374 = vadd.f32 %v95, %v373
  %375 = vmatmul.f32.gmra.mxu0 %v168
  %v376 = vpop.f32.mrf.mxu0
  %v377 = vadd.f32 %v95, %v376
  %378 = vmatmul.f32.gmra.mxu0 %v171
  %v379 = vpop.f32.mrf.mxu0
  %v380 = vadd.f32 %v95, %v379
  %381 = vmatmul.f32.gmra.mxu0 %v174
  %v382 = vpop.f32.mrf.mxu0
  %v383 = vadd.f32 %v95, %v382
  %384 = vmatmul.f32.gmra.mxu0 %v177
  %v385 = vpop.f32.mrf.mxu0
  %v386 = vadd.f32 %v95, %v385
  %387 = vmatmul.f32.gmra.mxu0 %v180
  %v388 = vpop.f32.mrf.mxu0
  %v389 = vadd.f32 %v95, %v388
  %390 = vmatmul.f32.gmra.mxu0 %v183
  %v391 = vpop.f32.mrf.mxu0
  %v392 = vadd.f32 %v95, %v391
  %393 = vmatmul.f32.gmra.mxu0 %v186
  %v394 = vpop.f32.mrf.mxu0
  %v395 = vadd.f32 %v95, %v394
  %396 = vmatmul.f32.gmra.mxu0 %v189
  %v397 = vpop.f32.mrf.mxu0
  %v398 = vadd.f32 %v95, %v397
  %399 = vmatmul.f32.gmra.mxu0 %v192
  %v400 = vpop.f32.mrf.mxu0
  %v401 = vadd.f32 %v95, %v400
  %402 = vmatmul.f32.gmra.mxu0 %v195
  %v403 = vpop.f32.mrf.mxu0
  %v404 = vadd.f32 %v95, %v403
  %405 = vmatmul.f32.gmra.mxu0 %v198
  %v406 = vpop.f32.mrf.mxu0
  %v407 = vadd.f32 %v95, %v406
  %408 = vmatmul.f32.gmra.mxu0 %v201
  %v409 = vpop.f32.mrf.mxu0
  %v410 = vadd.f32 %v95, %v409
  %411 = vmatmul.f32.gmra.mxu0 %v204
  %v412 = vpop.f32.mrf.mxu0
  %v413 = vadd.f32 %v95, %v412
  %414 = vmatmul.f32.gmra.mxu0 %v207
  %v415 = vpop.f32.mrf.mxu0
  %v416 = vadd.f32 %v95, %v415
  %417 = vmatmul.f32.gmra.mxu0 %v210
  %v418 = vpop.f32.mrf.mxu0
  %v419 = vadd.f32 %v95, %v418
  %420 = vmatmul.f32.gmra.mxu0 %v213
  %v421 = vpop.f32.mrf.mxu0
  %v422 = vadd.f32 %v95, %v421
  %423 = vmatmul.f32.gmra.mxu0 %v216
  %v424 = vpop.f32.mrf.mxu0
  %v425 = vadd.f32 %v95, %v424
  %426 = vmatmul.f32.gmra.mxu0 %v219
  %v427 = vpop.f32.mrf.mxu0
  %v428 = vadd.f32 %v95, %v427
  %429 = vmatmul.f32.gmra.mxu0 %v222
  %v430 = vpop.f32.mrf.mxu0
  %v431 = vadd.f32 %v95, %v430
  %432 = vmatmul.f32.gmra.mxu0 %v225
  %v433 = vpop.f32.mrf.mxu0
  %v434 = vadd.f32 %v95, %v433
  %435 = vmatmul.f32.gmra.mxu0 %v228
  %v436 = vpop.f32.mrf.mxu0
  %v437 = vadd.f32 %v95, %v436
  %438 = vmatmul.f32.gmra.mxu0 %v231
  %v439 = vpop.f32.mrf.mxu0
  %v440 = vadd.f32 %v95, %v439
  %441 = vmatmul.f32.gmra.mxu0 %v234
  %v442 = vpop.f32.mrf.mxu0
  %v443 = vadd.f32 %v95, %v442
  %444 = vmatmul.f32.gmra.mxu0 %v237
  %v445 = vpop.f32.mrf.mxu0
  %v446 = vadd.f32 %v95, %v445
  %447 = vmatmul.f32.gmra.mxu0 %v240
  %v448 = vpop.f32.mrf.mxu0
  %v449 = vadd.f32 %v95, %v448
  %450 = vmatmul.f32.gmra.mxu0 %v243
  %v451 = vpop.f32.mrf.mxu0
  %v452 = vadd.f32 %v95, %v451
  %453 = vmatmul.f32.gmra.mxu0 %v246
  %v454 = vpop.f32.mrf.mxu0
  %v455 = vadd.f32 %v95, %v454
  %456 = vmatmul.f32.gmra.mxu0 %v249
  %v457 = vpop.f32.mrf.mxu0
  %v458 = vadd.f32 %v95, %v457
  %459 = vmatmul.f32.gmra.mxu0 %v252
  %v460 = vpop.f32.mrf.mxu0
  %v461 = vadd.f32 %v95, %v460
  %462 = vmatmul.f32.gmra.mxu0 %v255
  %v463 = vpop.f32.mrf.mxu0
  %v464 = vadd.f32 %v95, %v463
  %465 = vmatmul.f32.gmra.mxu0 %v258
  %v466 = vpop.f32.mrf.mxu0
  %v467 = vadd.f32 %v95, %v466
  %468 = vmatmul.f32.gmra.mxu0 %v261
  %v469 = vpop.f32.mrf.mxu0
  %v470 = vadd.f32 %v95, %v469
  %471 = vmatmul.f32.gmra.mxu0 %v264
  %v472 = vpop.f32.mrf.mxu0
  %v473 = vadd.f32 %v95, %v472
  %474 = vmatmul.f32.gmra.mxu0 %v267
  %v475 = vpop.f32.mrf.mxu0
  %v476 = vadd.f32 %v95, %v475
  %477 = vmatmul.f32.gmra.mxu0 %v270
  %v478 = vpop.f32.mrf.mxu0
  %v479 = vadd.f32 %v95, %v478
  %480 = vmatmul.f32.gmra.mxu0 %v273
  %v481 = vpop.f32.mrf.mxu0
  %v482 = vadd.f32 %v95, %v481
  %483 = vmatmul.f32.gmra.mxu0 %v276
  %v484 = vpop.f32.mrf.mxu0
  %v485 = vadd.f32 %v95, %v484
  %486 = vmatmul.f32.gmra.mxu0 %v279
  %v487 = vpop.f32.mrf.mxu0
  %v488 = vadd.f32 %v95, %v487
  %489 = vmatmul.f32.gmra.mxu0 %v282
  %v490 = vpop.f32.mrf.mxu0
  %v491 = vadd.f32 %v95, %v490
  %492 = vmatmul.f32.gmra.mxu0 %v285
  %v493 = vpop.f32.mrf.mxu0
  %v494 = vadd.f32 %v95, %v493
  %495 = vmatmul.f32.gmra.mxu0 %v288
  %v496 = vpop.f32.mrf.mxu0
  %v497 = vadd.f32 %v95, %v496
  %498 = vdwg.mxu0
  %vm499 = vcmask 64512
  %v500 = vsel %vm499, %v308, 0.0
  %v501 = vsel %vm499, %v311, 0.0
  %v502 = vadd.f32 %v500, %v501
  %v503 = vsel %vm499, %v314, 0.0
  %v504 = vadd.f32 %v502, %v503
  %v505 = vsel %vm499, %v317, 0.0
  %v506 = vadd.f32 %v504, %v505
  %v507 = vsel %vm499, %v320, 0.0
  %v508 = vadd.f32 %v506, %v507
  %v509 = vsel %vm499, %v323, 0.0
  %v510 = vadd.f32 %v508, %v509
  %v511 = vsel %vm499, %v326, 0.0
  %v512 = vadd.f32 %v510, %v511
  %v513 = vsel %vm499, %v329, 0.0
  %v514 = vadd.f32 %v512, %v513
  %v515 = vsel %vm499, %v332, 0.0
  %v516 = vadd.f32 %v514, %v515
  %v517 = vsel %vm499, %v335, 0.0
  %v518 = vadd.f32 %v516, %v517
  %v519 = vsel %vm499, %v338, 0.0
  %v520 = vadd.f32 %v518, %v519
  %v521 = vsel %vm499, %v341, 0.0
  %v522 = vadd.f32 %v520, %v521
  %v523 = vsel %vm499, %v344, 0.0
  %v524 = vadd.f32 %v522, %v523
  %v525 = vsel %vm499, %v347, 0.0
  %v526 = vadd.f32 %v524, %v525
  %v527 = vsel %vm499, %v350, 0.0
  %v528 = vadd.f32 %v526, %v527
  %v529 = vsel %vm499, %v353, 0.0
  %v530 = vadd.f32 %v528, %v529
  %v531 = vsel %vm499, %v356, 0.0
  %v532 = vadd.f32 %v530, %v531
  %v533 = vsel %vm499, %v359, 0.0
  %v534 = vadd.f32 %v532, %v533
  %v535 = vsel %vm499, %v362, 0.0
  %v536 = vadd.f32 %v534, %v535
  %v537 = vsel %vm499, %v365, 0.0
  %v538 = vadd.f32 %v536, %v537
  %v539 = vsel %vm499, %v368, 0.0
  %v540 = vadd.f32 %v538, %v539
  %v541 = vsel %vm499, %v371, 0.0
  %v542 = vadd.f32 %v540, %v541
  %v543 = vsel %vm499, %v374, 0.0
  %v544 = vadd.f32 %v542, %v543
  %v545 = vsel %vm499, %v377, 0.0
  %v546 = vadd.f32 %v544, %v545
  %v547 = vsel %vm499, %v380, 0.0
  %v548 = vadd.f32 %v546, %v547
  %v549 = vsel %vm499, %v383, 0.0
  %v550 = vadd.f32 %v548, %v549
  %v551 = vsel %vm499, %v386, 0.0
  %v552 = vadd.f32 %v550, %v551
  %v553 = vsel %vm499, %v389, 0.0
  %v554 = vadd.f32 %v552, %v553
  %v555 = vsel %vm499, %v392, 0.0
  %v556 = vadd.f32 %v554, %v555
  %v557 = vsel %vm499, %v395, 0.0
  %v558 = vadd.f32 %v556, %v557
  %v559 = vsel %vm499, %v398, 0.0
  %v560 = vadd.f32 %v558, %v559
  %v561 = vsel %vm499, %v401, 0.0
  %v562 = vadd.f32 %v560, %v561
  %v563 = vsel %vm499, %v404, 0.0
  %v564 = vadd.f32 %v562, %v563
  %v565 = vsel %vm499, %v407, 0.0
  %v566 = vadd.f32 %v564, %v565
  %v567 = vsel %vm499, %v410, 0.0
  %v568 = vadd.f32 %v566, %v567
  %v569 = vsel %vm499, %v413, 0.0
  %v570 = vadd.f32 %v568, %v569
  %v571 = vsel %vm499, %v416, 0.0
  %v572 = vadd.f32 %v570, %v571
  %v573 = vsel %vm499, %v419, 0.0
  %v574 = vadd.f32 %v572, %v573
  %v575 = vsel %vm499, %v422, 0.0
  %v576 = vadd.f32 %v574, %v575
  %v577 = vsel %vm499, %v425, 0.0
  %v578 = vadd.f32 %v576, %v577
  %v579 = vsel %vm499, %v428, 0.0
  %v580 = vadd.f32 %v578, %v579
  %v581 = vsel %vm499, %v431, 0.0
  %v582 = vadd.f32 %v580, %v581
  %v583 = vsel %vm499, %v434, 0.0
  %v584 = vadd.f32 %v582, %v583
  %v585 = vsel %vm499, %v437, 0.0
  %v586 = vadd.f32 %v584, %v585
  %v587 = vsel %vm499, %v440, 0.0
  %v588 = vadd.f32 %v586, %v587
  %v589 = vsel %vm499, %v443, 0.0
  %v590 = vadd.f32 %v588, %v589
  %v591 = vsel %vm499, %v446, 0.0
  %v592 = vadd.f32 %v590, %v591
  %v593 = vsel %vm499, %v449, 0.0
  %v594 = vadd.f32 %v592, %v593
  %v595 = vsel %vm499, %v452, 0.0
  %v596 = vadd.f32 %v594, %v595
  %v597 = vsel %vm499, %v455, 0.0
  %v598 = vadd.f32 %v596, %v597
  %v599 = vsel %vm499, %v458, 0.0
  %v600 = vadd.f32 %v598, %v599
  %v601 = vsel %vm499, %v461, 0.0
  %v602 = vadd.f32 %v600, %v601
  %v603 = vsel %vm499, %v464, 0.0
  %v604 = vadd.f32 %v602, %v603
  %v605 = vsel %vm499, %v467, 0.0
  %v606 = vadd.f32 %v604, %v605
  %v607 = vsel %vm499, %v470, 0.0
  %v608 = vadd.f32 %v606, %v607
  %v609 = vsel %vm499, %v473, 0.0
  %v610 = vadd.f32 %v608, %v609
  %v611 = vsel %vm499, %v476, 0.0
  %v612 = vadd.f32 %v610, %v611
  %v613 = vsel %vm499, %v479, 0.0
  %v614 = vadd.f32 %v612, %v613
  %v615 = vsel %vm499, %v482, 0.0
  %v616 = vadd.f32 %v614, %v615
  %v617 = vsel %vm499, %v485, 0.0
  %v618 = vadd.f32 %v616, %v617
  %v619 = vsel %vm499, %v488, 0.0
  %v620 = vadd.f32 %v618, %v619
  %v621 = vsel %vm499, %v491, 0.0
  %v622 = vadd.f32 %v620, %v621
  %v623 = vsel %vm499, %v494, 0.0
  %v624 = vadd.f32 %v622, %v623
  %v625 = vsel %vm499, %v497, 0.0
  %v626 = vadd.f32 %v624, %v625
  %v627 = vrot.slane %v626, 4
  %v628 = vadd.f32 %v626, %v627
  %v629 = vrot.slane %v628, 2
  %v630 = vadd.f32 %v628, %v629
  %v631 = vrot.slane %v630, 1
  %v632 = vadd.f32 %v630, %v631
  %v633 = vrcp.pop 512.0
  %v634 = vmul.f32 512.0, %v633
  %v635 = vsub.f32 1.0, %v634
  %v636 = vmul.f32 %v633, %v635
  %v637 = vadd.f32 %v633, %v636
  %vm638 = vweird.f32 %v633
  %v639 = vsel %vm638, %v633, %v637
  %v640 = vmul.f32 %v632, %v639
  %v641 = vsub.f32 %v308, %v640
  %v642 = vsub.f32 %v311, %v640
  %v643 = vsub.f32 %v314, %v640
  %v644 = vsub.f32 %v317, %v640
  %v645 = vsub.f32 %v320, %v640
  %v646 = vsub.f32 %v323, %v640
  %v647 = vsub.f32 %v326, %v640
  %v648 = vsub.f32 %v329, %v640
  %v649 = vsub.f32 %v332, %v640
  %v650 = vsub.f32 %v335, %v640
  %v651 = vsub.f32 %v338, %v640
  %v652 = vsub.f32 %v341, %v640
  %v653 = vsub.f32 %v344, %v640
  %v654 = vsub.f32 %v347, %v640
  %v655 = vsub.f32 %v350, %v640
  %v656 = vsub.f32 %v353, %v640
  %v657 = vsub.f32 %v356, %v640
  %v658 = vsub.f32 %v359, %v640
  %v659 = vsub.f32 %v362, %v640
  %v660 = vsub.f32 %v365, %v640
  %v661 = vsub.f32 %v368, %v640
  %v662 = vsub.f32 %v371, %v640
  %v663 = vsub.f32 %v374, %v640
  %v664 = vsub.f32 %v377, %v640
  %v665 = vsub.f32 %v380, %v640
  %v666 = vsub.f32 %v383, %v640
  %v667 = vsub.f32 %v386, %v640
  %v668 = vsub.f32 %v389, %v640
  %v669 = vsub.f32 %v392, %v640
  %v670 = vsub.f32 %v395, %v640
  %v671 = vsub.f32 %v398, %v640
  %v672 = vsub.f32 %v401, %v640
  %v673 = vsub.f32 %v404, %v640
  %v674 = vsub.f32 %v407, %v640
  %v675 = vsub.f32 %v410, %v640
  %v676 = vsub.f32 %v413, %v640
  %v677 = vsub.f32 %v416, %v640
  %v678 = vsub.f32 %v419, %v640
  %v679 = vsub.f32 %v422, %v640
  %v680 = vsub.f32 %v425, %v640
  %v681 = vsub.f32 %v428, %v640
  %v682 = vsub.f32 %v431, %v640
  %v683 = vsub.f32 %v434, %v640
  %v684 = vsub.f32 %v437, %v640
  %v685 = vsub.f32 %v440, %v640
  %v686 = vsub.f32 %v443, %v640
  %v687 = vsub.f32 %v446, %v640
  %v688 = vsub.f32 %v449, %v640
  %v689 = vsub.f32 %v452, %v640
  %v690 = vsub.f32 %v455, %v640
  %v691 = vsub.f32 %v458, %v640
  %v692 = vsub.f32 %v461, %v640
  %v693 = vsub.f32 %v464, %v640
  %v694 = vsub.f32 %v467, %v640
  %v695 = vsub.f32 %v470, %v640
  %v696 = vsub.f32 %v473, %v640
  %v697 = vsub.f32 %v476, %v640
  %v698 = vsub.f32 %v479, %v640
  %v699 = vsub.f32 %v482, %v640
  %v700 = vsub.f32 %v485, %v640
  %v701 = vsub.f32 %v488, %v640
  %v702 = vsub.f32 %v491, %v640
  %v703 = vsub.f32 %v494, %v640
  %v704 = vsub.f32 %v497, %v640
  %v705 = vmul.f32 %v641, %v641
  %v706 = vmul.f32 %v642, %v642
  %v707 = vmul.f32 %v643, %v643
  %v708 = vmul.f32 %v644, %v644
  %v709 = vmul.f32 %v645, %v645
  %v710 = vmul.f32 %v646, %v646
  %v711 = vmul.f32 %v647, %v647
  %v712 = vmul.f32 %v648, %v648
  %v713 = vmul.f32 %v649, %v649
  %v714 = vmul.f32 %v650, %v650
  %v715 = vmul.f32 %v651, %v651
  %v716 = vmul.f32 %v652, %v652
  %v717 = vmul.f32 %v653, %v653
  %v718 = vmul.f32 %v654, %v654
  %v719 = vmul.f32 %v655, %v655
  %v720 = vmul.f32 %v656, %v656
  %v721 = vmul.f32 %v657, %v657
  %v722 = vmul.f32 %v658, %v658
  %v723 = vmul.f32 %v659, %v659
  %v724 = vmul.f32 %v660, %v660
  %v725 = vmul.f32 %v661, %v661
  %v726 = vmul.f32 %v662, %v662
  %v727 = vmul.f32 %v663, %v663
  %v728 = vmul.f32 %v664, %v664
  %v729 = vmul.f32 %v665, %v665
  %v730 = vmul.f32 %v666, %v666
  %v731 = vmul.f32 %v667, %v667
  %v732 = vmul.f32 %v668, %v668
  %v733 = vmul.f32 %v669, %v669
  %v734 = vmul.f32 %v670, %v670
  %v735 = vmul.f32 %v671, %v671
  %v736 = vmul.f32 %v672, %v672
  %v737 = vmul.f32 %v673, %v673
  %v738 = vmul.f32 %v674, %v674
  %v739 = vmul.f32 %v675, %v675
  %v740 = vmul.f32 %v676, %v676
  %v741 = vmul.f32 %v677, %v677
  %v742 = vmul.f32 %v678, %v678
  %v743 = vmul.f32 %v679, %v679
  %v744 = vmul.f32 %v680, %v680
  %v745 = vmul.f32 %v681, %v681
  %v746 = vmul.f32 %v682, %v682
  %v747 = vmul.f32 %v683, %v683
  %v748 = vmul.f32 %v684, %v684
  %v749 = vmul.f32 %v685, %v685
  %v750 = vmul.f32 %v686, %v686
  %v751 = vmul.f32 %v687, %v687
  %v752 = vmul.f32 %v688, %v688
  %v753 = vmul.f32 %v689, %v689
  %v754 = vmul.f32 %v690, %v690
  %v755 = vmul.f32 %v691, %v691
  %v756 = vmul.f32 %v692, %v692
  %v757 = vmul.f32 %v693, %v693
  %v758 = vmul.f32 %v694, %v694
  %v759 = vmul.f32 %v695, %v695
  %v760 = vmul.f32 %v696, %v696
  %v761 = vmul.f32 %v697, %v697
  %v762 = vmul.f32 %v698, %v698
  %v763 = vmul.f32 %v699, %v699
  %v764 = vmul.f32 %v700, %v700
  %v765 = vmul.f32 %v701, %v701
  %v766 = vmul.f32 %v702, %v702
  %v767 = vmul.f32 %v703, %v703
  %v768 = vmul.f32 %v704, %v704
  %v769 = vsel %vm499, %v705, 0.0
  %v770 = vsel %vm499, %v706, 0.0
  %v771 = vadd.f32 %v769, %v770
  %v772 = vsel %vm499, %v707, 0.0
  %v773 = vadd.f32 %v771, %v772
  %v774 = vsel %vm499, %v708, 0.0
  %v775 = vadd.f32 %v773, %v774
  %v776 = vsel %vm499, %v709, 0.0
  %v777 = vadd.f32 %v775, %v776
  %v778 = vsel %vm499, %v710, 0.0
  %v779 = vadd.f32 %v777, %v778
  %v780 = vsel %vm499, %v711, 0.0
  %v781 = vadd.f32 %v779, %v780
  %v782 = vsel %vm499, %v712, 0.0
  %v783 = vadd.f32 %v781, %v782
  %v784 = vsel %vm499, %v713, 0.0
  %v785 = vadd.f32 %v783, %v784
  %v786 = vsel %vm499, %v714, 0.0
  %v787 = vadd.f32 %v785, %v786
  %v788 = vsel %vm499, %v715, 0.0
  %v789 = vadd.f32 %v787, %v788
  %v790 = vsel %vm499, %v716, 0.0
  %v791 = vadd.f32 %v789, %v790
  %v792 = vsel %vm499, %v717, 0.0
  %v793 = vadd.f32 %v791, %v792
  %v794 = vsel %vm499, %v718, 0.0
  %v795 = vadd.f32 %v793, %v794
  %v796 = vsel %vm499, %v719, 0.0
  %v797 = vadd.f32 %v795, %v796
  %v798 = vsel %vm499, %v720, 0.0
  %v799 = vadd.f32 %v797, %v798
  %v800 = vsel %vm499, %v721, 0.0
  %v801 = vadd.f32 %v799, %v800
  %v802 = vsel %vm499, %v722, 0.0
  %v803 = vadd.f32 %v801, %v802
  %v804 = vsel %vm499, %v723, 0.0
  %v805 = vadd.f32 %v803, %v804
  %v806 = vsel %vm499, %v724, 0.0
  %v807 = vadd.f32 %v805, %v806
  %v808 = vsel %vm499, %v725, 0.0
  %v809 = vadd.f32 %v807, %v808
  %v810 = vsel %vm499, %v726, 0.0
  %v811 = vadd.f32 %v809, %v810
  %v812 = vsel %vm499, %v727, 0.0
  %v813 = vadd.f32 %v811, %v812
  %v814 = vsel %vm499, %v728, 0.0
  %v815 = vadd.f32 %v813, %v814
  %v816 = vsel %vm499, %v729, 0.0
  %v817 = vadd.f32 %v815, %v816
  %v818 = vsel %vm499, %v730, 0.0
  %v819 = vadd.f32 %v817, %v818
  %v820 = vsel %vm499, %v731, 0.0
  %v821 = vadd.f32 %v819, %v820
  %v822 = vsel %vm499, %v732, 0.0
  %v823 = vadd.f32 %v821, %v822
  %v824 = vsel %vm499, %v733, 0.0
  %v825 = vadd.f32 %v823, %v824
  %v826 = vsel %vm499, %v734, 0.0
  %v827 = vadd.f32 %v825, %v826
  %v828 = vsel %vm499, %v735, 0.0
  %v829 = vadd.f32 %v827, %v828
  %v830 = vsel %vm499, %v736, 0.0
  %v831 = vadd.f32 %v829, %v830
  %v832 = vsel %vm499, %v737, 0.0
  %v833 = vadd.f32 %v831, %v832
  %v834 = vsel %vm499, %v738, 0.0
  %v835 = vadd.f32 %v833, %v834
  %v836 = vsel %vm499, %v739, 0.0
  %v837 = vadd.f32 %v835, %v836
  %v838 = vsel %vm499, %v740, 0.0
  %v839 = vadd.f32 %v837, %v838
  %v840 = vsel %vm499, %v741, 0.0
  %v841 = vadd.f32 %v839, %v840
  %v842 = vsel %vm499, %v742, 0.0
  %v843 = vadd.f32 %v841, %v842
  %v844 = vsel %vm499, %v743, 0.0
  %v845 = vadd.f32 %v843, %v844
  %v846 = vsel %vm499, %v744, 0.0
  %v847 = vadd.f32 %v845, %v846
  %v848 = vsel %vm499, %v745, 0.0
  %v849 = vadd.f32 %v847, %v848
  %v850 = vsel %vm499, %v746, 0.0
  %v851 = vadd.f32 %v849, %v850
  %v852 = vsel %vm499, %v747, 0.0
  %v853 = vadd.f32 %v851, %v852
  %v854 = vsel %vm499, %v748, 0.0
  %v855 = vadd.f32 %v853, %v854
  %v856 = vsel %vm499, %v749, 0.0
  %v857 = vadd.f32 %v855, %v856
  %v858 = vsel %vm499, %v750, 0.0
  %v859 = vadd.f32 %v857, %v858
  %v860 = vsel %vm499, %v751, 0.0
  %v861 = vadd.f32 %v859, %v860
  %v862 = vsel %vm499, %v752, 0.0
  %v863 = vadd.f32 %v861, %v862
  %v864 = vsel %vm499, %v753, 0.0
  %v865 = vadd.f32 %v863, %v864
  %v866 = vsel %vm499, %v754, 0.0
  %v867 = vadd.f32 %v865, %v866
  %v868 = vsel %vm499, %v755, 0.0
  %v869 = vadd.f32 %v867, %v868
  %v870 = vsel %vm499, %v756, 0.0
  %v871 = vadd.f32 %v869, %v870
  %v872 = vsel %vm499, %v757, 0.0
  %v873 = vadd.f32 %v871, %v872
  %v874 = vsel %vm499, %v758, 0.0
  %v875 = vadd.f32 %v873, %v874
  %v876 = vsel %vm499, %v759, 0.0
  %v877 = vadd.f32 %v875, %v876
  %v878 = vsel %vm499, %v760, 0.0
  %v879 = vadd.f32 %v877, %v878
  %v880 = vsel %vm499, %v761, 0.0
  %v881 = vadd.f32 %v879, %v880
  %v882 = vsel %vm499, %v762, 0.0
  %v883 = vadd.f32 %v881, %v882
  %v884 = vsel %vm499, %v763, 0.0
  %v885 = vadd.f32 %v883, %v884
  %v886 = vsel %vm499, %v764, 0.0
  %v887 = vadd.f32 %v885, %v886
  %v888 = vsel %vm499, %v765, 0.0
  %v889 = vadd.f32 %v887, %v888
  %v890 = vsel %vm499, %v766, 0.0
  %v891 = vadd.f32 %v889, %v890
  %v892 = vsel %vm499, %v767, 0.0
  %v893 = vadd.f32 %v891, %v892
  %v894 = vsel %vm499, %v768, 0.0
  %v895 = vadd.f32 %v893, %v894
  %v896 = vrot.slane %v895, 4
  %v897 = vadd.f32 %v895, %v896
  %v898 = vrot.slane %v897, 2
  %v899 = vadd.f32 %v897, %v898
  %v900 = vrot.slane %v899, 1
  %v901 = vadd.f32 %v899, %v900
  %v902 = vmul.f32 %v901, %v639
  %v903 = vadd.f32 %v902, 1e-05
  %v904 = vrsqrt.pop %v903
  %v905 = vmul.f32 %v904, %v903
  %v906 = vmul.f32 %v905, %v904
  %v907 = vmul.f32 0.5, %v906
  %v908 = vsub.f32 1.5, %v907
  %v909 = vmul.f32 %v904, %v908
  %vm910 = vweird.f32 %v903
  %vm911 = vweird.f32 %v904
  %vm912 = vmor %vm910, %vm911
  %v913 = vsel %vm912, %v904, %v909
  %v914 = vmul.f32 %v641, %v913
  %v915 = vmul.f32 %v642, %v913
  %v916 = vmul.f32 %v643, %v913
  %v917 = vmul.f32 %v644, %v913
  %v918 = vmul.f32 %v645, %v913
  %v919 = vmul.f32 %v646, %v913
  %v920 = vmul.f32 %v647, %v913
  %v921 = vmul.f32 %v648, %v913
  %v922 = vmul.f32 %v649, %v913
  %v923 = vmul.f32 %v650, %v913
  %v924 = vmul.f32 %v651, %v913
  %v925 = vmul.f32 %v652, %v913
  %v926 = vmul.f32 %v653, %v913
  %v927 = vmul.f32 %v654, %v913
  %v928 = vmul.f32 %v655, %v913
  %v929 = vmul.f32 %v656, %v913
  %v930 = vmul.f32 %v657, %v913
  %v931 = vmul.f32 %v658, %v913
  %v932 = vmul.f32 %v659, %v913
  %v933 = vmul.f32 %v660, %v913
  %v934 = vmul.f32 %v661, %v913
  %v935 = vmul.f32 %v662, %v913
  %v936 = vmul.f32 %v663, %v913
  %v937 = vmul.f32 %v664, %v913
  %v938 = vmul.f32 %v665, %v913
  %v939 = vmul.f32 %v666, %v913
  %v940 = vmul.f32 %v667, %v913
  %v941 = vmul.f32 %v668, %v913
  %v942 = vmul.f32 %v669, %v913
  %v943 = vmul.f32 %v670, %v913
  %v944 = vmul.f32 %v671, %v913
  %v945 = vmul.f32 %v672, %v913
  %v946 = vmul.f32 %v673, %v913
  %v947 = vmul.f32 %v674, %v913
  %v948 = vmul.f32 %v675, %v913
  %v949 = vmul.f32 %v676, %v913
  %v950 = vmul.f32 %v677, %v913
  %v951 = vmul.f32 %v678, %v913
  %v952 = vmul.f32 %v679, %v913
  %v953 = vmul.f32 %v680, %v913
  %v954 = vmul.f32 %v681, %v913
  %v955 = vmul.f32 %v682, %v913
  %v956 = vmul.f32 %v683, %v913
  %v957 = vmul.f32 %v684, %v913
  %v958 = vmul.f32 %v685, %v913
  %v959 = vmul.f32 %v686, %v913
  %v960 = vmul.f32 %v687, %v913
  %v961 = vmul.f32 %v688, %v913
  %v962 = vmul.f32 %v689, %v913
  %v963 = vmul.f32 %v690, %v913
  %v964 = vmul.f32 %v691, %v913
  %v965 = vmul.f32 %v692, %v913
  %v966 = vmul.f32 %v693, %v913
  %v967 = vmul.f32 %v694, %v913
  %v968 = vmul.f32 %v695, %v913
  %v969 = vmul.f32 %v696, %v913
  %v970 = vmul.f32 %v697, %v913
  %v971 = vmul.f32 %v698, %v913
  %v972 = vmul.f32 %v699, %v913
  %v973 = vmul.f32 %v700, %v913
  %v974 = vmul.f32 %v701, %v913
  %v975 = vmul.f32 %v702, %v913
  %v976 = vmul.f32 %v703, %v913
  %v977 = vmul.f32 %v704, %v913
  %v978 = vld [vmem:[%s3] sm:$0x1]
  %v980 = vperm.slane %v978, 0
  %v982 = vmul.f32 %v914, %v980
  %v983 = vmul.f32 %v915, %v980
  %v984 = vmul.f32 %v916, %v980
  %v985 = vmul.f32 %v917, %v980
  %v986 = vmul.f32 %v918, %v980
  %v987 = vmul.f32 %v919, %v980
  %v988 = vmul.f32 %v920, %v980
  %v989 = vmul.f32 %v921, %v980
  %v990 = vmul.f32 %v922, %v980
  %v991 = vmul.f32 %v923, %v980
  %v992 = vmul.f32 %v924, %v980
  %v993 = vmul.f32 %v925, %v980
  %v994 = vmul.f32 %v926, %v980
  %v995 = vmul.f32 %v927, %v980
  %v996 = vmul.f32 %v928, %v980
  %v997 = vmul.f32 %v929, %v980
  %v998 = vmul.f32 %v930, %v980
  %v999 = vmul.f32 %v931, %v980
  %v1000 = vmul.f32 %v932, %v980
  %v1001 = vmul.f32 %v933, %v980
  %v1002 = vmul.f32 %v934, %v980
  %v1003 = vmul.f32 %v935, %v980
  %v1004 = vmul.f32 %v936, %v980
  %v1005 = vmul.f32 %v937, %v980
  %v1006 = vmul.f32 %v938, %v980
  %v1007 = vmul.f32 %v939, %v980
  %v1008 = vmul.f32 %v940, %v980
  %v1009 = vmul.f32 %v941, %v980
  %v1010 = vmul.f32 %v942, %v980
  %v1011 = vmul.f32 %v943, %v980
  %v1012 = vmul.f32 %v944, %v980
  %v1013 = vmul.f32 %v945, %v980
  %v1014 = vmul.f32 %v946, %v980
  %v1015 = vmul.f32 %v947, %v980
  %v1016 = vmul.f32 %v948, %v980
  %v1017 = vmul.f32 %v949, %v980
  %v1018 = vmul.f32 %v950, %v980
  %v1019 = vmul.f32 %v951, %v980
  %v1020 = vmul.f32 %v952, %v980
  %v1021 = vmul.f32 %v953, %v980
  %v1022 = vmul.f32 %v954, %v980
  %v1023 = vmul.f32 %v955, %v980
  %v1024 = vmul.f32 %v956, %v980
  %v1025 = vmul.f32 %v957, %v980
  %v1026 = vmul.f32 %v958, %v980
  %v1027 = vmul.f32 %v959, %v980
  %v1028 = vmul.f32 %v960, %v980
  %v1029 = vmul.f32 %v961, %v980
  %v1030 = vmul.f32 %v962, %v980
  %v1031 = vmul.f32 %v963, %v980
  %v1032 = vmul.f32 %v964, %v980
  %v1033 = vmul.f32 %v965, %v980
  %v1034 = vmul.f32 %v966, %v980
  %v1035 = vmul.f32 %v967, %v980
  %v1036 = vmul.f32 %v968, %v980
  %v1037 = vmul.f32 %v969, %v980
  %v1038 = vmul.f32 %v970, %v980
  %v1039 = vmul.f32 %v971, %v980
  %v1040 = vmul.f32 %v972, %v980
  %v1041 = vmul.f32 %v973, %v980
  %v1042 = vmul.f32 %v974, %v980
  %v1043 = vmul.f32 %v975, %v980
  %v1044 = vmul.f32 %v976, %v980
  %v1045 = vmul.f32 %v977, %v980
  %v1046 = vld [vmem:[%s4] sm:$0x1]
  %v1048 = vperm.slane %v1046, 0
  %v1050 = vadd.f32 %v982, %v1048
  %v1051 = vadd.f32 %v983, %v1048
  %v1052 = vadd.f32 %v984, %v1048
  %v1053 = vadd.f32 %v985, %v1048
  %v1054 = vadd.f32 %v986, %v1048
  %v1055 = vadd.f32 %v987, %v1048
  %v1056 = vadd.f32 %v988, %v1048
  %v1057 = vadd.f32 %v989, %v1048
  %v1058 = vadd.f32 %v990, %v1048
  %v1059 = vadd.f32 %v991, %v1048
  %v1060 = vadd.f32 %v992, %v1048
  %v1061 = vadd.f32 %v993, %v1048
  %v1062 = vadd.f32 %v994, %v1048
  %v1063 = vadd.f32 %v995, %v1048
  %v1064 = vadd.f32 %v996, %v1048
  %v1065 = vadd.f32 %v997, %v1048
  %v1066 = vadd.f32 %v998, %v1048
  %v1067 = vadd.f32 %v999, %v1048
  %v1068 = vadd.f32 %v1000, %v1048
  %v1069 = vadd.f32 %v1001, %v1048
  %v1070 = vadd.f32 %v1002, %v1048
  %v1071 = vadd.f32 %v1003, %v1048
  %v1072 = vadd.f32 %v1004, %v1048
  %v1073 = vadd.f32 %v1005, %v1048
  %v1074 = vadd.f32 %v1006, %v1048
  %v1075 = vadd.f32 %v1007, %v1048
  %v1076 = vadd.f32 %v1008, %v1048
  %v1077 = vadd.f32 %v1009, %v1048
  %v1078 = vadd.f32 %v1010, %v1048
  %v1079 = vadd.f32 %v1011, %v1048
  %v1080 = vadd.f32 %v1012, %v1048
  %v1081 = vadd.f32 %v1013, %v1048
  %v1082 = vadd.f32 %v1014, %v1048
  %v1083 = vadd.f32 %v1015, %v1048
  %v1084 = vadd.f32 %v1016, %v1048
  %v1085 = vadd.f32 %v1017, %v1048
  %v1086 = vadd.f32 %v1018, %v1048
  %v1087 = vadd.f32 %v1019, %v1048
  %v1088 = vadd.f32 %v1020, %v1048
  %v1089 = vadd.f32 %v1021, %v1048
  %v1090 = vadd.f32 %v1022, %v1048
  %v1091 = vadd.f32 %v1023, %v1048
  %v1092 = vadd.f32 %v1024, %v1048
  %v1093 = vadd.f32 %v1025, %v1048
  %v1094 = vadd.f32 %v1026, %v1048
  %v1095 = vadd.f32 %v1027, %v1048
  %v1096 = vadd.f32 %v1028, %v1048
  %v1097 = vadd.f32 %v1029, %v1048
  %v1098 = vadd.f32 %v1030, %v1048
  %v1099 = vadd.f32 %v1031, %v1048
  %v1100 = vadd.f32 %v1032, %v1048
  %v1101 = vadd.f32 %v1033, %v1048
  %v1102 = vadd.f32 %v1034, %v1048
  %v1103 = vadd.f32 %v1035, %v1048
  %v1104 = vadd.f32 %v1036, %v1048
  %v1105 = vadd.f32 %v1037, %v1048
  %v1106 = vadd.f32 %v1038, %v1048
  %v1107 = vadd.f32 %v1039, %v1048
  %v1108 = vadd.f32 %v1040, %v1048
  %v1109 = vadd.f32 %v1041, %v1048
  %v1110 = vadd.f32 %v1042, %v1048
  %v1111 = vadd.f32 %v1043, %v1048
  %v1112 = vadd.f32 %v1044, %v1048
  %v1113 = vadd.f32 %v1045, %v1048
  %v1114 = vmax.f32 %v1050, 0.0
  %v1115 = vmax.f32 %v1051, 0.0
  %v1116 = vmax.f32 %v1052, 0.0
  %v1117 = vmax.f32 %v1053, 0.0
  %v1118 = vmax.f32 %v1054, 0.0
  %v1119 = vmax.f32 %v1055, 0.0
  %v1120 = vmax.f32 %v1056, 0.0
  %v1121 = vmax.f32 %v1057, 0.0
  %v1122 = vmax.f32 %v1058, 0.0
  %v1123 = vmax.f32 %v1059, 0.0
  %v1124 = vmax.f32 %v1060, 0.0
  %v1125 = vmax.f32 %v1061, 0.0
  %v1126 = vmax.f32 %v1062, 0.0
  %v1127 = vmax.f32 %v1063, 0.0
  %v1128 = vmax.f32 %v1064, 0.0
  %v1129 = vmax.f32 %v1065, 0.0
  %v1130 = vmax.f32 %v1066, 0.0
  %v1131 = vmax.f32 %v1067, 0.0
  %v1132 = vmax.f32 %v1068, 0.0
  %v1133 = vmax.f32 %v1069, 0.0
  %v1134 = vmax.f32 %v1070, 0.0
  %v1135 = vmax.f32 %v1071, 0.0
  %v1136 = vmax.f32 %v1072, 0.0
  %v1137 = vmax.f32 %v1073, 0.0
  %v1138 = vmax.f32 %v1074, 0.0
  %v1139 = vmax.f32 %v1075, 0.0
  %v1140 = vmax.f32 %v1076, 0.0
  %v1141 = vmax.f32 %v1077, 0.0
  %v1142 = vmax.f32 %v1078, 0.0
  %v1143 = vmax.f32 %v1079, 0.0
  %v1144 = vmax.f32 %v1080, 0.0
  %v1145 = vmax.f32 %v1081, 0.0
  %v1146 = vmax.f32 %v1082, 0.0
  %v1147 = vmax.f32 %v1083, 0.0
  %v1148 = vmax.f32 %v1084, 0.0
  %v1149 = vmax.f32 %v1085, 0.0
  %v1150 = vmax.f32 %v1086, 0.0
  %v1151 = vmax.f32 %v1087, 0.0
  %v1152 = vmax.f32 %v1088, 0.0
  %v1153 = vmax.f32 %v1089, 0.0
  %v1154 = vmax.f32 %v1090, 0.0
  %v1155 = vmax.f32 %v1091, 0.0
  %v1156 = vmax.f32 %v1092, 0.0
  %v1157 = vmax.f32 %v1093, 0.0
  %v1158 = vmax.f32 %v1094, 0.0
  %v1159 = vmax.f32 %v1095, 0.0
  %v1160 = vmax.f32 %v1096, 0.0
  %v1161 = vmax.f32 %v1097, 0.0
  %v1162 = vmax.f32 %v1098, 0.0
  %v1163 = vmax.f32 %v1099, 0.0
  %v1164 = vmax.f32 %v1100, 0.0
  %v1165 = vmax.f32 %v1101, 0.0
  %v1166 = vmax.f32 %v1102, 0.0
  %v1167 = vmax.f32 %v1103, 0.0
  %v1168 = vmax.f32 %v1104, 0.0
  %v1169 = vmax.f32 %v1105, 0.0
  %v1170 = vmax.f32 %v1106, 0.0
  %v1171 = vmax.f32 %v1107, 0.0
  %v1172 = vmax.f32 %v1108, 0.0
  %v1173 = vmax.f32 %v1109, 0.0
  %v1174 = vmax.f32 %v1110, 0.0
  %v1175 = vmax.f32 %v1111, 0.0
  %v1176 = vmax.f32 %v1112, 0.0
  %v1177 = vmax.f32 %v1113, 0.0
  %1178 = vst.msk [vmem:[%s5] sm:$0xff] %vm499, %v1114
  %1179 = vst.msk [vmem:[%s5 + $0x8] sm:$0xff] %vm499, %v1115
  %1180 = vst.msk [vmem:[%s5 + $0x10] sm:$0xff] %vm499, %v1116
  %1181 = vst.msk [vmem:[%s5 + $0x18] sm:$0xff] %vm499, %v1117
  %1182 = vst.msk [vmem:[%s5 + $0x20] sm:$0xff] %vm499, %v1118
  %1183 = vst.msk [vmem:[%s5 + $0x28] sm:$0xff] %vm499, %v1119
  %1184 = vst.msk [vmem:[%s5 + $0x30] sm:$0xff] %vm499, %v1120
  %1185 = vst.msk [vmem:[%s5 + $0x38] sm:$0xff] %vm499, %v1121
  %1186 = vst.msk [vmem:[%s5 + $0x40] sm:$0xff] %vm499, %v1122
  %1187 = vst.msk [vmem:[%s5 + $0x48] sm:$0xff] %vm499, %v1123
  %1188 = vst.msk [vmem:[%s5 + $0x50] sm:$0xff] %vm499, %v1124
  %1189 = vst.msk [vmem:[%s5 + $0x58] sm:$0xff] %vm499, %v1125
  %1190 = vst.msk [vmem:[%s5 + $0x60] sm:$0xff] %vm499, %v1126
  %1191 = vst.msk [vmem:[%s5 + $0x68] sm:$0xff] %vm499, %v1127
  %1192 = vst.msk [vmem:[%s5 + $0x70] sm:$0xff] %vm499, %v1128
  %1193 = vst.msk [vmem:[%s5 + $0x78] sm:$0xff] %vm499, %v1129
  %1194 = vst.msk [vmem:[%s5 + $0x80] sm:$0xff] %vm499, %v1130
  %1195 = vst.msk [vmem:[%s5 + $0x88] sm:$0xff] %vm499, %v1131
  %1196 = vst.msk [vmem:[%s5 + $0x90] sm:$0xff] %vm499, %v1132
  %1197 = vst.msk [vmem:[%s5 + $0x98] sm:$0xff] %vm499, %v1133
  %1198 = vst.msk [vmem:[%s5 + $0xa0] sm:$0xff] %vm499, %v1134
  %1199 = vst.msk [vmem:[%s5 + $0xa8] sm:$0xff] %vm499, %v1135
  %1200 = vst.msk [vmem:[%s5 + $0xb0] sm:$0xff] %vm499, %v1136
  %1201 = vst.msk [vmem:[%s5 + $0xb8] sm:$0xff] %vm499, %v1137
  %1202 = vst.msk [vmem:[%s5 + $0xc0] sm:$0xff] %vm499, %v1138
  %1203 = vst.msk [vmem:[%s5 + $0xc8] sm:$0xff] %vm499, %v1139
  %1204 = vst.msk [vmem:[%s5 + $0xd0] sm:$0xff] %vm499, %v1140
  %1205 = vst.msk [vmem:[%s5 + $0xd8] sm:$0xff] %vm499, %v1141
  %1206 = vst.msk [vmem:[%s5 + $0xe0] sm:$0xff] %vm499, %v1142
  %1207 = vst.msk [vmem:[%s5 + $0xe8] sm:$0xff] %vm499, %v1143
  %1208 = vst.msk [vmem:[%s5 + $0xf0] sm:$0xff] %vm499, %v1144
  %1209 = vst.msk [vmem:[%s5 + $0xf8] sm:$0xff] %vm499, %v1145
  %1210 = vst.msk [vmem:[%s5 + $0x100] sm:$0xff] %vm499, %v1146
  %1211 = vst.msk [vmem:[%s5 + $0x108] sm:$0xff] %vm499, %v1147
  %1212 = vst.msk [vmem:[%s5 + $0x110] sm:$0xff] %vm499, %v1148
  %1213 = vst.msk [vmem:[%s5 + $0x118] sm:$0xff] %vm499, %v1149
  %1214 = vst.msk [vmem:[%s5 + $0x120] sm:$0xff] %vm499, %v1150
  %1215 = vst.msk [vmem:[%s5 + $0x128] sm:$0xff] %vm499, %v1151
  %1216 = vst.msk [vmem:[%s5 + $0x130] sm:$0xff] %vm499, %v1152
  %1217 = vst.msk [vmem:[%s5 + $0x138] sm:$0xff] %vm499, %v1153
  %1218 = vst.msk [vmem:[%s5 + $0x140] sm:$0xff] %vm499, %v1154
  %1219 = vst.msk [vmem:[%s5 + $0x148] sm:$0xff] %vm499, %v1155
  %1220 = vst.msk [vmem:[%s5 + $0x150] sm:$0xff] %vm499, %v1156
  %1221 = vst.msk [vmem:[%s5 + $0x158] sm:$0xff] %vm499, %v1157
  %1222 = vst.msk [vmem:[%s5 + $0x160] sm:$0xff] %vm499, %v1158
  %1223 = vst.msk [vmem:[%s5 + $0x168] sm:$0xff] %vm499, %v1159
  %1224 = vst.msk [vmem:[%s5 + $0x170] sm:$0xff] %vm499, %v1160
  %1225 = vst.msk [vmem:[%s5 + $0x178] sm:$0xff] %vm499, %v1161
  %1226 = vst.msk [vmem:[%s5 + $0x180] sm:$0xff] %vm499, %v1162
  %1227 = vst.msk [vmem:[%s5 + $0x188] sm:$0xff] %vm499, %v1163
  %1228 = vst.msk [vmem:[%s5 + $0x190] sm:$0xff] %vm499, %v1164
  %1229 = vst.msk [vmem:[%s5 + $0x198] sm:$0xff] %vm499, %v1165
  %1230 = vst.msk [vmem:[%s5 + $0x1a0] sm:$0xff] %vm499, %v1166
  %1231 = vst.msk [vmem:[%s5 + $0x1a8] sm:$0xff] %vm499, %v1167
  %1232 = vst.msk [vmem:[%s5 + $0x1b0] sm:$0xff] %vm499, %v1168
  %1233 = vst.msk [vmem:[%s5 + $0x1b8] sm:$0xff] %vm499, %v1169
  %1234 = vst.msk [vmem:[%s5 + $0x1c0] sm:$0xff] %vm499, %v1170
  %1235 = vst.msk [vmem:[%s5 + $0x1c8] sm:$0xff] %vm499, %v1171
  %1236 = vst.msk [vmem:[%s5 + $0x1d0] sm:$0xff] %vm499, %v1172
  %1237 = vst.msk [vmem:[%s5 + $0x1d8] sm:$0xff] %vm499, %v1173
  %1238 = vst.msk [vmem:[%s5 + $0x1e0] sm:$0xff] %vm499, %v1174
  %1239 = vst.msk [vmem:[%s5 + $0x1e8] sm:$0xff] %vm499, %v1175
  %1240 = vst.msk [vmem:[%s5 + $0x1f0] sm:$0xff] %vm499, %v1176
  %1241 = vst.msk [vmem:[%s5 + $0x1f8] sm:$0xff] %vm499, %v1177
  // Predicated region
  $region22: #{encoder_forward_nchw.10} parent=0 // pred_check
    _
  $region23: #{encoder_forward_nchw.10} parent=0 // pred_check_branch
    %1243 = sbr.rel (0) target = $region25
  $region24: #{encoder_forward_nchw.10} parent=0 // pred_region
    _
  $region25: #{encoder_forward_nchw.10} parent=0 // pred_fallthru
    _
  // Predicated region
  $region26: #{encoder_forward_nchw.10} parent=0 // pred_check
    _
  $region27: #{encoder_forward_nchw.10} parent=0 // pred_check_branch
    %1245 = sbr.rel (0) target = $region29
  $region28: #{encoder_forward_nchw.10} parent=0 // pred_region
    _
  $region29: #{encoder_forward_nchw.10} parent=0 // pred_fallthru
    _

// kernel: encoder_forward_nchw.11
$region0: #{encoder_forward_nchw.11}
  #allocation0 [shape = 'u32[]', space=smem, size = 0x4, offset = 0x4, fixed_abs, tag = 'smem constant byte address 0x4 - core index']
  #allocation1 [shape = 'u32[72,128]{1,0:T(1,128)}', space=vmem, size = 0x9000, scoped, tag = 'internal scratch']
  %s0 = inlined_call_operand.vmem [shape: f32[512,72], index: 0, kind: input, shape index: {}]
  %s1 = inlined_call_operand.vmem [shape: f32[72,8], index: 1, kind: input, shape index: {}]
  %s2 = inlined_call_operand.vmem [shape: f32[1,8], index: 2, kind: input, shape index: {}]
  %s3 = inlined_call_operand.vmem [shape: f32[1,8], index: 3, kind: input, shape index: {}]
  %s4 = inlined_call_operand.vmem [shape: f32[1,8], index: 4, kind: input, shape index: {}]
  %s5 = inlined_call_operand.vmem [shape: f32[512,8], index: 5, kind: input, shape index: {}]
  %s6 = inlined_call_operand.vmem [shape: f32[512,8], index: 6, kind: output, shape index: {}]
  %s7 = sld [smem:[#allocation0]]
  $region34: #{encoder_forward_nchw.11} parent=0
    _
  %s9 = ssub.s32 1, %s7
  %s10 = scalar_select 0, %s9, %s7
  // Predicated region
  $region2: #{encoder_forward_nchw.11} parent=0 // pred_check
    _
  $region3: #{encoder_forward_nchw.11} parent=0 // pred_check_branch
    %12 = sbr.rel (0) target = $region5
  $region4: #{encoder_forward_nchw.11} parent=0 // pred_region
    _
  $region5: #{encoder_forward_nchw.11} parent=0 // pred_fallthru
    _
  // Predicated region
  $region6: #{encoder_forward_nchw.11} parent=0 // pred_check
    _
  $region7: #{encoder_forward_nchw.11} parent=0 // pred_check_branch
    %14 = sbr.rel (0) target = $region9
  $region8: #{encoder_forward_nchw.11} parent=0 // pred_region
    _
  $region9: #{encoder_forward_nchw.11} parent=0 // pred_fallthru
    _
  // Predicated region
  $region10: #{encoder_forward_nchw.11} parent=0 // pred_check
    _
  $region11: #{encoder_forward_nchw.11} parent=0 // pred_check_branch
    %16 = sbr.rel (0) target = $region13
  $region12: #{encoder_forward_nchw.11} parent=0 // pred_region
    _
  $region13: #{encoder_forward_nchw.11} parent=0 // pred_fallthru
    _
  // Predicated region
  $region14: #{encoder_forward_nchw.11} parent=0 // pred_check
    _
  $region15: #{encoder_forward_nchw.11} parent=0 // pred_check_branch
    %18 = sbr.rel (0) target = $region17
  $region16: #{encoder_forward_nchw.11} parent=0 // pred_region
    _
  $region17: #{encoder_forward_nchw.11} parent=0 // pred_fallthru
    _
  // Predicated region
  $region18: #{encoder_forward_nchw.11} parent=0 // pred_check
    _
  $region19: #{encoder_forward_nchw.11} parent=0 // pred_check_branch
    %20 = sbr.rel (0) target = $region21
  $region20: #{encoder_forward_nchw.11} parent=0 // pred_region
    _
  $region21: #{encoder_forward_nchw.11} parent=0 // pred_fallthru
    _
  // Predicated region
  $region22: #{encoder_forward_nchw.11} parent=0 // pred_check
    _
  $region23: #{encoder_forward_nchw.11} parent=0 // pred_check_branch
    %22 = sbr.rel (0) target = $region25
  $region24: #{encoder_forward_nchw.11} parent=0 // pred_region
    _
  $region25: #{encoder_forward_nchw.11} parent=0 // pred_fallthru
    _
  %v23 = vld [vmem:[%s0] sm:$0xff]
  %v24 = vld [vmem:[%s0 + $0x8] sm:$0xff]
  %v25 = vld [vmem:[%s0 + $0x10] sm:$0xff]
  %v26 = vld [vmem:[%s0 + $0x18] sm:$0xff]
  %v27 = vld [vmem:[%s0 + $0x20] sm:$0xff]
  %v28 = vld [vmem:[%s0 + $0x28] sm:$0xff]
  %v29 = vld [vmem:[%s0 + $0x30] sm:$0xff]
  %v30 = vld [vmem:[%s0 + $0x38] sm:$0xff]
  %v31 = vld [vmem:[%s0 + $0x40] sm:$0xff]
  %v32 = vld [vmem:[%s0 + $0x48] sm:$0xff]
  %v33 = vld [vmem:[%s0 + $0x50] sm:$0xff]
  %v34 = vld [vmem:[%s0 + $0x58] sm:$0xff]
  %v35 = vld [vmem:[%s0 + $0x60] sm:$0xff]
  %v36 = vld [vmem:[%s0 + $0x68] sm:$0xff]
  %v37 = vld [vmem:[%s0 + $0x70] sm:$0xff]
  %v38 = vld [vmem:[%s0 + $0x78] sm:$0xff]
  %v39 = vld [vmem:[%s0 + $0x80] sm:$0xff]
  %v40 = vld [vmem:[%s0 + $0x88] sm:$0xff]
  %v41 = vld [vmem:[%s0 + $0x90] sm:$0xff]
  %v42 = vld [vmem:[%s0 + $0x98] sm:$0xff]
  %v43 = vld [vmem:[%s0 + $0xa0] sm:$0xff]
  %v44 = vld [vmem:[%s0 + $0xa8] sm:$0xff]
  %v45 = vld [vmem:[%s0 + $0xb0] sm:$0xff]
  %v46 = vld [vmem:[%s0 + $0xb8] sm:$0xff]
  %v47 = vld [vmem:[%s0 + $0xc0] sm:$0xff]
  %v48 = vld [vmem:[%s0 + $0xc8] sm:$0xff]
  %v49 = vld [vmem:[%s0 + $0xd0] sm:$0xff]
  %v50 = vld [vmem:[%s0 + $0xd8] sm:$0xff]
  %v51 = vld [vmem:[%s0 + $0xe0] sm:$0xff]
  %v52 = vld [vmem:[%s0 + $0xe8] sm:$0xff]
  %v53 = vld [vmem:[%s0 + $0xf0] sm:$0xff]
  %v54 = vld [vmem:[%s0 + $0xf8] sm:$0xff]
  %v55 = vld [vmem:[%s0 + $0x100] sm:$0xff]
  %v56 = vld [vmem:[%s0 + $0x108] sm:$0xff]
  %v57 = vld [vmem:[%s0 + $0x110] sm:$0xff]
  %v58 = vld [vmem:[%s0 + $0x118] sm:$0xff]
  %v59 = vld [vmem:[%s0 + $0x120] sm:$0xff]
  %v60 = vld [vmem:[%s0 + $0x128] sm:$0xff]
  %v61 = vld [vmem:[%s0 + $0x130] sm:$0xff]
  %v62 = vld [vmem:[%s0 + $0x138] sm:$0xff]
  %v63 = vld [vmem:[%s0 + $0x140] sm:$0xff]
  %v64 = vld [vmem:[%s0 + $0x148] sm:$0xff]
  %v65 = vld [vmem:[%s0 + $0x150] sm:$0xff]
  %v66 = vld [vmem:[%s0 + $0x158] sm:$0xff]
  %v67 = vld [vmem:[%s0 + $0x160] sm:$0xff]
  %v68 = vld [vmem:[%s0 + $0x168] sm:$0xff]
  %v69 = vld [vmem:[%s0 + $0x170] sm:$0xff]
  %v70 = vld [vmem:[%s0 + $0x178] sm:$0xff]
  %v71 = vld [vmem:[%s0 + $0x180] sm:$0xff]
  %v72 = vld [vmem:[%s0 + $0x188] sm:$0xff]
  %v73 = vld [vmem:[%s0 + $0x190] sm:$0xff]
  %v74 = vld [vmem:[%s0 + $0x198] sm:$0xff]
  %v75 = vld [vmem:[%s0 + $0x1a0] sm:$0xff]
  %v76 = vld [vmem:[%s0 + $0x1a8] sm:$0xff]
  %v77 = vld [vmem:[%s0 + $0x1b0] sm:$0xff]
  %v78 = vld [vmem:[%s0 + $0x1b8] sm:$0xff]
  %v79 = vld [vmem:[%s0 + $0x1c0] sm:$0xff]
  %v80 = vld [vmem:[%s0 + $0x1c8] sm:$0xff]
  %v81 = vld [vmem:[%s0 + $0x1d0] sm:$0xff]
  %v82 = vld [vmem:[%s0 + $0x1d8] sm:$0xff]
  %v83 = vld [vmem:[%s0 + $0x1e0] sm:$0xff]
  %v84 = vld [vmem:[%s0 + $0x1e8] sm:$0xff]
  %v85 = vld [vmem:[%s0 + $0x1f0] sm:$0xff]
  %v86 = vld [vmem:[%s0 + $0x1f8] sm:$0xff]
  %v87 = vld [vmem:[%s1] sm:$0xff]
  %v88 = vld [vmem:[%s1 + $0x8] sm:$0xff]
  %v89 = vld [vmem:[%s1 + $0x10] sm:$0xff]
  %v90 = vld [vmem:[%s1 + $0x18] sm:$0xff]
  %v91 = vld [vmem:[%s1 + $0x20] sm:$0xff]
  %v92 = vld [vmem:[%s1 + $0x28] sm:$0xff]
  %v93 = vld [vmem:[%s1 + $0x30] sm:$0xff]
  %v94 = vld [vmem:[%s1 + $0x38] sm:$0xff]
  %v95 = vld [vmem:[%s1 + $0x40] sm:$0xff]
  %v96 = vld [vmem:[%s2] sm:$0x1]
  %v98 = vperm.slane %v96, 0
  %vm100 = vcmask 588800
  %v102 = vsel %vm100, %v23, 0
  %v105 = vsel %vm100, %v24, 0
  %v108 = vsel %vm100, %v25, 0
  %v111 = vsel %vm100, %v26, 0
  %v114 = vsel %vm100, %v27, 0
  %v117 = vsel %vm100, %v28, 0
  %v120 = vsel %vm100, %v29, 0
  %v123 = vsel %vm100, %v30, 0
  %v126 = vsel %vm100, %v31, 0
  %v129 = vsel %vm100, %v32, 0
  %v132 = vsel %vm100, %v33, 0
  %v135 = vsel %vm100, %v34, 0
  %v138 = vsel %vm100, %v35, 0
  %v141 = vsel %vm100, %v36, 0
  %v144 = vsel %vm100, %v37, 0
  %v147 = vsel %vm100, %v38, 0
  %v150 = vsel %vm100, %v39, 0
  %v153 = vsel %vm100, %v40, 0
  %v156 = vsel %vm100, %v41, 0
  %v159 = vsel %vm100, %v42, 0
  %v162 = vsel %vm100, %v43, 0
  %v165 = vsel %vm100, %v44, 0
  %v168 = vsel %vm100, %v45, 0
  %v171 = vsel %vm100, %v46, 0
  %v174 = vsel %vm100, %v47, 0
  %v177 = vsel %vm100, %v48, 0
  %v180 = vsel %vm100, %v49, 0
  %v183 = vsel %vm100, %v50, 0
  %v186 = vsel %vm100, %v51, 0
  %v189 = vsel %vm100, %v52, 0
  %v192 = vsel %vm100, %v53, 0
  %v195 = vsel %vm100, %v54, 0
  %v198 = vsel %vm100, %v55, 0
  %v201 = vsel %vm100, %v56, 0
  %v204 = vsel %vm100, %v57, 0
  %v207 = vsel %vm100, %v58, 0
  %v210 = vsel %vm100, %v59, 0
  %v213 = vsel %vm100, %v60, 0
  %v216 = vsel %vm100, %v61, 0
  %v219 = vsel %vm100, %v62, 0
  %v222 = vsel %vm100, %v63, 0
  %v225 = vsel %vm100, %v64, 0
  %v228 = vsel %vm100, %v65, 0
  %v231 = vsel %vm100, %v66, 0
  %v234 = vsel %vm100, %v67, 0
  %v237 = vsel %vm100, %v68, 0
  %v240 = vsel %vm100, %v69, 0
  %v243 = vsel %vm100, %v70, 0
  %v246 = vsel %vm100, %v71, 0
  %v249 = vsel %vm100, %v72, 0
  %v252 = vsel %vm100, %v73, 0
  %v255 = vsel %vm100, %v74, 0
  %v258 = vsel %vm100, %v75, 0
  %v261 = vsel %vm100, %v76, 0
  %v264 = vsel %vm100, %v77, 0
  %v267 = vsel %vm100, %v78, 0
  %v270 = vsel %vm100, %v79, 0
  %v273 = vsel %vm100, %v80, 0
  %v276 = vsel %vm100, %v81, 0
  %v279 = vsel %vm100, %v82, 0
  %v282 = vsel %vm100, %v83, 0
  %v285 = vsel %vm100, %v84, 0
  %v288 = vsel %vm100, %v85, 0
  %v291 = vsel %vm100, %v86, 0
  %293 = vmatpush.msra.mxu0 0.0
  %294 = vmatpush.msra.mxu0 0.0
  %295 = vmatpush.msra.mxu0 0.0
  %296 = vmatpush.msra.mxu0 0.0
  %297 = vmatpush.msra.mxu0 0.0
  %298 = vmatpush.msra.mxu0 0.0
  %299 = vmatpush.msra.mxu0 0.0
  %300 = vmatpush.msra.mxu0 %v95
  %301 = vmatpush.msra.mxu0 %v94
  %302 = vmatpush.msra.mxu0 %v93
  %303 = vmatpush.msra.mxu0 %v92
  %304 = vmatpush.msra.mxu0 %v91
  %305 = vmatpush.msra.mxu0 %v90
  %306 = vmatpush.msra.mxu0 %v89
  %307 = vmatpush.msra.mxu0 %v88
  %308 = vmatpush.msra.mxu0 %v87
  %309 = vmatmul.f32.gmra.mxu0 %v102
  %v310 = vpop.f32.mrf.mxu0
  %v311 = vadd.f32 %v98, %v310
  %312 = vmatmul.f32.gmra.mxu0 %v105
  %v313 = vpop.f32.mrf.mxu0
  %v314 = vadd.f32 %v98, %v313
  %315 = vmatmul.f32.gmra.mxu0 %v108
  %v316 = vpop.f32.mrf.mxu0
  %v317 = vadd.f32 %v98, %v316
  %318 = vmatmul.f32.gmra.mxu0 %v111
  %v319 = vpop.f32.mrf.mxu0
  %v320 = vadd.f32 %v98, %v319
  %321 = vmatmul.f32.gmra.mxu0 %v114
  %v322 = vpop.f32.mrf.mxu0
  %v323 = vadd.f32 %v98, %v322
  %324 = vmatmul.f32.gmra.mxu0 %v117
  %v325 = vpop.f32.mrf.mxu0
  %v326 = vadd.f32 %v98, %v325
  %327 = vmatmul.f32.gmra.mxu0 %v120
  %v328 = vpop.f32.mrf.mxu0
  %v329 = vadd.f32 %v98, %v328
  %330 = vmatmul.f32.gmra.mxu0 %v123
  %v331 = vpop.f32.mrf.mxu0
  %v332 = vadd.f32 %v98, %v331
  %333 = vmatmul.f32.gmra.mxu0 %v126
  %v334 = vpop.f32.mrf.mxu0
  %v335 = vadd.f32 %v98, %v334
  %336 = vmatmul.f32.gmra.mxu0 %v129
  %v337 = vpop.f32.mrf.mxu0
  %v338 = vadd.f32 %v98, %v337
  %339 = vmatmul.f32.gmra.mxu0 %v132
  %v340 = vpop.f32.mrf.mxu0
  %v341 = vadd.f32 %v98, %v340
  %342 = vmatmul.f32.gmra.mxu0 %v135
  %v343 = vpop.f32.mrf.mxu0
  %v344 = vadd.f32 %v98, %v343
  %345 = vmatmul.f32.gmra.mxu0 %v138
  %v346 = vpop.f32.mrf.mxu0
  %v347 = vadd.f32 %v98, %v346
  %348 = vmatmul.f32.gmra.mxu0 %v141
  %v349 = vpop.f32.mrf.mxu0
  %v350 = vadd.f32 %v98, %v349
  %351 = vmatmul.f32.gmra.mxu0 %v144
  %v352 = vpop.f32.mrf.mxu0
  %v353 = vadd.f32 %v98, %v352
  %354 = vmatmul.f32.gmra.mxu0 %v147
  %v355 = vpop.f32.mrf.mxu0
  %v356 = vadd.f32 %v98, %v355
  %357 = vmatmul.f32.gmra.mxu0 %v150
  %v358 = vpop.f32.mrf.mxu0
  %v359 = vadd.f32 %v98, %v358
  %360 = vmatmul.f32.gmra.mxu0 %v153
  %v361 = vpop.f32.mrf.mxu0
  %v362 = vadd.f32 %v98, %v361
  %363 = vmatmul.f32.gmra.mxu0 %v156
  %v364 = vpop.f32.mrf.mxu0
  %v365 = vadd.f32 %v98, %v364
  %366 = vmatmul.f32.gmra.mxu0 %v159
  %v367 = vpop.f32.mrf.mxu0
  %v368 = vadd.f32 %v98, %v367
  %369 = vmatmul.f32.gmra.mxu0 %v162
  %v370 = vpop.f32.mrf.mxu0
  %v371 = vadd.f32 %v98, %v370
  %372 = vmatmul.f32.gmra.mxu0 %v165
  %v373 = vpop.f32.mrf.mxu0
  %v374 = vadd.f32 %v98, %v373
  %375 = vmatmul.f32.gmra.mxu0 %v168
  %v376 = vpop.f32.mrf.mxu0
  %v377 = vadd.f32 %v98, %v376
  %378 = vmatmul.f32.gmra.mxu0 %v171
  %v379 = vpop.f32.mrf.mxu0
  %v380 = vadd.f32 %v98, %v379
  %381 = vmatmul.f32.gmra.mxu0 %v174
  %v382 = vpop.f32.mrf.mxu0
  %v383 = vadd.f32 %v98, %v382
  %384 = vmatmul.f32.gmra.mxu0 %v177
  %v385 = vpop.f32.mrf.mxu0
  %v386 = vadd.f32 %v98, %v385
  %387 = vmatmul.f32.gmra.mxu0 %v180
  %v388 = vpop.f32.mrf.mxu0
  %v389 = vadd.f32 %v98, %v388
  %390 = vmatmul.f32.gmra.mxu0 %v183
  %v391 = vpop.f32.mrf.mxu0
  %v392 = vadd.f32 %v98, %v391
  %393 = vmatmul.f32.gmra.mxu0 %v186
  %v394 = vpop.f32.mrf.mxu0
  %v395 = vadd.f32 %v98, %v394
  %396 = vmatmul.f32.gmra.mxu0 %v189
  %v397 = vpop.f32.mrf.mxu0
  %v398 = vadd.f32 %v98, %v397
  %399 = vmatmul.f32.gmra.mxu0 %v192
  %v400 = vpop.f32.mrf.mxu0
  %v401 = vadd.f32 %v98, %v400
  %402 = vmatmul.f32.gmra.mxu0 %v195
  %v403 = vpop.f32.mrf.mxu0
  %v404 = vadd.f32 %v98, %v403
  %405 = vmatmul.f32.gmra.mxu0 %v198
  %v406 = vpop.f32.mrf.mxu0
  %v407 = vadd.f32 %v98, %v406
  %408 = vmatmul.f32.gmra.mxu0 %v201
  %v409 = vpop.f32.mrf.mxu0
  %v410 = vadd.f32 %v98, %v409
  %411 = vmatmul.f32.gmra.mxu0 %v204
  %v412 = vpop.f32.mrf.mxu0
  %v413 = vadd.f32 %v98, %v412
  %414 = vmatmul.f32.gmra.mxu0 %v207
  %v415 = vpop.f32.mrf.mxu0
  %v416 = vadd.f32 %v98, %v415
  %417 = vmatmul.f32.gmra.mxu0 %v210
  %v418 = vpop.f32.mrf.mxu0
  %v419 = vadd.f32 %v98, %v418
  %420 = vmatmul.f32.gmra.mxu0 %v213
  %v421 = vpop.f32.mrf.mxu0
  %v422 = vadd.f32 %v98, %v421
  %423 = vmatmul.f32.gmra.mxu0 %v216
  %v424 = vpop.f32.mrf.mxu0
  %v425 = vadd.f32 %v98, %v424
  %426 = vmatmul.f32.gmra.mxu0 %v219
  %v427 = vpop.f32.mrf.mxu0
  %v428 = vadd.f32 %v98, %v427
  %429 = vmatmul.f32.gmra.mxu0 %v222
  %v430 = vpop.f32.mrf.mxu0
  %v431 = vadd.f32 %v98, %v430
  %432 = vmatmul.f32.gmra.mxu0 %v225
  %v433 = vpop.f32.mrf.mxu0
  %v434 = vadd.f32 %v98, %v433
  %435 = vmatmul.f32.gmra.mxu0 %v228
  %v436 = vpop.f32.mrf.mxu0
  %v437 = vadd.f32 %v98, %v436
  %438 = vmatmul.f32.gmra.mxu0 %v231
  %v439 = vpop.f32.mrf.mxu0
  %v440 = vadd.f32 %v98, %v439
  %441 = vmatmul.f32.gmra.mxu0 %v234
  %v442 = vpop.f32.mrf.mxu0
  %v443 = vadd.f32 %v98, %v442
  %444 = vmatmul.f32.gmra.mxu0 %v237
  %v445 = vpop.f32.mrf.mxu0
  %v446 = vadd.f32 %v98, %v445
  %447 = vmatmul.f32.gmra.mxu0 %v240
  %v448 = vpop.f32.mrf.mxu0
  %v449 = vadd.f32 %v98, %v448
  %450 = vmatmul.f32.gmra.mxu0 %v243
  %v451 = vpop.f32.mrf.mxu0
  %v452 = vadd.f32 %v98, %v451
  %453 = vmatmul.f32.gmra.mxu0 %v246
  %v454 = vpop.f32.mrf.mxu0
  %v455 = vadd.f32 %v98, %v454
  %456 = vmatmul.f32.gmra.mxu0 %v249
  %v457 = vpop.f32.mrf.mxu0
  %v458 = vadd.f32 %v98, %v457
  %459 = vmatmul.f32.gmra.mxu0 %v252
  %v460 = vpop.f32.mrf.mxu0
  %v461 = vadd.f32 %v98, %v460
  %462 = vmatmul.f32.gmra.mxu0 %v255
  %v463 = vpop.f32.mrf.mxu0
  %v464 = vadd.f32 %v98, %v463
  %465 = vmatmul.f32.gmra.mxu0 %v258
  %v466 = vpop.f32.mrf.mxu0
  %v467 = vadd.f32 %v98, %v466
  %468 = vmatmul.f32.gmra.mxu0 %v261
  %v469 = vpop.f32.mrf.mxu0
  %v470 = vadd.f32 %v98, %v469
  %471 = vmatmul.f32.gmra.mxu0 %v264
  %v472 = vpop.f32.mrf.mxu0
  %v473 = vadd.f32 %v98, %v472
  %474 = vmatmul.f32.gmra.mxu0 %v267
  %v475 = vpop.f32.mrf.mxu0
  %v476 = vadd.f32 %v98, %v475
  %477 = vmatmul.f32.gmra.mxu0 %v270
  %v478 = vpop.f32.mrf.mxu0
  %v479 = vadd.f32 %v98, %v478
  %480 = vmatmul.f32.gmra.mxu0 %v273
  %v481 = vpop.f32.mrf.mxu0
  %v482 = vadd.f32 %v98, %v481
  %483 = vmatmul.f32.gmra.mxu0 %v276
  %v484 = vpop.f32.mrf.mxu0
  %v485 = vadd.f32 %v98, %v484
  %486 = vmatmul.f32.gmra.mxu0 %v279
  %v487 = vpop.f32.mrf.mxu0
  %v488 = vadd.f32 %v98, %v487
  %489 = vmatmul.f32.gmra.mxu0 %v282
  %v490 = vpop.f32.mrf.mxu0
  %v491 = vadd.f32 %v98, %v490
  %492 = vmatmul.f32.gmra.mxu0 %v285
  %v493 = vpop.f32.mrf.mxu0
  %v494 = vadd.f32 %v98, %v493
  %495 = vmatmul.f32.gmra.mxu0 %v288
  %v496 = vpop.f32.mrf.mxu0
  %v497 = vadd.f32 %v98, %v496
  %498 = vmatmul.f32.gmra.mxu0 %v291
  %v499 = vpop.f32.mrf.mxu0
  %v500 = vadd.f32 %v98, %v499
  %501 = vdwg.mxu0
  %vm502 = vcmask 64512
  %v503 = vsel %vm502, %v311, 0.0
  %v504 = vsel %vm502, %v314, 0.0
  %v505 = vadd.f32 %v503, %v504
  %v506 = vsel %vm502, %v317, 0.0
  %v507 = vadd.f32 %v505, %v506
  %v508 = vsel %vm502, %v320, 0.0
  %v509 = vadd.f32 %v507, %v508
  %v510 = vsel %vm502, %v323, 0.0
  %v511 = vadd.f32 %v509, %v510
  %v512 = vsel %vm502, %v326, 0.0
  %v513 = vadd.f32 %v511, %v512
  %v514 = vsel %vm502, %v329, 0.0
  %v515 = vadd.f32 %v513, %v514
  %v516 = vsel %vm502, %v332, 0.0
  %v517 = vadd.f32 %v515, %v516
  %v518 = vsel %vm502, %v335, 0.0
  %v519 = vadd.f32 %v517, %v518
  %v520 = vsel %vm502, %v338, 0.0
  %v521 = vadd.f32 %v519, %v520
  %v522 = vsel %vm502, %v341, 0.0
  %v523 = vadd.f32 %v521, %v522
  %v524 = vsel %vm502, %v344, 0.0
  %v525 = vadd.f32 %v523, %v524
  %v526 = vsel %vm502, %v347, 0.0
  %v527 = vadd.f32 %v525, %v526
  %v528 = vsel %vm502, %v350, 0.0
  %v529 = vadd.f32 %v527, %v528
  %v530 = vsel %vm502, %v353, 0.0
  %v531 = vadd.f32 %v529, %v530
  %v532 = vsel %vm502, %v356, 0.0
  %v533 = vadd.f32 %v531, %v532
  %v534 = vsel %vm502, %v359, 0.0
  %v535 = vadd.f32 %v533, %v534
  %v536 = vsel %vm502, %v362, 0.0
  %v537 = vadd.f32 %v535, %v536
  %v538 = vsel %vm502, %v365, 0.0
  %v539 = vadd.f32 %v537, %v538
  %v540 = vsel %vm502, %v368, 0.0
  %v541 = vadd.f32 %v539, %v540
  %v542 = vsel %vm502, %v371, 0.0
  %v543 = vadd.f32 %v541, %v542
  %v544 = vsel %vm502, %v374, 0.0
  %v545 = vadd.f32 %v543, %v544
  %v546 = vsel %vm502, %v377, 0.0
  %v547 = vadd.f32 %v545, %v546
  %v548 = vsel %vm502, %v380, 0.0
  %v549 = vadd.f32 %v547, %v548
  %v550 = vsel %vm502, %v383, 0.0
  %v551 = vadd.f32 %v549, %v550
  %v552 = vsel %vm502, %v386, 0.0
  %v553 = vadd.f32 %v551, %v552
  %v554 = vsel %vm502, %v389, 0.0
  %v555 = vadd.f32 %v553, %v554
  %v556 = vsel %vm502, %v392, 0.0
  %v557 = vadd.f32 %v555, %v556
  %v558 = vsel %vm502, %v395, 0.0
  %v559 = vadd.f32 %v557, %v558
  %v560 = vsel %vm502, %v398, 0.0
  %v561 = vadd.f32 %v559, %v560
  %v562 = vsel %vm502, %v401, 0.0
  %v563 = vadd.f32 %v561, %v562
  %v564 = vsel %vm502, %v404, 0.0
  %v565 = vadd.f32 %v563, %v564
  %v566 = vsel %vm502, %v407, 0.0
  %v567 = vadd.f32 %v565, %v566
  %v568 = vsel %vm502, %v410, 0.0
  %v569 = vadd.f32 %v567, %v568
  %v570 = vsel %vm502, %v413, 0.0
  %v571 = vadd.f32 %v569, %v570
  %v572 = vsel %vm502, %v416, 0.0
  %v573 = vadd.f32 %v571, %v572
  %v574 = vsel %vm502, %v419, 0.0
  %v575 = vadd.f32 %v573, %v574
  %v576 = vsel %vm502, %v422, 0.0
  %v577 = vadd.f32 %v575, %v576
  %v578 = vsel %vm502, %v425, 0.0
  %v579 = vadd.f32 %v577, %v578
  %v580 = vsel %vm502, %v428, 0.0
  %v581 = vadd.f32 %v579, %v580
  %v582 = vsel %vm502, %v431, 0.0
  %v583 = vadd.f32 %v581, %v582
  %v584 = vsel %vm502, %v434, 0.0
  %v585 = vadd.f32 %v583, %v584
  %v586 = vsel %vm502, %v437, 0.0
  %v587 = vadd.f32 %v585, %v586
  %v588 = vsel %vm502, %v440, 0.0
  %v589 = vadd.f32 %v587, %v588
  %v590 = vsel %vm502, %v443, 0.0
  %v591 = vadd.f32 %v589, %v590
  %v592 = vsel %vm502, %v446, 0.0
  %v593 = vadd.f32 %v591, %v592
  %v594 = vsel %vm502, %v449, 0.0
  %v595 = vadd.f32 %v593, %v594
  %v596 = vsel %vm502, %v452, 0.0
  %v597 = vadd.f32 %v595, %v596
  %v598 = vsel %vm502, %v455, 0.0
  %v599 = vadd.f32 %v597, %v598
  %v600 = vsel %vm502, %v458, 0.0
  %v601 = vadd.f32 %v599, %v600
  %v602 = vsel %vm502, %v461, 0.0
  %v603 = vadd.f32 %v601, %v602
  %v604 = vsel %vm502, %v464, 0.0
  %v605 = vadd.f32 %v603, %v604
  %v606 = vsel %vm502, %v467, 0.0
  %v607 = vadd.f32 %v605, %v606
  %v608 = vsel %vm502, %v470, 0.0
  %v609 = vadd.f32 %v607, %v608
  %v610 = vsel %vm502, %v473, 0.0
  %v611 = vadd.f32 %v609, %v610
  %v612 = vsel %vm502, %v476, 0.0
  %v613 = vadd.f32 %v611, %v612
  %v614 = vsel %vm502, %v479, 0.0
  %v615 = vadd.f32 %v613, %v614
  %v616 = vsel %vm502, %v482, 0.0
  %v617 = vadd.f32 %v615, %v616
  %v618 = vsel %vm502, %v485, 0.0
  %v619 = vadd.f32 %v617, %v618
  %v620 = vsel %vm502, %v488, 0.0
  %v621 = vadd.f32 %v619, %v620
  %v622 = vsel %vm502, %v491, 0.0
  %v623 = vadd.f32 %v621, %v622
  %v624 = vsel %vm502, %v494, 0.0
  %v625 = vadd.f32 %v623, %v624
  %v626 = vsel %vm502, %v497, 0.0
  %v627 = vadd.f32 %v625, %v626
  %v628 = vsel %vm502, %v500, 0.0
  %v629 = vadd.f32 %v627, %v628
  %v630 = vrot.slane %v629, 4
  %v631 = vadd.f32 %v629, %v630
  %v632 = vrot.slane %v631, 2
  %v633 = vadd.f32 %v631, %v632
  %v634 = vrot.slane %v633, 1
  %v635 = vadd.f32 %v633, %v634
  %v636 = vrcp.pop 512.0
  %v637 = vmul.f32 512.0, %v636
  %v638 = vsub.f32 1.0, %v637
  %v639 = vmul.f32 %v636, %v638
  %v640 = vadd.f32 %v636, %v639
  %vm641 = vweird.f32 %v636
  %v642 = vsel %vm641, %v636, %v640
  %v643 = vmul.f32 %v635, %v642
  %v644 = vsub.f32 %v311, %v643
  %v645 = vsub.f32 %v314, %v643
  %v646 = vsub.f32 %v317, %v643
  %v647 = vsub.f32 %v320, %v643
  %v648 = vsub.f32 %v323, %v643
  %v649 = vsub.f32 %v326, %v643
  %v650 = vsub.f32 %v329, %v643
  %v651 = vsub.f32 %v332, %v643
  %v652 = vsub.f32 %v335, %v643
  %v653 = vsub.f32 %v338, %v643
  %v654 = vsub.f32 %v341, %v643
  %v655 = vsub.f32 %v344, %v643
  %v656 = vsub.f32 %v347, %v643
  %v657 = vsub.f32 %v350, %v643
  %v658 = vsub.f32 %v353, %v643
  %v659 = vsub.f32 %v356, %v643
  %v660 = vsub.f32 %v359, %v643
  %v661 = vsub.f32 %v362, %v643
  %v662 = vsub.f32 %v365, %v643
  %v663 = vsub.f32 %v368, %v643
  %v664 = vsub.f32 %v371, %v643
  %v665 = vsub.f32 %v374, %v643
  %v666 = vsub.f32 %v377, %v643
  %v667 = vsub.f32 %v380, %v643
  %v668 = vsub.f32 %v383, %v643
  %v669 = vsub.f32 %v386, %v643
  %v670 = vsub.f32 %v389, %v643
  %v671 = vsub.f32 %v392, %v643
  %v672 = vsub.f32 %v395, %v643
  %v673 = vsub.f32 %v398, %v643
  %v674 = vsub.f32 %v401, %v643
  %v675 = vsub.f32 %v404, %v643
  %v676 = vsub.f32 %v407, %v643
  %v677 = vsub.f32 %v410, %v643
  %v678 = vsub.f32 %v413, %v643
  %v679 = vsub.f32 %v416, %v643
  %v680 = vsub.f32 %v419, %v643
  %v681 = vsub.f32 %v422, %v643
  %v682 = vsub.f32 %v425, %v643
  %v683 = vsub.f32 %v428, %v643
  %v684 = vsub.f32 %v431, %v643
  %v685 = vsub.f32 %v434, %v643
  %v686 = vsub.f32 %v437, %v643
  %v687 = vsub.f32 %v440, %v643
  %v688 = vsub.f32 %v443, %v643
  %v689 = vsub.f32 %v446, %v643
  %v690 = vsub.f32 %v449, %v643
  %v691 = vsub.f32 %v452, %v643
  %v692 = vsub.f32 %v455, %v643
  %v693 = vsub.f32 %v458, %v643
  %v694 = vsub.f32 %v461, %v643
  %v695 = vsub.f32 %v464, %v643
  %v696 = vsub.f32 %v467, %v643
  %v697 = vsub.f32 %v470, %v643
  %v698 = vsub.f32 %v473, %v643
  %v699 = vsub.f32 %v476, %v643
  %v700 = vsub.f32 %v479, %v643
  %v701 = vsub.f32 %v482, %v643
  %v702 = vsub.f32 %v485, %v643
  %v703 = vsub.f32 %v488, %v643
  %v704 = vsub.f32 %v491, %v643
  %v705 = vsub.f32 %v494, %v643
  %v706 = vsub.f32 %v497, %v643
  %v707 = vsub.f32 %v500, %v643
  %v708 = vmul.f32 %v644, %v644
  %v709 = vmul.f32 %v645, %v645
  %v710 = vmul.f32 %v646, %v646
  %v711 = vmul.f32 %v647, %v647
  %v712 = vmul.f32 %v648, %v648
  %v713 = vmul.f32 %v649, %v649
  %v714 = vmul.f32 %v650, %v650
  %v715 = vmul.f32 %v651, %v651
  %v716 = vmul.f32 %v652, %v652
  %v717 = vmul.f32 %v653, %v653
  %v718 = vmul.f32 %v654, %v654
  %v719 = vmul.f32 %v655, %v655
  %v720 = vmul.f32 %v656, %v656
  %v721 = vmul.f32 %v657, %v657
  %v722 = vmul.f32 %v658, %v658
  %v723 = vmul.f32 %v659, %v659
  %v724 = vmul.f32 %v660, %v660
  %v725 = vmul.f32 %v661, %v661
  %v726 = vmul.f32 %v662, %v662
  %v727 = vmul.f32 %v663, %v663
  %v728 = vmul.f32 %v664, %v664
  %v729 = vmul.f32 %v665, %v665
  %v730 = vmul.f32 %v666, %v666
  %v731 = vmul.f32 %v667, %v667
  %v732 = vmul.f32 %v668, %v668
  %v733 = vmul.f32 %v669, %v669
  %v734 = vmul.f32 %v670, %v670
  %v735 = vmul.f32 %v671, %v671
  %v736 = vmul.f32 %v672, %v672
  %v737 = vmul.f32 %v673, %v673
  %v738 = vmul.f32 %v674, %v674
  %v739 = vmul.f32 %v675, %v675
  %v740 = vmul.f32 %v676, %v676
  %v741 = vmul.f32 %v677, %v677
  %v742 = vmul.f32 %v678, %v678
  %v743 = vmul.f32 %v679, %v679
  %v744 = vmul.f32 %v680, %v680
  %v745 = vmul.f32 %v681, %v681
  %v746 = vmul.f32 %v682, %v682
  %v747 = vmul.f32 %v683, %v683
  %v748 = vmul.f32 %v684, %v684
  %v749 = vmul.f32 %v685, %v685
  %v750 = vmul.f32 %v686, %v686
  %v751 = vmul.f32 %v687, %v687
  %v752 = vmul.f32 %v688, %v688
  %v753 = vmul.f32 %v689, %v689
  %v754 = vmul.f32 %v690, %v690
  %v755 = vmul.f32 %v691, %v691
  %v756 = vmul.f32 %v692, %v692
  %v757 = vmul.f32 %v693, %v693
  %v758 = vmul.f32 %v694, %v694
  %v759 = vmul.f32 %v695, %v695
  %v760 = vmul.f32 %v696, %v696
  %v761 = vmul.f32 %v697, %v697
  %v762 = vmul.f32 %v698, %v698
  %v763 = vmul.f32 %v699, %v699
  %v764 = vmul.f32 %v700, %v700
  %v765 = vmul.f32 %v701, %v701
  %v766 = vmul.f32 %v702, %v702
  %v767 = vmul.f32 %v703, %v703
  %v768 = vmul.f32 %v704, %v704
  %v769 = vmul.f32 %v705, %v705
  %v770 = vmul.f32 %v706, %v706
  %v771 = vmul.f32 %v707, %v707
  %v772 = vsel %vm502, %v708, 0.0
  %v773 = vsel %vm502, %v709, 0.0
  %v774 = vadd.f32 %v772, %v773
  %v775 = vsel %vm502, %v710, 0.0
  %v776 = vadd.f32 %v774, %v775
  %v777 = vsel %vm502, %v711, 0.0
  %v778 = vadd.f32 %v776, %v777
  %v779 = vsel %vm502, %v712, 0.0
  %v780 = vadd.f32 %v778, %v779
  %v781 = vsel %vm502, %v713, 0.0
  %v782 = vadd.f32 %v780, %v781
  %v783 = vsel %vm502, %v714, 0.0
  %v784 = vadd.f32 %v782, %v783
  %v785 = vsel %vm502, %v715, 0.0
  %v786 = vadd.f32 %v784, %v785
  %v787 = vsel %vm502, %v716, 0.0
  %v788 = vadd.f32 %v786, %v787
  %v789 = vsel %vm502, %v717, 0.0
  %v790 = vadd.f32 %v788, %v789
  %v791 = vsel %vm502, %v718, 0.0
  %v792 = vadd.f32 %v790, %v791
  %v793 = vsel %vm502, %v719, 0.0
  %v794 = vadd.f32 %v792, %v793
  %v795 = vsel %vm502, %v720, 0.0
  %v796 = vadd.f32 %v794, %v795
  %v797 = vsel %vm502, %v721, 0.0
  %v798 = vadd.f32 %v796, %v797
  %v799 = vsel %vm502, %v722, 0.0
  %v800 = vadd.f32 %v798, %v799
  %v801 = vsel %vm502, %v723, 0.0
  %v802 = vadd.f32 %v800, %v801
  %v803 = vsel %vm502, %v724, 0.0
  %v804 = vadd.f32 %v802, %v803
  %v805 = vsel %vm502, %v725, 0.0
  %v806 = vadd.f32 %v804, %v805
  %v807 = vsel %vm502, %v726, 0.0
  %v808 = vadd.f32 %v806, %v807
  %v809 = vsel %vm502, %v727, 0.0
  %v810 = vadd.f32 %v808, %v809
  %v811 = vsel %vm502, %v728, 0.0
  %v812 = vadd.f32 %v810, %v811
  %v813 = vsel %vm502, %v729, 0.0
  %v814 = vadd.f32 %v812, %v813
  %v815 = vsel %vm502, %v730, 0.0
  %v816 = vadd.f32 %v814, %v815
  %v817 = vsel %vm502, %v731, 0.0
  %v818 = vadd.f32 %v816, %v817
  %v819 = vsel %vm502, %v732, 0.0
  %v820 = vadd.f32 %v818, %v819
  %v821 = vsel %vm502, %v733, 0.0
  %v822 = vadd.f32 %v820, %v821
  %v823 = vsel %vm502, %v734, 0.0
  %v824 = vadd.f32 %v822, %v823
  %v825 = vsel %vm502, %v735, 0.0
  %v826 = vadd.f32 %v824, %v825
  %v827 = vsel %vm502, %v736, 0.0
  %v828 = vadd.f32 %v826, %v827
  %v829 = vsel %vm502, %v737, 0.0
  %v830 = vadd.f32 %v828, %v829
  %v831 = vsel %vm502, %v738, 0.0
  %v832 = vadd.f32 %v830, %v831
  %v833 = vsel %vm502, %v739, 0.0
  %v834 = vadd.f32 %v832, %v833
  %v835 = vsel %vm502, %v740, 0.0
  %v836 = vadd.f32 %v834, %v835
  %v837 = vsel %vm502, %v741, 0.0
  %v838 = vadd.f32 %v836, %v837
  %v839 = vsel %vm502, %v742, 0.0
  %v840 = vadd.f32 %v838, %v839
  %v841 = vsel %vm502, %v743, 0.0
  %v842 = vadd.f32 %v840, %v841
  %v843 = vsel %vm502, %v744, 0.0
  %v844 = vadd.f32 %v842, %v843
  %v845 = vsel %vm502, %v745, 0.0
  %v846 = vadd.f32 %v844, %v845
  %v847 = vsel %vm502, %v746, 0.0
  %v848 = vadd.f32 %v846, %v847
  %v849 = vsel %vm502, %v747, 0.0
  %v850 = vadd.f32 %v848, %v849
  %v851 = vsel %vm502, %v748, 0.0
  %v852 = vadd.f32 %v850, %v851
  %v853 = vsel %vm502, %v749, 0.0
  %v854 = vadd.f32 %v852, %v853
  %v855 = vsel %vm502, %v750, 0.0
  %v856 = vadd.f32 %v854, %v855
  %v857 = vsel %vm502, %v751, 0.0
  %v858 = vadd.f32 %v856, %v857
  %v859 = vsel %vm502, %v752, 0.0
  %v860 = vadd.f32 %v858, %v859
  %v861 = vsel %vm502, %v753, 0.0
  %v862 = vadd.f32 %v860, %v861
  %v863 = vsel %vm502, %v754, 0.0
  %v864 = vadd.f32 %v862, %v863
  %v865 = vsel %vm502, %v755, 0.0
  %v866 = vadd.f32 %v864, %v865
  %v867 = vsel %vm502, %v756, 0.0
  %v868 = vadd.f32 %v866, %v867
  %v869 = vsel %vm502, %v757, 0.0
  %v870 = vadd.f32 %v868, %v869
  %v871 = vsel %vm502, %v758, 0.0
  %v872 = vadd.f32 %v870, %v871
  %v873 = vsel %vm502, %v759, 0.0
  %v874 = vadd.f32 %v872, %v873
  %v875 = vsel %vm502, %v760, 0.0
  %v876 = vadd.f32 %v874, %v875
  %v877 = vsel %vm502, %v761, 0.0
  %v878 = vadd.f32 %v876, %v877
  %v879 = vsel %vm502, %v762, 0.0
  %v880 = vadd.f32 %v878, %v879
  %v881 = vsel %vm502, %v763, 0.0
  %v882 = vadd.f32 %v880, %v881
  %v883 = vsel %vm502, %v764, 0.0
  %v884 = vadd.f32 %v882, %v883
  %v885 = vsel %vm502, %v765, 0.0
  %v886 = vadd.f32 %v884, %v885
  %v887 = vsel %vm502, %v766, 0.0
  %v888 = vadd.f32 %v886, %v887
  %v889 = vsel %vm502, %v767, 0.0
  %v890 = vadd.f32 %v888, %v889
  %v891 = vsel %vm502, %v768, 0.0
  %v892 = vadd.f32 %v890, %v891
  %v893 = vsel %vm502, %v769, 0.0
  %v894 = vadd.f32 %v892, %v893
  %v895 = vsel %vm502, %v770, 0.0
  %v896 = vadd.f32 %v894, %v895
  %v897 = vsel %vm502, %v771, 0.0
  %v898 = vadd.f32 %v896, %v897
  %v899 = vrot.slane %v898, 4
  %v900 = vadd.f32 %v898, %v899
  %v901 = vrot.slane %v900, 2
  %v902 = vadd.f32 %v900, %v901
  %v903 = vrot.slane %v902, 1
  %v904 = vadd.f32 %v902, %v903
  %v905 = vmul.f32 %v904, %v642
  %v906 = vadd.f32 %v905, 1e-05
  %v907 = vrsqrt.pop %v906
  %v908 = vmul.f32 %v907, %v906
  %v909 = vmul.f32 %v908, %v907
  %v910 = vmul.f32 0.5, %v909
  %v911 = vsub.f32 1.5, %v910
  %v912 = vmul.f32 %v907, %v911
  %vm913 = vweird.f32 %v906
  %vm914 = vweird.f32 %v907
  %vm915 = vmor %vm913, %vm914
  %v916 = vsel %vm915, %v907, %v912
  %v917 = vmul.f32 %v644, %v916
  %v918 = vmul.f32 %v645, %v916
  %v919 = vmul.f32 %v646, %v916
  %v920 = vmul.f32 %v647, %v916
  %v921 = vmul.f32 %v648, %v916
  %v922 = vmul.f32 %v649, %v916
  %v923 = vmul.f32 %v650, %v916
  %v924 = vmul.f32 %v651, %v916
  %v925 = vmul.f32 %v652, %v916
  %v926 = vmul.f32 %v653, %v916
  %v927 = vmul.f32 %v654, %v916
  %v928 = vmul.f32 %v655, %v916
  %v929 = vmul.f32 %v656, %v916
  %v930 = vmul.f32 %v657, %v916
  %v931 = vmul.f32 %v658, %v916
  %v932 = vmul.f32 %v659, %v916
  %v933 = vmul.f32 %v660, %v916
  %v934 = vmul.f32 %v661, %v916
  %v935 = vmul.f32 %v662, %v916
  %v936 = vmul.f32 %v663, %v916
  %v937 = vmul.f32 %v664, %v916
  %v938 = vmul.f32 %v665, %v916
  %v939 = vmul.f32 %v666, %v916
  %v940 = vmul.f32 %v667, %v916
  %v941 = vmul.f32 %v668, %v916
  %v942 = vmul.f32 %v669, %v916
  %v943 = vmul.f32 %v670, %v916
  %v944 = vmul.f32 %v671, %v916
  %v945 = vmul.f32 %v672, %v916
  %v946 = vmul.f32 %v673, %v916
  %v947 = vmul.f32 %v674, %v916
  %v948 = vmul.f32 %v675, %v916
  %v949 = vmul.f32 %v676, %v916
  %v950 = vmul.f32 %v677, %v916
  %v951 = vmul.f32 %v678, %v916
  %v952 = vmul.f32 %v679, %v916
  %v953 = vmul.f32 %v680, %v916
  %v954 = vmul.f32 %v681, %v916
  %v955 = vmul.f32 %v682, %v916
  %v956 = vmul.f32 %v683, %v916
  %v957 = vmul.f32 %v684, %v916
  %v958 = vmul.f32 %v685, %v916
  %v959 = vmul.f32 %v686, %v916
  %v960 = vmul.f32 %v687, %v916
  %v961 = vmul.f32 %v688, %v916
  %v962 = vmul.f32 %v689, %v916
  %v963 = vmul.f32 %v690, %v916
  %v964 = vmul.f32 %v691, %v916
  %v965 = vmul.f32 %v692, %v916
  %v966 = vmul.f32 %v693, %v916
  %v967 = vmul.f32 %v694, %v916
  %v968 = vmul.f32 %v695, %v916
  %v969 = vmul.f32 %v696, %v916
  %v970 = vmul.f32 %v697, %v916
  %v971 = vmul.f32 %v698, %v916
  %v972 = vmul.f32 %v699, %v916
  %v973 = vmul.f32 %v700, %v916
  %v974 = vmul.f32 %v701, %v916
  %v975 = vmul.f32 %v702, %v916
  %v976 = vmul.f32 %v703, %v916
  %v977 = vmul.f32 %v704, %v916
  %v978 = vmul.f32 %v705, %v916
  %v979 = vmul.f32 %v706, %v916
  %v980 = vmul.f32 %v707, %v916
  %v981 = vld [vmem:[%s3] sm:$0x1]
  %v983 = vperm.slane %v981, 0
  %v985 = vmul.f32 %v917, %v983
  %v986 = vmul.f32 %v918, %v983
  %v987 = vmul.f32 %v919, %v983
  %v988 = vmul.f32 %v920, %v983
  %v989 = vmul.f32 %v921, %v983
  %v990 = vmul.f32 %v922, %v983
  %v991 = vmul.f32 %v923, %v983
  %v992 = vmul.f32 %v924, %v983
  %v993 = vmul.f32 %v925, %v983
  %v994 = vmul.f32 %v926, %v983
  %v995 = vmul.f32 %v927, %v983
  %v996 = vmul.f32 %v928, %v983
  %v997 = vmul.f32 %v929, %v983
  %v998 = vmul.f32 %v930, %v983
  %v999 = vmul.f32 %v931, %v983
  %v1000 = vmul.f32 %v932, %v983
  %v1001 = vmul.f32 %v933, %v983
  %v1002 = vmul.f32 %v934, %v983
  %v1003 = vmul.f32 %v935, %v983
  %v1004 = vmul.f32 %v936, %v983
  %v1005 = vmul.f32 %v937, %v983
  %v1006 = vmul.f32 %v938, %v983
  %v1007 = vmul.f32 %v939, %v983
  %v1008 = vmul.f32 %v940, %v983
  %v1009 = vmul.f32 %v941, %v983
  %v1010 = vmul.f32 %v942, %v983
  %v1011 = vmul.f32 %v943, %v983
  %v1012 = vmul.f32 %v944, %v983
  %v1013 = vmul.f32 %v945, %v983
  %v1014 = vmul.f32 %v946, %v983
  %v1015 = vmul.f32 %v947, %v983
  %v1016 = vmul.f32 %v948, %v983
  %v1017 = vmul.f32 %v949, %v983
  %v1018 = vmul.f32 %v950, %v983
  %v1019 = vmul.f32 %v951, %v983
  %v1020 = vmul.f32 %v952, %v983
  %v1021 = vmul.f32 %v953, %v983
  %v1022 = vmul.f32 %v954, %v983
  %v1023 = vmul.f32 %v955, %v983
  %v1024 = vmul.f32 %v956, %v983
  %v1025 = vmul.f32 %v957, %v983
  %v1026 = vmul.f32 %v958, %v983
  %v1027 = vmul.f32 %v959, %v983
  %v1028 = vmul.f32 %v960, %v983
  %v1029 = vmul.f32 %v961, %v983
  %v1030 = vmul.f32 %v962, %v983
  %v1031 = vmul.f32 %v963, %v983
  %v1032 = vmul.f32 %v964, %v983
  %v1033 = vmul.f32 %v965, %v983
  %v1034 = vmul.f32 %v966, %v983
  %v1035 = vmul.f32 %v967, %v983
  %v1036 = vmul.f32 %v968, %v983
  %v1037 = vmul.f32 %v969, %v983
  %v1038 = vmul.f32 %v970, %v983
  %v1039 = vmul.f32 %v971, %v983
  %v1040 = vmul.f32 %v972, %v983
  %v1041 = vmul.f32 %v973, %v983
  %v1042 = vmul.f32 %v974, %v983
  %v1043 = vmul.f32 %v975, %v983
  %v1044 = vmul.f32 %v976, %v983
  %v1045 = vmul.f32 %v977, %v983
  %v1046 = vmul.f32 %v978, %v983
  %v1047 = vmul.f32 %v979, %v983
  %v1048 = vmul.f32 %v980, %v983
  %v1049 = vld [vmem:[%s4] sm:$0x1]
  %v1051 = vperm.slane %v1049, 0
  %v1053 = vadd.f32 %v985, %v1051
  %v1054 = vadd.f32 %v986, %v1051
  %v1055 = vadd.f32 %v987, %v1051
  %v1056 = vadd.f32 %v988, %v1051
  %v1057 = vadd.f32 %v989, %v1051
  %v1058 = vadd.f32 %v990, %v1051
  %v1059 = vadd.f32 %v991, %v1051
  %v1060 = vadd.f32 %v992, %v1051
  %v1061 = vadd.f32 %v993, %v1051
  %v1062 = vadd.f32 %v994, %v1051
  %v1063 = vadd.f32 %v995, %v1051
  %v1064 = vadd.f32 %v996, %v1051
  %v1065 = vadd.f32 %v997, %v1051
  %v1066 = vadd.f32 %v998, %v1051
  %v1067 = vadd.f32 %v999, %v1051
  %v1068 = vadd.f32 %v1000, %v1051
  %v1069 = vadd.f32 %v1001, %v1051
  %v1070 = vadd.f32 %v1002, %v1051
  %v1071 = vadd.f32 %v1003, %v1051
  %v1072 = vadd.f32 %v1004, %v1051
  %v1073 = vadd.f32 %v1005, %v1051
  %v1074 = vadd.f32 %v1006, %v1051
  %v1075 = vadd.f32 %v1007, %v1051
  %v1076 = vadd.f32 %v1008, %v1051
  %v1077 = vadd.f32 %v1009, %v1051
  %v1078 = vadd.f32 %v1010, %v1051
  %v1079 = vadd.f32 %v1011, %v1051
  %v1080 = vadd.f32 %v1012, %v1051
  %v1081 = vadd.f32 %v1013, %v1051
  %v1082 = vadd.f32 %v1014, %v1051
  %v1083 = vadd.f32 %v1015, %v1051
  %v1084 = vadd.f32 %v1016, %v1051
  %v1085 = vadd.f32 %v1017, %v1051
  %v1086 = vadd.f32 %v1018, %v1051
  %v1087 = vadd.f32 %v1019, %v1051
  %v1088 = vadd.f32 %v1020, %v1051
  %v1089 = vadd.f32 %v1021, %v1051
  %v1090 = vadd.f32 %v1022, %v1051
  %v1091 = vadd.f32 %v1023, %v1051
  %v1092 = vadd.f32 %v1024, %v1051
  %v1093 = vadd.f32 %v1025, %v1051
  %v1094 = vadd.f32 %v1026, %v1051
  %v1095 = vadd.f32 %v1027, %v1051
  %v1096 = vadd.f32 %v1028, %v1051
  %v1097 = vadd.f32 %v1029, %v1051
  %v1098 = vadd.f32 %v1030, %v1051
  %v1099 = vadd.f32 %v1031, %v1051
  %v1100 = vadd.f32 %v1032, %v1051
  %v1101 = vadd.f32 %v1033, %v1051
  %v1102 = vadd.f32 %v1034, %v1051
  %v1103 = vadd.f32 %v1035, %v1051
  %v1104 = vadd.f32 %v1036, %v1051
  %v1105 = vadd.f32 %v1037, %v1051
  %v1106 = vadd.f32 %v1038, %v1051
  %v1107 = vadd.f32 %v1039, %v1051
  %v1108 = vadd.f32 %v1040, %v1051
  %v1109 = vadd.f32 %v1041, %v1051
  %v1110 = vadd.f32 %v1042, %v1051
  %v1111 = vadd.f32 %v1043, %v1051
  %v1112 = vadd.f32 %v1044, %v1051
  %v1113 = vadd.f32 %v1045, %v1051
  %v1114 = vadd.f32 %v1046, %v1051
  %v1115 = vadd.f32 %v1047, %v1051
  %v1116 = vadd.f32 %v1048, %v1051
  %v1117 = vld [vmem:[%s5] sm:$0xff]
  %v1118 = vld [vmem:[%s5 + $0x8] sm:$0xff]
  %v1119 = vld [vmem:[%s5 + $0x10] sm:$0xff]
  %v1120 = vld [vmem:[%s5 + $0x18] sm:$0xff]
  %v1121 = vld [vmem:[%s5 + $0x20] sm:$0xff]
  %v1122 = vld [vmem:[%s5 + $0x28] sm:$0xff]
  %v1123 = vld [vmem:[%s5 + $0x30] sm:$0xff]
  %v1124 = vld [vmem:[%s5 + $0x38] sm:$0xff]
  %v1125 = vld [vmem:[%s5 + $0x40] sm:$0xff]
  %v1126 = vld [vmem:[%s5 + $0x48] sm:$0xff]
  %v1127 = vld [vmem:[%s5 + $0x50] sm:$0xff]
  %v1128 = vld [vmem:[%s5 + $0x58] sm:$0xff]
  %v1129 = vld [vmem:[%s5 + $0x60] sm:$0xff]
  %v1130 = vld [vmem:[%s5 + $0x68] sm:$0xff]
  %v1131 = vld [vmem:[%s5 + $0x70] sm:$0xff]
  %v1132 = vld [vmem:[%s5 + $0x78] sm:$0xff]
  %v1133 = vld [vmem:[%s5 + $0x80] sm:$0xff]
  %v1134 = vld [vmem:[%s5 + $0x88] sm:$0xff]
  %v1135 = vld [vmem:[%s5 + $0x90] sm:$0xff]
  %v1136 = vld [vmem:[%s5 + $0x98] sm:$0xff]
  %v1137 = vld [vmem:[%s5 + $0xa0] sm:$0xff]
  %v1138 = vld [vmem:[%s5 + $0xa8] sm:$0xff]
  %v1139 = vld [vmem:[%s5 + $0xb0] sm:$0xff]
  %v1140 = vld [vmem:[%s5 + $0xb8] sm:$0xff]
  %v1141 = vld [vmem:[%s5 + $0xc0] sm:$0xff]
  %v1142 = vld [vmem:[%s5 + $0xc8] sm:$0xff]
  %v1143 = vld [vmem:[%s5 + $0xd0] sm:$0xff]
  %v1144 = vld [vmem:[%s5 + $0xd8] sm:$0xff]
  %v1145 = vld [vmem:[%s5 + $0xe0] sm:$0xff]
  %v1146 = vld [vmem:[%s5 + $0xe8] sm:$0xff]
  %v1147 = vld [vmem:[%s5 + $0xf0] sm:$0xff]
  %v1148 = vld [vmem:[%s5 + $0xf8] sm:$0xff]
  %v1149 = vld [vmem:[%s5 + $0x100] sm:$0xff]
  %v1150 = vld [vmem:[%s5 + $0x108] sm:$0xff]
  %v1151 = vld [vmem:[%s5 + $0x110] sm:$0xff]
  %v1152 = vld [vmem:[%s5 + $0x118] sm:$0xff]
  %v1153 = vld [vmem:[%s5 + $0x120] sm:$0xff]
  %v1154 = vld [vmem:[%s5 + $0x128] sm:$0xff]
  %v1155 = vld [vmem:[%s5 + $0x130] sm:$0xff]
  %v1156 = vld [vmem:[%s5 + $0x138] sm:$0xff]
  %v1157 = vld [vmem:[%s5 + $0x140] sm:$0xff]
  %v1158 = vld [vmem:[%s5 + $0x148] sm:$0xff]
  %v1159 = vld [vmem:[%s5 + $0x150] sm:$0xff]
  %v1160 = vld [vmem:[%s5 + $0x158] sm:$0xff]
  %v1161 = vld [vmem:[%s5 + $0x160] sm:$0xff]
  %v1162 = vld [vmem:[%s5 + $0x168] sm:$0xff]
  %v1163 = vld [vmem:[%s5 + $0x170] sm:$0xff]
  %v1164 = vld [vmem:[%s5 + $0x178] sm:$0xff]
  %v1165 = vld [vmem:[%s5 + $0x180] sm:$0xff]
  %v1166 = vld [vmem:[%s5 + $0x188] sm:$0xff]
  %v1167 = vld [vmem:[%s5 + $0x190] sm:$0xff]
  %v1168 = vld [vmem:[%s5 + $0x198] sm:$0xff]
  %v1169 = vld [vmem:[%s5 + $0x1a0] sm:$0xff]
  %v1170 = vld [vmem:[%s5 + $0x1a8] sm:$0xff]
  %v1171 = vld [vmem:[%s5 + $0x1b0] sm:$0xff]
  %v1172 = vld [vmem:[%s5 + $0x1b8] sm:$0xff]
  %v1173 = vld [vmem:[%s5 + $0x1c0] sm:$0xff]
  %v1174 = vld [vmem:[%s5 + $0x1c8] sm:$0xff]
  %v1175 = vld [vmem:[%s5 + $0x1d0] sm:$0xff]
  %v1176 = vld [vmem:[%s5 + $0x1d8] sm:$0xff]
  %v1177 = vld [vmem:[%s5 + $0x1e0] sm:$0xff]
  %v1178 = vld [vmem:[%s5 + $0x1e8] sm:$0xff]
  %v1179 = vld [vmem:[%s5 + $0x1f0] sm:$0xff]
  %v1180 = vld [vmem:[%s5 + $0x1f8] sm:$0xff]
  %v1181 = vadd.f32 %v1053, %v1117
  %v1182 = vadd.f32 %v1054, %v1118
  %v1183 = vadd.f32 %v1055, %v1119
  %v1184 = vadd.f32 %v1056, %v1120
  %v1185 = vadd.f32 %v1057, %v1121
  %v1186 = vadd.f32 %v1058, %v1122
  %v1187 = vadd.f32 %v1059, %v1123
  %v1188 = vadd.f32 %v1060, %v1124
  %v1189 = vadd.f32 %v1061, %v1125
  %v1190 = vadd.f32 %v1062, %v1126
  %v1191 = vadd.f32 %v1063, %v1127
  %v1192 = vadd.f32 %v1064, %v1128
  %v1193 = vadd.f32 %v1065, %v1129
  %v1194 = vadd.f32 %v1066, %v1130
  %v1195 = vadd.f32 %v1067, %v1131
  %v1196 = vadd.f32 %v1068, %v1132
  %v1197 = vadd.f32 %v1069, %v1133
  %v1198 = vadd.f32 %v1070, %v1134
  %v1199 = vadd.f32 %v1071, %v1135
  %v1200 = vadd.f32 %v1072, %v1136
  %v1201 = vadd.f32 %v1073, %v1137
  %v1202 = vadd.f32 %v1074, %v1138
  %v1203 = vadd.f32 %v1075, %v1139
  %v1204 = vadd.f32 %v1076, %v1140
  %v1205 = vadd.f32 %v1077, %v1141
  %v1206 = vadd.f32 %v1078, %v1142
  %v1207 = vadd.f32 %v1079, %v1143
  %v1208 = vadd.f32 %v1080, %v1144
  %v1209 = vadd.f32 %v1081, %v1145
  %v1210 = vadd.f32 %v1082, %v1146
  %v1211 = vadd.f32 %v1083, %v1147
  %v1212 = vadd.f32 %v1084, %v1148
  %v1213 = vadd.f32 %v1085, %v1149
  %v1214 = vadd.f32 %v1086, %v1150
  %v1215 = vadd.f32 %v1087, %v1151
  %v1216 = vadd.f32 %v1088, %v1152
  %v1217 = vadd.f32 %v1089, %v1153
  %v1218 = vadd.f32 %v1090, %v1154
  %v1219 = vadd.f32 %v1091, %v1155
  %v1220 = vadd.f32 %v1092, %v1156
  %v1221 = vadd.f32 %v1093, %v1157
  %v1222 = vadd.f32 %v1094, %v1158
  %v1223 = vadd.f32 %v1095, %v1159
  %v1224 = vadd.f32 %v1096, %v1160
  %v1225 = vadd.f32 %v1097, %v1161
  %v1226 = vadd.f32 %v1098, %v1162
  %v1227 = vadd.f32 %v1099, %v1163
  %v1228 = vadd.f32 %v1100, %v1164
  %v1229 = vadd.f32 %v1101, %v1165
  %v1230 = vadd.f32 %v1102, %v1166
  %v1231 = vadd.f32 %v1103, %v1167
  %v1232 = vadd.f32 %v1104, %v1168
  %v1233 = vadd.f32 %v1105, %v1169
  %v1234 = vadd.f32 %v1106, %v1170
  %v1235 = vadd.f32 %v1107, %v1171
  %v1236 = vadd.f32 %v1108, %v1172
  %v1237 = vadd.f32 %v1109, %v1173
  %v1238 = vadd.f32 %v1110, %v1174
  %v1239 = vadd.f32 %v1111, %v1175
  %v1240 = vadd.f32 %v1112, %v1176
  %v1241 = vadd.f32 %v1113, %v1177
  %v1242 = vadd.f32 %v1114, %v1178
  %v1243 = vadd.f32 %v1115, %v1179
  %v1244 = vadd.f32 %v1116, %v1180
  %v1245 = vmax.f32 %v1181, 0.0
  %v1246 = vmax.f32 %v1182, 0.0
  %v1247 = vmax.f32 %v1183, 0.0
  %v1248 = vmax.f32 %v1184, 0.0
  %v1249 = vmax.f32 %v1185, 0.0
  %v1250 = vmax.f32 %v1186, 0.0
  %v1251 = vmax.f32 %v1187, 0.0
  %v1252 = vmax.f32 %v1188, 0.0
  %v1253 = vmax.f32 %v1189, 0.0
  %v1254 = vmax.f32 %v1190, 0.0
  %v1255 = vmax.f32 %v1191, 0.0
  %v1256 = vmax.f32 %v1192, 0.0
  %v1257 = vmax.f32 %v1193, 0.0
  %v1258 = vmax.f32 %v1194, 0.0
  %v1259 = vmax.f32 %v1195, 0.0
  %v1260 = vmax.f32 %v1196, 0.0
  %v1261 = vmax.f32 %v1197, 0.0
  %v1262 = vmax.f32 %v1198, 0.0
  %v1263 = vmax.f32 %v1199, 0.0
  %v1264 = vmax.f32 %v1200, 0.0
  %v1265 = vmax.f32 %v1201, 0.0
  %v1266 = vmax.f32 %v1202, 0.0
  %v1267 = vmax.f32 %v1203, 0.0
  %v1268 = vmax.f32 %v1204, 0.0
  %v1269 = vmax.f32 %v1205, 0.0
  %v1270 = vmax.f32 %v1206, 0.0
  %v1271 = vmax.f32 %v1207, 0.0
  %v1272 = vmax.f32 %v1208, 0.0
  %v1273 = vmax.f32 %v1209, 0.0
  %v1274 = vmax.f32 %v1210, 0.0
  %v1275 = vmax.f32 %v1211, 0.0
  %v1276 = vmax.f32 %v1212, 0.0
  %v1277 = vmax.f32 %v1213, 0.0
  %v1278 = vmax.f32 %v1214, 0.0
  %v1279 = vmax.f32 %v1215, 0.0
  %v1280 = vmax.f32 %v1216, 0.0
  %v1281 = vmax.f32 %v1217, 0.0
  %v1282 = vmax.f32 %v1218, 0.0
  %v1283 = vmax.f32 %v1219, 0.0
  %v1284 = vmax.f32 %v1220, 0.0
  %v1285 = vmax.f32 %v1221, 0.0
  %v1286 = vmax.f32 %v1222, 0.0
  %v1287 = vmax.f32 %v1223, 0.0
  %v1288 = vmax.f32 %v1224, 0.0
  %v1289 = vmax.f32 %v1225, 0.0
  %v1290 = vmax.f32 %v1226, 0.0
  %v1291 = vmax.f32 %v1227, 0.0
  %v1292 = vmax.f32 %v1228, 0.0
  %v1293 = vmax.f32 %v1229, 0.0
  %v1294 = vmax.f32 %v1230, 0.0
  %v1295 = vmax.f32 %v1231, 0.0
  %v1296 = vmax.f32 %v1232, 0.0
  %v1297 = vmax.f32 %v1233, 0.0
  %v1298 = vmax.f32 %v1234, 0.0
  %v1299 = vmax.f32 %v1235, 0.0
  %v1300 = vmax.f32 %v1236, 0.0
  %v1301 = vmax.f32 %v1237, 0.0
  %v1302 = vmax.f32 %v1238, 0.0
  %v1303 = vmax.f32 %v1239, 0.0
  %v1304 = vmax.f32 %v1240, 0.0
  %v1305 = vmax.f32 %v1241, 0.0
  %v1306 = vmax.f32 %v1242, 0.0
  %v1307 = vmax.f32 %v1243, 0.0
  %v1308 = vmax.f32 %v1244, 0.0
  %1309 = vst.msk [vmem:[%s6] sm:$0xff] %vm502, %v1245
  %1310 = vst.msk [vmem:[%s6 + $0x8] sm:$0xff] %vm502, %v1246
  %1311 = vst.msk [vmem:[%s6 + $0x10] sm:$0xff] %vm502, %v1247
  %1312 = vst.msk [vmem:[%s6 + $0x18] sm:$0xff] %vm502, %v1248
  %1313 = vst.msk [vmem:[%s6 + $0x20] sm:$0xff] %vm502, %v1249
  %1314 = vst.msk [vmem:[%s6 + $0x28] sm:$0xff] %vm502, %v1250
  %1315 = vst.msk [vmem:[%s6 + $0x30] sm:$0xff] %vm502, %v1251
  %1316 = vst.msk [vmem:[%s6 + $0x38] sm:$0xff] %vm502, %v1252
  %1317 = vst.msk [vmem:[%s6 + $0x40] sm:$0xff] %vm502, %v1253
  %1318 = vst.msk [vmem:[%s6 + $0x48] sm:$0xff] %vm502, %v1254
  %1319 = vst.msk [vmem:[%s6 + $0x50] sm:$0xff] %vm502, %v1255
  %1320 = vst.msk [vmem:[%s6 + $0x58] sm:$0xff] %vm502, %v1256
  %1321 = vst.msk [vmem:[%s6 + $0x60] sm:$0xff] %vm502, %v1257
  %1322 = vst.msk [vmem:[%s6 + $0x68] sm:$0xff] %vm502, %v1258
  %1323 = vst.msk [vmem:[%s6 + $0x70] sm:$0xff] %vm502, %v1259
  %1324 = vst.msk [vmem:[%s6 + $0x78] sm:$0xff] %vm502, %v1260
  %1325 = vst.msk [vmem:[%s6 + $0x80] sm:$0xff] %vm502, %v1261
  %1326 = vst.msk [vmem:[%s6 + $0x88] sm:$0xff] %vm502, %v1262
  %1327 = vst.msk [vmem:[%s6 + $0x90] sm:$0xff] %vm502, %v1263
  %1328 = vst.msk [vmem:[%s6 + $0x98] sm:$0xff] %vm502, %v1264
  %1329 = vst.msk [vmem:[%s6 + $0xa0] sm:$0xff] %vm502, %v1265
  %1330 = vst.msk [vmem:[%s6 + $0xa8] sm:$0xff] %vm502, %v1266
  %1331 = vst.msk [vmem:[%s6 + $0xb0] sm:$0xff] %vm502, %v1267
  %1332 = vst.msk [vmem:[%s6 + $0xb8] sm:$0xff] %vm502, %v1268
  %1333 = vst.msk [vmem:[%s6 + $0xc0] sm:$0xff] %vm502, %v1269
  %1334 = vst.msk [vmem:[%s6 + $0xc8] sm:$0xff] %vm502, %v1270
  %1335 = vst.msk [vmem:[%s6 + $0xd0] sm:$0xff] %vm502, %v1271
  %1336 = vst.msk [vmem:[%s6 + $0xd8] sm:$0xff] %vm502, %v1272
  %1337 = vst.msk [vmem:[%s6 + $0xe0] sm:$0xff] %vm502, %v1273
  %1338 = vst.msk [vmem:[%s6 + $0xe8] sm:$0xff] %vm502, %v1274
  %1339 = vst.msk [vmem:[%s6 + $0xf0] sm:$0xff] %vm502, %v1275
  %1340 = vst.msk [vmem:[%s6 + $0xf8] sm:$0xff] %vm502, %v1276
  %1341 = vst.msk [vmem:[%s6 + $0x100] sm:$0xff] %vm502, %v1277
  %1342 = vst.msk [vmem:[%s6 + $0x108] sm:$0xff] %vm502, %v1278
  %1343 = vst.msk [vmem:[%s6 + $0x110] sm:$0xff] %vm502, %v1279
  %1344 = vst.msk [vmem:[%s6 + $0x118] sm:$0xff] %vm502, %v1280
  %1345 = vst.msk [vmem:[%s6 + $0x120] sm:$0xff] %vm502, %v1281
  %1346 = vst.msk [vmem:[%s6 + $0x128] sm:$0xff] %vm502, %v1282
  %1347 = vst.msk [vmem:[%s6 + $0x130] sm:$0xff] %vm502, %v1283
  %1348 = vst.msk [vmem:[%s6 + $0x138] sm:$0xff] %vm502, %v1284
  %1349 = vst.msk [vmem:[%s6 + $0x140] sm:$0xff] %vm502, %v1285
  %1350 = vst.msk [vmem:[%s6 + $0x148] sm:$0xff] %vm502, %v1286
  %1351 = vst.msk [vmem:[%s6 + $0x150] sm:$0xff] %vm502, %v1287
  %1352 = vst.msk [vmem:[%s6 + $0x158] sm:$0xff] %vm502, %v1288
  %1353 = vst.msk [vmem:[%s6 + $0x160] sm:$0xff] %vm502, %v1289
  %1354 = vst.msk [vmem:[%s6 + $0x168] sm:$0xff] %vm502, %v1290
  %1355 = vst.msk [vmem:[%s6 + $0x170] sm:$0xff] %vm502, %v1291
  %1356 = vst.msk [vmem:[%s6 + $0x178] sm:$0xff] %vm502, %v1292
  %1357 = vst.msk [vmem:[%s6 + $0x180] sm:$0xff] %vm502, %v1293
  %1358 = vst.msk [vmem:[%s6 + $0x188] sm:$0xff] %vm502, %v1294
  %1359 = vst.msk [vmem:[%s6 + $0x190] sm:$0xff] %vm502, %v1295
  %1360 = vst.msk [vmem:[%s6 + $0x198] sm:$0xff] %vm502, %v1296
  %1361 = vst.msk [vmem:[%s6 + $0x1a0] sm:$0xff] %vm502, %v1297
  %1362 = vst.msk [vmem:[%s6 + $0x1a8] sm:$0xff] %vm502, %v1298
  %1363 = vst.msk [vmem:[%s6 + $0x1b0] sm:$0xff] %vm502, %v1299
  %1364 = vst.msk [vmem:[%s6 + $0x1b8] sm:$0xff] %vm502, %v1300
  %1365 = vst.msk [vmem:[%s6 + $0x1c0] sm:$0xff] %vm502, %v1301
  %1366 = vst.msk [vmem:[%s6 + $0x1c8] sm:$0xff] %vm502, %v1302
  %1367 = vst.msk [vmem:[%s6 + $0x1d0] sm:$0xff] %vm502, %v1303
  %1368 = vst.msk [vmem:[%s6 + $0x1d8] sm:$0xff] %vm502, %v1304
  %1369 = vst.msk [vmem:[%s6 + $0x1e0] sm:$0xff] %vm502, %v1305
  %1370 = vst.msk [vmem:[%s6 + $0x1e8] sm:$0xff] %vm502, %v1306
  %1371 = vst.msk [vmem:[%s6 + $0x1f0] sm:$0xff] %vm502, %v1307
  %1372 = vst.msk [vmem:[%s6 + $0x1f8] sm:$0xff] %vm502, %v1308
  // Predicated region
  $region26: #{encoder_forward_nchw.11} parent=0 // pred_check
    _
  $region27: #{encoder_forward_nchw.11} parent=0 // pred_check_branch
    %1374 = sbr.rel (0) target = $region29
  $region28: #{encoder_forward_nchw.11} parent=0 // pred_region
    _
  $region29: #{encoder_forward_nchw.11} parent=0 // pred_fallthru
    _
  // Predicated region
  $region30: #{encoder_forward_nchw.11} parent=0 // pred_check
    _
  $region31: #{encoder_forward_nchw.11} parent=0 // pred_check_branch
    %1376 = sbr.rel (0) target = $region33
  $region32: #{encoder_forward_nchw.11} parent=0 // pred_region
    _
  $region33: #{encoder_forward_nchw.11} parent=0 // pred_fallthru
    _

// kernel: encoder_forward_nchw.12
$region0: #{encoder_forward_nchw.12}
  #allocation0 [shape = 'u32[]', space=smem, size = 0x4, offset = 0x4, fixed_abs, tag = 'smem constant byte address 0x4 - core index']
  #allocation1 [shape = 'u32[72,128]{1,0:T(1,128)}', space=vmem, size = 0x9000, scoped, tag = 'internal scratch']
  %s0 = inlined_call_operand.vmem [shape: f32[128,72], index: 0, kind: input, shape index: {}]
  %s1 = inlined_call_operand.vmem [shape: f32[72,16], index: 1, kind: input, shape index: {}]
  %s2 = inlined_call_operand.vmem [shape: f32[1,16], index: 2, kind: input, shape index: {}]
  %s3 = inlined_call_operand.vmem [shape: f32[1,16], index: 3, kind: input, shape index: {}]
  %s4 = inlined_call_operand.vmem [shape: f32[1,16], index: 4, kind: input, shape index: {}]
  %s5 = inlined_call_operand.vmem [shape: f32[128,16], index: 5, kind: output, shape index: {}]
  %s6 = sld [smem:[#allocation0]]
  $region30: #{encoder_forward_nchw.12} parent=0
    _
  %s8 = ssub.s32 1, %s6
  %s9 = scalar_select 0, %s8, %s6
  // Predicated region
  $region2: #{encoder_forward_nchw.12} parent=0 // pred_check
    _
  $region3: #{encoder_forward_nchw.12} parent=0 // pred_check_branch
    %11 = sbr.rel (0) target = $region5
  $region4: #{encoder_forward_nchw.12} parent=0 // pred_region
    _
  $region5: #{encoder_forward_nchw.12} parent=0 // pred_fallthru
    _
  // Predicated region
  $region6: #{encoder_forward_nchw.12} parent=0 // pred_check
    _
  $region7: #{encoder_forward_nchw.12} parent=0 // pred_check_branch
    %13 = sbr.rel (0) target = $region9
  $region8: #{encoder_forward_nchw.12} parent=0 // pred_region
    _
  $region9: #{encoder_forward_nchw.12} parent=0 // pred_fallthru
    _
  // Predicated region
  $region10: #{encoder_forward_nchw.12} parent=0 // pred_check
    _
  $region11: #{encoder_forward_nchw.12} parent=0 // pred_check_branch
    %15 = sbr.rel (0) target = $region13
  $region12: #{encoder_forward_nchw.12} parent=0 // pred_region
    _
  $region13: #{encoder_forward_nchw.12} parent=0 // pred_fallthru
    _
  // Predicated region
  $region14: #{encoder_forward_nchw.12} parent=0 // pred_check
    _
  $region15: #{encoder_forward_nchw.12} parent=0 // pred_check_branch
    %17 = sbr.rel (0) target = $region17
  $region16: #{encoder_forward_nchw.12} parent=0 // pred_region
    _
  $region17: #{encoder_forward_nchw.12} parent=0 // pred_fallthru
    _
  // Predicated region
  $region18: #{encoder_forward_nchw.12} parent=0 // pred_check
    _
  $region19: #{encoder_forward_nchw.12} parent=0 // pred_check_branch
    %19 = sbr.rel (0) target = $region21
  $region20: #{encoder_forward_nchw.12} parent=0 // pred_region
    _
  $region21: #{encoder_forward_nchw.12} parent=0 // pred_fallthru
    _
  %v20 = vld [vmem:[%s0] sm:$0xff]
  %v21 = vld [vmem:[%s0 + $0x8] sm:$0xff]
  %v22 = vld [vmem:[%s0 + $0x10] sm:$0xff]
  %v23 = vld [vmem:[%s0 + $0x18] sm:$0xff]
  %v24 = vld [vmem:[%s0 + $0x20] sm:$0xff]
  %v25 = vld [vmem:[%s0 + $0x28] sm:$0xff]
  %v26 = vld [vmem:[%s0 + $0x30] sm:$0xff]
  %v27 = vld [vmem:[%s0 + $0x38] sm:$0xff]
  %v28 = vld [vmem:[%s0 + $0x40] sm:$0xff]
  %v29 = vld [vmem:[%s0 + $0x48] sm:$0xff]
  %v30 = vld [vmem:[%s0 + $0x50] sm:$0xff]
  %v31 = vld [vmem:[%s0 + $0x58] sm:$0xff]
  %v32 = vld [vmem:[%s0 + $0x60] sm:$0xff]
  %v33 = vld [vmem:[%s0 + $0x68] sm:$0xff]
  %v34 = vld [vmem:[%s0 + $0x70] sm:$0xff]
  %v35 = vld [vmem:[%s0 + $0x78] sm:$0xff]
  %v36 = vld [vmem:[%s1] sm:$0xff]
  %v37 = vld [vmem:[%s1 + $0x8] sm:$0xff]
  %v38 = vld [vmem:[%s1 + $0x10] sm:$0xff]
  %v39 = vld [vmem:[%s1 + $0x18] sm:$0xff]
  %v40 = vld [vmem:[%s1 + $0x20] sm:$0xff]
  %v41 = vld [vmem:[%s1 + $0x28] sm:$0xff]
  %v42 = vld [vmem:[%s1 + $0x30] sm:$0xff]
  %v43 = vld [vmem:[%s1 + $0x38] sm:$0xff]
  %v44 = vld [vmem:[%s1 + $0x40] sm:$0xff]
  %v45 = vld [vmem:[%s2] sm:$0x1]
  %v47 = vperm.slane %v45, 0
  %vm49 = vcmask 588800
  %v51 = vsel %vm49, %v20, 0
  %v54 = vsel %vm49, %v21, 0
  %v57 = vsel %vm49, %v22, 0
  %v60 = vsel %vm49, %v23, 0
  %v63 = vsel %vm49, %v24, 0
  %v66 = vsel %vm49, %v25, 0
  %v69 = vsel %vm49, %v26, 0
  %v72 = vsel %vm49, %v27, 0
  %v75 = vsel %vm49, %v28, 0
  %v78 = vsel %vm49, %v29, 0
  %v81 = vsel %vm49, %v30, 0
  %v84 = vsel %vm49, %v31, 0
  %v87 = vsel %vm49, %v32, 0
  %v90 = vsel %vm49, %v33, 0
  %v93 = vsel %vm49, %v34, 0
  %v96 = vsel %vm49, %v35, 0
  %98 = vmatpush.msra.mxu0 0.0
  %99 = vmatpush.msra.mxu0 0.0
  %100 = vmatpush.msra.mxu0 0.0
  %101 = vmatpush.msra.mxu0 0.0
  %102 = vmatpush.msra.mxu0 0.0
  %103 = vmatpush.msra.mxu0 0.0
  %104 = vmatpush.msra.mxu0 0.0
  %105 = vmatpush.msra.mxu0 %v44
  %106 = vmatpush.msra.mxu0 %v43
  %107 = vmatpush.msra.mxu0 %v42
  %108 = vmatpush.msra.mxu0 %v41
  %109 = vmatpush.msra.mxu0 %v40
  %110 = vmatpush.msra.mxu0 %v39
  %111 = vmatpush.msra.mxu0 %v38
  %112 = vmatpush.msra.mxu0 %v37
  %113 = vmatpush.msra.mxu0 %v36
  %114 = vmatmul.f32.gmra.mxu0 %v51
  %v115 = vpop.f32.mrf.mxu0
  %v116 = vadd.f32 %v47, %v115
  %117 = vmatmul.f32.gmra.mxu0 %v54
  %v118 = vpop.f32.mrf.mxu0
  %v119 = vadd.f32 %v47, %v118
  %120 = vmatmul.f32.gmra.mxu0 %v57
  %v121 = vpop.f32.mrf.mxu0
  %v122 = vadd.f32 %v47, %v121
  %123 = vmatmul.f32.gmra.mxu0 %v60
  %v124 = vpop.f32.mrf.mxu0
  %v125 = vadd.f32 %v47, %v124
  %126 = vmatmul.f32.gmra.mxu0 %v63
  %v127 = vpop.f32.mrf.mxu0
  %v128 = vadd.f32 %v47, %v127
  %129 = vmatmul.f32.gmra.mxu0 %v66
  %v130 = vpop.f32.mrf.mxu0
  %v131 = vadd.f32 %v47, %v130
  %132 = vmatmul.f32.gmra.mxu0 %v69
  %v133 = vpop.f32.mrf.mxu0
  %v134 = vadd.f32 %v47, %v133
  %135 = vmatmul.f32.gmra.mxu0 %v72
  %v136 = vpop.f32.mrf.mxu0
  %v137 = vadd.f32 %v47, %v136
  %138 = vmatmul.f32.gmra.mxu0 %v75
  %v139 = vpop.f32.mrf.mxu0
  %v140 = vadd.f32 %v47, %v139
  %141 = vmatmul.f32.gmra.mxu0 %v78
  %v142 = vpop.f32.mrf.mxu0
  %v143 = vadd.f32 %v47, %v142
  %144 = vmatmul.f32.gmra.mxu0 %v81
  %v145 = vpop.f32.mrf.mxu0
  %v146 = vadd.f32 %v47, %v145
  %147 = vmatmul.f32.gmra.mxu0 %v84
  %v148 = vpop.f32.mrf.mxu0
  %v149 = vadd.f32 %v47, %v148
  %150 = vmatmul.f32.gmra.mxu0 %v87
  %v151 = vpop.f32.mrf.mxu0
  %v152 = vadd.f32 %v47, %v151
  %153 = vmatmul.f32.gmra.mxu0 %v90
  %v154 = vpop.f32.mrf.mxu0
  %v155 = vadd.f32 %v47, %v154
  %156 = vmatmul.f32.gmra.mxu0 %v93
  %v157 = vpop.f32.mrf.mxu0
  %v158 = vadd.f32 %v47, %v157
  %159 = vmatmul.f32.gmra.mxu0 %v96
  %v160 = vpop.f32.mrf.mxu0
  %v161 = vadd.f32 %v47, %v160
  %162 = vdwg.mxu0
  %vm163 = vcmask 130048
  %v164 = vsel %vm163, %v116, 0.0
  %v165 = vsel %vm163, %v119, 0.0
  %v166 = vadd.f32 %v164, %v165
  %v167 = vsel %vm163, %v122, 0.0
  %v168 = vadd.f32 %v166, %v167
  %v169 = vsel %vm163, %v125, 0.0
  %v170 = vadd.f32 %v168, %v169
  %v171 = vsel %vm163, %v128, 0.0
  %v172 = vadd.f32 %v170, %v171
  %v173 = vsel %vm163, %v131, 0.0
  %v174 = vadd.f32 %v172, %v173
  %v175 = vsel %vm163, %v134, 0.0
  %v176 = vadd.f32 %v174, %v175
  %v177 = vsel %vm163, %v137, 0.0
  %v178 = vadd.f32 %v176, %v177
  %v179 = vsel %vm163, %v140, 0.0
  %v180 = vadd.f32 %v178, %v179
  %v181 = vsel %vm163, %v143, 0.0
  %v182 = vadd.f32 %v180, %v181
  %v183 = vsel %vm163, %v146, 0.0
  %v184 = vadd.f32 %v182, %v183
  %v185 = vsel %vm163, %v149, 0.0
  %v186 = vadd.f32 %v184, %v185
  %v187 = vsel %vm163, %v152, 0.0
  %v188 = vadd.f32 %v186, %v187
  %v189 = vsel %vm163, %v155, 0.0
  %v190 = vadd.f32 %v188, %v189
  %v191 = vsel %vm163, %v158, 0.0
  %v192 = vadd.f32 %v190, %v191
  %v193 = vsel %vm163, %v161, 0.0
  %v194 = vadd.f32 %v192, %v193
  %v195 = vrot.slane %v194, 4
  %v196 = vadd.f32 %v194, %v195
  %v197 = vrot.slane %v196, 2
  %v198 = vadd.f32 %v196, %v197
  %v199 = vrot.slane %v198, 1
  %v200 = vadd.f32 %v198, %v199
  %v201 = vrcp.pop 128.0
  %v202 = vmul.f32 128.0, %v201
  %v203 = vsub.f32 1.0, %v202
  %v204 = vmul.f32 %v201, %v203
  %v205 = vadd.f32 %v201, %v204
  %vm206 = vweird.f32 %v201
  %v207 = vsel %vm206, %v201, %v205
  %v208 = vmul.f32 %v200, %v207
  %v209 = vsub.f32 %v116, %v208
  %v210 = vsub.f32 %v119, %v208
  %v211 = vsub.f32 %v122, %v208
  %v212 = vsub.f32 %v125, %v208
  %v213 = vsub.f32 %v128, %v208
  %v214 = vsub.f32 %v131, %v208
  %v215 = vsub.f32 %v134, %v208
  %v216 = vsub.f32 %v137, %v208
  %v217 = vsub.f32 %v140, %v208
  %v218 = vsub.f32 %v143, %v208
  %v219 = vsub.f32 %v146, %v208
  %v220 = vsub.f32 %v149, %v208
  %v221 = vsub.f32 %v152, %v208
  %v222 = vsub.f32 %v155, %v208
  %v223 = vsub.f32 %v158, %v208
  %v224 = vsub.f32 %v161, %v208
  %v225 = vmul.f32 %v209, %v209
  %v226 = vmul.f32 %v210, %v210
  %v227 = vmul.f32 %v211, %v211
  %v228 = vmul.f32 %v212, %v212
  %v229 = vmul.f32 %v213, %v213
  %v230 = vmul.f32 %v214, %v214
  %v231 = vmul.f32 %v215, %v215
  %v232 = vmul.f32 %v216, %v216
  %v233 = vmul.f32 %v217, %v217
  %v234 = vmul.f32 %v218, %v218
  %v235 = vmul.f32 %v219, %v219
  %v236 = vmul.f32 %v220, %v220
  %v237 = vmul.f32 %v221, %v221
  %v238 = vmul.f32 %v222, %v222
  %v239 = vmul.f32 %v223, %v223
  %v240 = vmul.f32 %v224, %v224
  %v241 = vsel %vm163, %v225, 0.0
  %v242 = vsel %vm163, %v226, 0.0
  %v243 = vadd.f32 %v241, %v242
  %v244 = vsel %vm163, %v227, 0.0
  %v245 = vadd.f32 %v243, %v244
  %v246 = vsel %vm163, %v228, 0.0
  %v247 = vadd.f32 %v245, %v246
  %v248 = vsel %vm163, %v229, 0.0
  %v249 = vadd.f32 %v247, %v248
  %v250 = vsel %vm163, %v230, 0.0
  %v251 = vadd.f32 %v249, %v250
  %v252 = vsel %vm163, %v231, 0.0
  %v253 = vadd.f32 %v251, %v252
  %v254 = vsel %vm163, %v232, 0.0
  %v255 = vadd.f32 %v253, %v254
  %v256 = vsel %vm163, %v233, 0.0
  %v257 = vadd.f32 %v255, %v256
  %v258 = vsel %vm163, %v234, 0.0
  %v259 = vadd.f32 %v257, %v258
  %v260 = vsel %vm163, %v235, 0.0
  %v261 = vadd.f32 %v259, %v260
  %v262 = vsel %vm163, %v236, 0.0
  %v263 = vadd.f32 %v261, %v262
  %v264 = vsel %vm163, %v237, 0.0
  %v265 = vadd.f32 %v263, %v264
  %v266 = vsel %vm163, %v238, 0.0
  %v267 = vadd.f32 %v265, %v266
  %v268 = vsel %vm163, %v239, 0.0
  %v269 = vadd.f32 %v267, %v268
  %v270 = vsel %vm163, %v240, 0.0
  %v271 = vadd.f32 %v269, %v270
  %v272 = vrot.slane %v271, 4
  %v273 = vadd.f32 %v271, %v272
  %v274 = vrot.slane %v273, 2
  %v275 = vadd.f32 %v273, %v274
  %v276 = vrot.slane %v275, 1
  %v277 = vadd.f32 %v275, %v276
  %v278 = vmul.f32 %v277, %v207
  %v279 = vadd.f32 %v278, 1e-05
  %v280 = vrsqrt.pop %v279
  %v281 = vmul.f32 %v280, %v279
  %v282 = vmul.f32 %v281, %v280
  %v283 = vmul.f32 0.5, %v282
  %v284 = vsub.f32 1.5, %v283
  %v285 = vmul.f32 %v280, %v284
  %vm286 = vweird.f32 %v279
  %vm287 = vweird.f32 %v280
  %vm288 = vmor %vm286, %vm287
  %v289 = vsel %vm288, %v280, %v285
  %v290 = vmul.f32 %v209, %v289
  %v291 = vmul.f32 %v210, %v289
  %v292 = vmul.f32 %v211, %v289
  %v293 = vmul.f32 %v212, %v289
  %v294 = vmul.f32 %v213, %v289
  %v295 = vmul.f32 %v214, %v289
  %v296 = vmul.f32 %v215, %v289
  %v297 = vmul.f32 %v216, %v289
  %v298 = vmul.f32 %v217, %v289
  %v299 = vmul.f32 %v218, %v289
  %v300 = vmul.f32 %v219, %v289
  %v301 = vmul.f32 %v220, %v289
  %v302 = vmul.f32 %v221, %v289
  %v303 = vmul.f32 %v222, %v289
  %v304 = vmul.f32 %v223, %v289
  %v305 = vmul.f32 %v224, %v289
  %v306 = vld [vmem:[%s3] sm:$0x1]
  %v308 = vperm.slane %v306, 0
  %v310 = vmul.f32 %v290, %v308
  %v311 = vmul.f32 %v291, %v308
  %v312 = vmul.f32 %v292, %v308
  %v313 = vmul.f32 %v293, %v308
  %v314 = vmul.f32 %v294, %v308
  %v315 = vmul.f32 %v295, %v308
  %v316 = vmul.f32 %v296, %v308
  %v317 = vmul.f32 %v297, %v308
  %v318 = vmul.f32 %v298, %v308
  %v319 = vmul.f32 %v299, %v308
  %v320 = vmul.f32 %v300, %v308
  %v321 = vmul.f32 %v301, %v308
  %v322 = vmul.f32 %v302, %v308
  %v323 = vmul.f32 %v303, %v308
  %v324 = vmul.f32 %v304, %v308
  %v325 = vmul.f32 %v305, %v308
  %v326 = vld [vmem:[%s4] sm:$0x1]
  %v328 = vperm.slane %v326, 0
  %v330 = vadd.f32 %v310, %v328
  %v331 = vadd.f32 %v311, %v328
  %v332 = vadd.f32 %v312, %v328
  %v333 = vadd.f32 %v313, %v328
  %v334 = vadd.f32 %v314, %v328
  %v335 = vadd.f32 %v315, %v328
  %v336 = vadd.f32 %v316, %v328
  %v337 = vadd.f32 %v317, %v328
  %v338 = vadd.f32 %v318, %v328
  %v339 = vadd.f32 %v319, %v328
  %v340 = vadd.f32 %v320, %v328
  %v341 = vadd.f32 %v321, %v328
  %v342 = vadd.f32 %v322, %v328
  %v343 = vadd.f32 %v323, %v328
  %v344 = vadd.f32 %v324, %v328
  %v345 = vadd.f32 %v325, %v328
  %v346 = vmax.f32 %v330, 0.0
  %v347 = vmax.f32 %v331, 0.0
  %v348 = vmax.f32 %v332, 0.0
  %v349 = vmax.f32 %v333, 0.0
  %v350 = vmax.f32 %v334, 0.0
  %v351 = vmax.f32 %v335, 0.0
  %v352 = vmax.f32 %v336, 0.0
  %v353 = vmax.f32 %v337, 0.0
  %v354 = vmax.f32 %v338, 0.0
  %v355 = vmax.f32 %v339, 0.0
  %v356 = vmax.f32 %v340, 0.0
  %v357 = vmax.f32 %v341, 0.0
  %v358 = vmax.f32 %v342, 0.0
  %v359 = vmax.f32 %v343, 0.0
  %v360 = vmax.f32 %v344, 0.0
  %v361 = vmax.f32 %v345, 0.0
  %362 = vst.msk [vmem:[%s5] sm:$0xff] %vm163, %v346
  %363 = vst.msk [vmem:[%s5 + $0x8] sm:$0xff] %vm163, %v347
  %364 = vst.msk [vmem:[%s5 + $0x10] sm:$0xff] %vm163, %v348
  %365 = vst.msk [vmem:[%s5 + $0x18] sm:$0xff] %vm163, %v349
  %366 = vst.msk [vmem:[%s5 + $0x20] sm:$0xff] %vm163, %v350
  %367 = vst.msk [vmem:[%s5 + $0x28] sm:$0xff] %vm163, %v351
  %368 = vst.msk [vmem:[%s5 + $0x30] sm:$0xff] %vm163, %v352
  %369 = vst.msk [vmem:[%s5 + $0x38] sm:$0xff] %vm163, %v353
  %370 = vst.msk [vmem:[%s5 + $0x40] sm:$0xff] %vm163, %v354
  %371 = vst.msk [vmem:[%s5 + $0x48] sm:$0xff] %vm163, %v355
  %372 = vst.msk [vmem:[%s5 + $0x50] sm:$0xff] %vm163, %v356
  %373 = vst.msk [vmem:[%s5 + $0x58] sm:$0xff] %vm163, %v357
  %374 = vst.msk [vmem:[%s5 + $0x60] sm:$0xff] %vm163, %v358
  %375 = vst.msk [vmem:[%s5 + $0x68] sm:$0xff] %vm163, %v359
  %376 = vst.msk [vmem:[%s5 + $0x70] sm:$0xff] %vm163, %v360
  %377 = vst.msk [vmem:[%s5 + $0x78] sm:$0xff] %vm163, %v361
  // Predicated region
  $region22: #{encoder_forward_nchw.12} parent=0 // pred_check
    _
  $region23: #{encoder_forward_nchw.12} parent=0 // pred_check_branch
    %379 = sbr.rel (0) target = $region25
  $region24: #{encoder_forward_nchw.12} parent=0 // pred_region
    _
  $region25: #{encoder_forward_nchw.12} parent=0 // pred_fallthru
    _
  // Predicated region
  $region26: #{encoder_forward_nchw.12} parent=0 // pred_check
    _
  $region27: #{encoder_forward_nchw.12} parent=0 // pred_check_branch
    %381 = sbr.rel (0) target = $region29
  $region28: #{encoder_forward_nchw.12} parent=0 // pred_region
    _
  $region29: #{encoder_forward_nchw.12} parent=0 // pred_fallthru
    _

// kernel: encoder_forward_nchw.13
$region0: #{encoder_forward_nchw.13}
  #allocation0 [shape = 'u32[]', space=smem, size = 0x4, offset = 0x4, fixed_abs, tag = 'smem constant byte address 0x4 - core index']
  #allocation1 [shape = 'u32[72,128]{1,0:T(1,128)}', space=vmem, size = 0x9000, scoped, tag = 'internal scratch']
  %s0 = inlined_call_operand.vmem [shape: f32[128,144], index: 0, kind: input, shape index: {}]
  %s1 = inlined_call_operand.vmem [shape: f32[144,16], index: 1, kind: input, shape index: {}]
  %s2 = inlined_call_operand.vmem [shape: f32[1,16], index: 2, kind: input, shape index: {}]
  %s3 = inlined_call_operand.vmem [shape: f32[1,16], index: 3, kind: input, shape index: {}]
  %s4 = inlined_call_operand.vmem [shape: f32[1,16], index: 4, kind: input, shape index: {}]
  %s5 = inlined_call_operand.vmem [shape: f32[128,16], index: 5, kind: output, shape index: {}]
  %s6 = sld [smem:[#allocation0]]
  $region30: #{encoder_forward_nchw.13} parent=0
    _
  %s8 = ssub.s32 1, %s6
  %s9 = scalar_select 0, %s8, %s6
  // Predicated region
  $region2: #{encoder_forward_nchw.13} parent=0 // pred_check
    _
  $region3: #{encoder_forward_nchw.13} parent=0 // pred_check_branch
    %11 = sbr.rel (0) target = $region5
  $region4: #{encoder_forward_nchw.13} parent=0 // pred_region
    _
  $region5: #{encoder_forward_nchw.13} parent=0 // pred_fallthru
    _
  // Predicated region
  $region6: #{encoder_forward_nchw.13} parent=0 // pred_check
    _
  $region7: #{encoder_forward_nchw.13} parent=0 // pred_check_branch
    %13 = sbr.rel (0) target = $region9
  $region8: #{encoder_forward_nchw.13} parent=0 // pred_region
    _
  $region9: #{encoder_forward_nchw.13} parent=0 // pred_fallthru
    _
  // Predicated region
  $region10: #{encoder_forward_nchw.13} parent=0 // pred_check
    _
  $region11: #{encoder_forward_nchw.13} parent=0 // pred_check_branch
    %15 = sbr.rel (0) target = $region13
  $region12: #{encoder_forward_nchw.13} parent=0 // pred_region
    _
  $region13: #{encoder_forward_nchw.13} parent=0 // pred_fallthru
    _
  // Predicated region
  $region14: #{encoder_forward_nchw.13} parent=0 // pred_check
    _
  $region15: #{encoder_forward_nchw.13} parent=0 // pred_check_branch
    %17 = sbr.rel (0) target = $region17
  $region16: #{encoder_forward_nchw.13} parent=0 // pred_region
    _
  $region17: #{encoder_forward_nchw.13} parent=0 // pred_fallthru
    _
  // Predicated region
  $region18: #{encoder_forward_nchw.13} parent=0 // pred_check
    _
  $region19: #{encoder_forward_nchw.13} parent=0 // pred_check_branch
    %19 = sbr.rel (0) target = $region21
  $region20: #{encoder_forward_nchw.13} parent=0 // pred_region
    _
  $region21: #{encoder_forward_nchw.13} parent=0 // pred_fallthru
    _
  %v20 = vld [vmem:[%s0] sm:$0xff]
  %v21 = vld [vmem:[%s0 + $0x8] sm:$0xff]
  %v22 = vld [vmem:[%s0 + $0x10] sm:$0xff]
  %v23 = vld [vmem:[%s0 + $0x18] sm:$0xff]
  %v24 = vld [vmem:[%s0 + $0x20] sm:$0xff]
  %v25 = vld [vmem:[%s0 + $0x28] sm:$0xff]
  %v26 = vld [vmem:[%s0 + $0x30] sm:$0xff]
  %v27 = vld [vmem:[%s0 + $0x38] sm:$0xff]
  %v28 = vld [vmem:[%s0 + $0x40] sm:$0xff]
  %v29 = vld [vmem:[%s0 + $0x48] sm:$0xff]
  %v30 = vld [vmem:[%s0 + $0x50] sm:$0xff]
  %v31 = vld [vmem:[%s0 + $0x58] sm:$0xff]
  %v32 = vld [vmem:[%s0 + $0x60] sm:$0xff]
  %v33 = vld [vmem:[%s0 + $0x68] sm:$0xff]
  %v34 = vld [vmem:[%s0 + $0x70] sm:$0xff]
  %v35 = vld [vmem:[%s0 + $0x78] sm:$0xff]
  %v36 = vld [vmem:[%s0 + $0x80] sm:$0xff]
  %v37 = vld [vmem:[%s0 + $0x88] sm:$0xff]
  %v38 = vld [vmem:[%s0 + $0x90] sm:$0xff]
  %v39 = vld [vmem:[%s0 + $0x98] sm:$0xff]
  %v40 = vld [vmem:[%s0 + $0xa0] sm:$0xff]
  %v41 = vld [vmem:[%s0 + $0xa8] sm:$0xff]
  %v42 = vld [vmem:[%s0 + $0xb0] sm:$0xff]
  %v43 = vld [vmem:[%s0 + $0xb8] sm:$0xff]
  %v44 = vld [vmem:[%s0 + $0xc0] sm:$0xff]
  %v45 = vld [vmem:[%s0 + $0xc8] sm:$0xff]
  %v46 = vld [vmem:[%s0 + $0xd0] sm:$0xff]
  %v47 = vld [vmem:[%s0 + $0xd8] sm:$0xff]
  %v48 = vld [vmem:[%s0 + $0xe0] sm:$0xff]
  %v49 = vld [vmem:[%s0 + $0xe8] sm:$0xff]
  %v50 = vld [vmem:[%s0 + $0xf0] sm:$0xff]
  %v51 = vld [vmem:[%s0 + $0xf8] sm:$0xff]
  %v52 = vld [vmem:[%s1] sm:$0xff]
  %v53 = vld [vmem:[%s1 + $0x8] sm:$0xff]
  %v54 = vld [vmem:[%s1 + $0x10] sm:$0xff]
  %v55 = vld [vmem:[%s1 + $0x18] sm:$0xff]
  %v56 = vld [vmem:[%s1 + $0x20] sm:$0xff]
  %v57 = vld [vmem:[%s1 + $0x28] sm:$0xff]
  %v58 = vld [vmem:[%s1 + $0x30] sm:$0xff]
  %v59 = vld [vmem:[%s1 + $0x38] sm:$0xff]
  %v60 = vld [vmem:[%s1 + $0x40] sm:$0xff]
  %v61 = vld [vmem:[%s1 + $0x48] sm:$0xff]
  %v62 = vld [vmem:[%s1 + $0x50] sm:$0xff]
  %v63 = vld [vmem:[%s1 + $0x58] sm:$0xff]
  %v64 = vld [vmem:[%s1 + $0x60] sm:$0xff]
  %v65 = vld [vmem:[%s1 + $0x68] sm:$0xff]
  %v66 = vld [vmem:[%s1 + $0x70] sm:$0xff]
  %v67 = vld [vmem:[%s1 + $0x78] sm:$0xff]
  %v68 = vld [vmem:[%s1 + $0x80] sm:$0xff]
  %v69 = vld [vmem:[%s1 + $0x88] sm:$0xff]
  %v70 = vld [vmem:[%s2] sm:$0x1]
  %v72 = vperm.slane %v70, 0
  %vm74 = vcmask 130048
  %v76 = vsel %vm74, %v21, 0
  %v79 = vsel %vm74, %v23, 0
  %v82 = vsel %vm74, %v25, 0
  %v85 = vsel %vm74, %v27, 0
  %v88 = vsel %vm74, %v29, 0
  %v91 = vsel %vm74, %v31, 0
  %v94 = vsel %vm74, %v33, 0
  %v97 = vsel %vm74, %v35, 0
  %v100 = vsel %vm74, %v37, 0
  %v103 = vsel %vm74, %v39, 0
  %v106 = vsel %vm74, %v41, 0
  %v109 = vsel %vm74, %v43, 0
  %v112 = vsel %vm74, %v45, 0
  %v115 = vsel %vm74, %v47, 0
  %v118 = vsel %vm74, %v49, 0
  %v121 = vsel %vm74, %v51, 0
  %123 = vmatpush.msra.mxu0 %v67
  %124 = vmatpush.msra.mxu0 %v66
  %125 = vmatpush.msra.mxu0 %v65
  %126 = vmatpush.msra.mxu0 %v64
  %127 = vmatpush.msra.mxu0 %v63
  %128 = vmatpush.msra.mxu0 %v62
  %129 = vmatpush.msra.mxu0 %v61
  %130 = vmatpush.msra.mxu0 %v60
  %131 = vmatpush.msra.mxu0 %v59
  %132 = vmatpush.msra.mxu0 %v58
  %133 = vmatpush.msra.mxu0 %v57
  %134 = vmatpush.msra.mxu0 %v56
  %135 = vmatpush.msra.mxu0 %v55
  %136 = vmatpush.msra.mxu0 %v54
  %137 = vmatpush.msra.mxu0 %v53
  %138 = vmatpush.msra.mxu0 %v52
  %139 = vmatmul.f32.gmra.mxu0 %v20
  %v140 = vpop.f32.mrf.mxu0
  %v141 = vadd.f32 %v72, %v140
  %142 = vmatmul.f32.gmra.mxu0 %v22
  %v143 = vpop.f32.mrf.mxu0
  %v144 = vadd.f32 %v72, %v143
  %145 = vmatmul.f32.gmra.mxu0 %v24
  %v146 = vpop.f32.mrf.mxu0
  %v147 = vadd.f32 %v72, %v146
  %148 = vmatmul.f32.gmra.mxu0 %v26
  %v149 = vpop.f32.mrf.mxu0
  %v150 = vadd.f32 %v72, %v149
  %151 = vmatmul.f32.gmra.mxu0 %v28
  %v152 = vpop.f32.mrf.mxu0
  %v153 = vadd.f32 %v72, %v152
  %154 = vmatmul.f32.gmra.mxu0 %v30
  %v155 = vpop.f32.mrf.mxu0
  %v156 = vadd.f32 %v72, %v155
  %157 = vmatmul.f32.gmra.mxu0 %v32
  %v158 = vpop.f32.mrf.mxu0
  %v159 = vadd.f32 %v72, %v158
  %160 = vmatmul.f32.gmra.mxu0 %v34
  %v161 = vpop.f32.mrf.mxu0
  %v162 = vadd.f32 %v72, %v161
  %163 = vmatmul.f32.gmra.mxu0 %v36
  %v164 = vpop.f32.mrf.mxu0
  %v165 = vadd.f32 %v72, %v164
  %166 = vmatmul.f32.gmra.mxu0 %v38
  %v167 = vpop.f32.mrf.mxu0
  %v168 = vadd.f32 %v72, %v167
  %169 = vmatmul.f32.gmra.mxu0 %v40
  %v170 = vpop.f32.mrf.mxu0
  %v171 = vadd.f32 %v72, %v170
  %172 = vmatmul.f32.gmra.mxu0 %v42
  %v173 = vpop.f32.mrf.mxu0
  %v174 = vadd.f32 %v72, %v173
  %175 = vmatmul.f32.gmra.mxu0 %v44
  %v176 = vpop.f32.mrf.mxu0
  %v177 = vadd.f32 %v72, %v176
  %178 = vmatmul.f32.gmra.mxu0 %v46
  %v179 = vpop.f32.mrf.mxu0
  %v180 = vadd.f32 %v72, %v179
  %181 = vmatmul.f32.gmra.mxu0 %v48
  %v182 = vpop.f32.mrf.mxu0
  %v183 = vadd.f32 %v72, %v182
  %184 = vmatmul.f32.gmra.mxu0 %v50
  %v185 = vpop.f32.mrf.mxu0
  %v186 = vadd.f32 %v72, %v185
  %187 = vdwg.mxu0
  %188 = vmatpush.msra.mxu0 0.0
  %189 = vmatpush.msra.mxu0 0.0
  %190 = vmatpush.msra.mxu0 0.0
  %191 = vmatpush.msra.mxu0 0.0
  %192 = vmatpush.msra.mxu0 0.0
  %193 = vmatpush.msra.mxu0 0.0
  %194 = vmatpush.msra.mxu0 0.0
  %195 = vmatpush.msra.mxu0 0.0
  %196 = vmatpush.msra.mxu0 0.0
  %197 = vmatpush.msra.mxu0 0.0
  %198 = vmatpush.msra.mxu0 0.0
  %199 = vmatpush.msra.mxu0 0.0
  %200 = vmatpush.msra.mxu0 0.0
  %201 = vmatpush.msra.mxu0 0.0
  %202 = vmatpush.msra.mxu0 %v69
  %203 = vmatpush.msra.mxu0 %v68
  %204 = vmatmul.f32.gmra.mxu0 %v76
  %v205 = vpop.f32.mrf.mxu0
  %v206 = vadd.f32 %v141, %v205
  %207 = vmatmul.f32.gmra.mxu0 %v79
  %v208 = vpop.f32.mrf.mxu0
  %v209 = vadd.f32 %v144, %v208
  %210 = vmatmul.f32.gmra.mxu0 %v82
  %v211 = vpop.f32.mrf.mxu0
  %v212 = vadd.f32 %v147, %v211
  %213 = vmatmul.f32.gmra.mxu0 %v85
  %v214 = vpop.f32.mrf.mxu0
  %v215 = vadd.f32 %v150, %v214
  %216 = vmatmul.f32.gmra.mxu0 %v88
  %v217 = vpop.f32.mrf.mxu0
  %v218 = vadd.f32 %v153, %v217
  %219 = vmatmul.f32.gmra.mxu0 %v91
  %v220 = vpop.f32.mrf.mxu0
  %v221 = vadd.f32 %v156, %v220
  %222 = vmatmul.f32.gmra.mxu0 %v94
  %v223 = vpop.f32.mrf.mxu0
  %v224 = vadd.f32 %v159, %v223
  %225 = vmatmul.f32.gmra.mxu0 %v97
  %v226 = vpop.f32.mrf.mxu0
  %v227 = vadd.f32 %v162, %v226
  %228 = vmatmul.f32.gmra.mxu0 %v100
  %v229 = vpop.f32.mrf.mxu0
  %v230 = vadd.f32 %v165, %v229
  %231 = vmatmul.f32.gmra.mxu0 %v103
  %v232 = vpop.f32.mrf.mxu0
  %v233 = vadd.f32 %v168, %v232
  %234 = vmatmul.f32.gmra.mxu0 %v106
  %v235 = vpop.f32.mrf.mxu0
  %v236 = vadd.f32 %v171, %v235
  %237 = vmatmul.f32.gmra.mxu0 %v109
  %v238 = vpop.f32.mrf.mxu0
  %v239 = vadd.f32 %v174, %v238
  %240 = vmatmul.f32.gmra.mxu0 %v112
  %v241 = vpop.f32.mrf.mxu0
  %v242 = vadd.f32 %v177, %v241
  %243 = vmatmul.f32.gmra.mxu0 %v115
  %v244 = vpop.f32.mrf.mxu0
  %v245 = vadd.f32 %v180, %v244
  %246 = vmatmul.f32.gmra.mxu0 %v118
  %v247 = vpop.f32.mrf.mxu0
  %v248 = vadd.f32 %v183, %v247
  %249 = vmatmul.f32.gmra.mxu0 %v121
  %v250 = vpop.f32.mrf.mxu0
  %v251 = vadd.f32 %v186, %v250
  %252 = vdwg.mxu0
  %v253 = vsel %vm74, %v206, 0.0
  %v254 = vsel %vm74, %v209, 0.0
  %v255 = vadd.f32 %v253, %v254
  %v256 = vsel %vm74, %v212, 0.0
  %v257 = vadd.f32 %v255, %v256
  %v258 = vsel %vm74, %v215, 0.0
  %v259 = vadd.f32 %v257, %v258
  %v260 = vsel %vm74, %v218, 0.0
  %v261 = vadd.f32 %v259, %v260
  %v262 = vsel %vm74, %v221, 0.0
  %v263 = vadd.f32 %v261, %v262
  %v264 = vsel %vm74, %v224, 0.0
  %v265 = vadd.f32 %v263, %v264
  %v266 = vsel %vm74, %v227, 0.0
  %v267 = vadd.f32 %v265, %v266
  %v268 = vsel %vm74, %v230, 0.0
  %v269 = vadd.f32 %v267, %v268
  %v270 = vsel %vm74, %v233, 0.0
  %v271 = vadd.f32 %v269, %v270
  %v272 = vsel %vm74, %v236, 0.0
  %v273 = vadd.f32 %v271, %v272
  %v274 = vsel %vm74, %v239, 0.0
  %v275 = vadd.f32 %v273, %v274
  %v276 = vsel %vm74, %v242, 0.0
  %v277 = vadd.f32 %v275, %v276
  %v278 = vsel %vm74, %v245, 0.0
  %v279 = vadd.f32 %v277, %v278
  %v280 = vsel %vm74, %v248, 0.0
  %v281 = vadd.f32 %v279, %v280
  %v282 = vsel %vm74, %v251, 0.0
  %v283 = vadd.f32 %v281, %v282
  %v284 = vrot.slane %v283, 4
  %v285 = vadd.f32 %v283, %v284
  %v286 = vrot.slane %v285, 2
  %v287 = vadd.f32 %v285, %v286
  %v288 = vrot.slane %v287, 1
  %v289 = vadd.f32 %v287, %v288
  %v290 = vrcp.pop 128.0
  %v291 = vmul.f32 128.0, %v290
  %v292 = vsub.f32 1.0, %v291
  %v293 = vmul.f32 %v290, %v292
  %v294 = vadd.f32 %v290, %v293
  %vm295 = vweird.f32 %v290
  %v296 = vsel %vm295, %v290, %v294
  %v297 = vmul.f32 %v289, %v296
  %v298 = vsub.f32 %v206, %v297
  %v299 = vsub.f32 %v209, %v297
  %v300 = vsub.f32 %v212, %v297
  %v301 = vsub.f32 %v215, %v297
  %v302 = vsub.f32 %v218, %v297
  %v303 = vsub.f32 %v221, %v297
  %v304 = vsub.f32 %v224, %v297
  %v305 = vsub.f32 %v227, %v297
  %v306 = vsub.f32 %v230, %v297
  %v307 = vsub.f32 %v233, %v297
  %v308 = vsub.f32 %v236, %v297
  %v309 = vsub.f32 %v239, %v297
  %v310 = vsub.f32 %v242, %v297
  %v311 = vsub.f32 %v245, %v297
  %v312 = vsub.f32 %v248, %v297
  %v313 = vsub.f32 %v251, %v297
  %v314 = vmul.f32 %v298, %v298
  %v315 = vmul.f32 %v299, %v299
  %v316 = vmul.f32 %v300, %v300
  %v317 = vmul.f32 %v301, %v301
  %v318 = vmul.f32 %v302, %v302
  %v319 = vmul.f32 %v303, %v303
  %v320 = vmul.f32 %v304, %v304
  %v321 = vmul.f32 %v305, %v305
  %v322 = vmul.f32 %v306, %v306
  %v323 = vmul.f32 %v307, %v307
  %v324 = vmul.f32 %v308, %v308
  %v325 = vmul.f32 %v309, %v309
  %v326 = vmul.f32 %v310, %v310
  %v327 = vmul.f32 %v311, %v311
  %v328 = vmul.f32 %v312, %v312
  %v329 = vmul.f32 %v313, %v313
  %v330 = vsel %vm74, %v314, 0.0
  %v331 = vsel %vm74, %v315, 0.0
  %v332 = vadd.f32 %v330, %v331
  %v333 = vsel %vm74, %v316, 0.0
  %v334 = vadd.f32 %v332, %v333
  %v335 = vsel %vm74, %v317, 0.0
  %v336 = vadd.f32 %v334, %v335
  %v337 = vsel %vm74, %v318, 0.0
  %v338 = vadd.f32 %v336, %v337
  %v339 = vsel %vm74, %v319, 0.0
  %v340 = vadd.f32 %v338, %v339
  %v341 = vsel %vm74, %v320, 0.0
  %v342 = vadd.f32 %v340, %v341
  %v343 = vsel %vm74, %v321, 0.0
  %v344 = vadd.f32 %v342, %v343
  %v345 = vsel %vm74, %v322, 0.0
  %v346 = vadd.f32 %v344, %v345
  %v347 = vsel %vm74, %v323, 0.0
  %v348 = vadd.f32 %v346, %v347
  %v349 = vsel %vm74, %v324, 0.0
  %v350 = vadd.f32 %v348, %v349
  %v351 = vsel %vm74, %v325, 0.0
  %v352 = vadd.f32 %v350, %v351
  %v353 = vsel %vm74, %v326, 0.0
  %v354 = vadd.f32 %v352, %v353
  %v355 = vsel %vm74, %v327, 0.0
  %v356 = vadd.f32 %v354, %v355
  %v357 = vsel %vm74, %v328, 0.0
  %v358 = vadd.f32 %v356, %v357
  %v359 = vsel %vm74, %v329, 0.0
  %v360 = vadd.f32 %v358, %v359
  %v361 = vrot.slane %v360, 4
  %v362 = vadd.f32 %v360, %v361
  %v363 = vrot.slane %v362, 2
  %v364 = vadd.f32 %v362, %v363
  %v365 = vrot.slane %v364, 1
  %v366 = vadd.f32 %v364, %v365
  %v367 = vmul.f32 %v366, %v296
  %v368 = vadd.f32 %v367, 1e-05
  %v369 = vrsqrt.pop %v368
  %v370 = vmul.f32 %v369, %v368
  %v371 = vmul.f32 %v370, %v369
  %v372 = vmul.f32 0.5, %v371
  %v373 = vsub.f32 1.5, %v372
  %v374 = vmul.f32 %v369, %v373
  %vm375 = vweird.f32 %v368
  %vm376 = vweird.f32 %v369
  %vm377 = vmor %vm375, %vm376
  %v378 = vsel %vm377, %v369, %v374
  %v379 = vmul.f32 %v298, %v378
  %v380 = vmul.f32 %v299, %v378
  %v381 = vmul.f32 %v300, %v378
  %v382 = vmul.f32 %v301, %v378
  %v383 = vmul.f32 %v302, %v378
  %v384 = vmul.f32 %v303, %v378
  %v385 = vmul.f32 %v304, %v378
  %v386 = vmul.f32 %v305, %v378
  %v387 = vmul.f32 %v306, %v378
  %v388 = vmul.f32 %v307, %v378
  %v389 = vmul.f32 %v308, %v378
  %v390 = vmul.f32 %v309, %v378
  %v391 = vmul.f32 %v310, %v378
  %v392 = vmul.f32 %v311, %v378
  %v393 = vmul.f32 %v312, %v378
  %v394 = vmul.f32 %v313, %v378
  %v395 = vld [vmem:[%s3] sm:$0x1]
  %v397 = vperm.slane %v395, 0
  %v399 = vmul.f32 %v379, %v397
  %v400 = vmul.f32 %v380, %v397
  %v401 = vmul.f32 %v381, %v397
  %v402 = vmul.f32 %v382, %v397
  %v403 = vmul.f32 %v383, %v397
  %v404 = vmul.f32 %v384, %v397
  %v405 = vmul.f32 %v385, %v397
  %v406 = vmul.f32 %v386, %v397
  %v407 = vmul.f32 %v387, %v397
  %v408 = vmul.f32 %v388, %v397
  %v409 = vmul.f32 %v389, %v397
  %v410 = vmul.f32 %v390, %v397
  %v411 = vmul.f32 %v391, %v397
  %v412 = vmul.f32 %v392, %v397
  %v413 = vmul.f32 %v393, %v397
  %v414 = vmul.f32 %v394, %v397
  %v415 = vld [vmem:[%s4] sm:$0x1]
  %v417 = vperm.slane %v415, 0
  %v419 = vadd.f32 %v399, %v417
  %v420 = vadd.f32 %v400, %v417
  %v421 = vadd.f32 %v401, %v417
  %v422 = vadd.f32 %v402, %v417
  %v423 = vadd.f32 %v403, %v417
  %v424 = vadd.f32 %v404, %v417
  %v425 = vadd.f32 %v405, %v417
  %v426 = vadd.f32 %v406, %v417
  %v427 = vadd.f32 %v407, %v417
  %v428 = vadd.f32 %v408, %v417
  %v429 = vadd.f32 %v409, %v417
  %v430 = vadd.f32 %v410, %v417
  %v431 = vadd.f32 %v411, %v417
  %v432 = vadd.f32 %v412, %v417
  %v433 = vadd.f32 %v413, %v417
  %v434 = vadd.f32 %v414, %v417
  %v435 = vmax.f32 %v419, 0.0
  %v436 = vmax.f32 %v420, 0.0
  %v437 = vmax.f32 %v421, 0.0
  %v438 = vmax.f32 %v422, 0.0
  %v439 = vmax.f32 %v423, 0.0
  %v440 = vmax.f32 %v424, 0.0
  %v441 = vmax.f32 %v425, 0.0
  %v442 = vmax.f32 %v426, 0.0
  %v443 = vmax.f32 %v427, 0.0
  %v444 = vmax.f32 %v428, 0.0
  %v445 = vmax.f32 %v429, 0.0
  %v446 = vmax.f32 %v430, 0.0
  %v447 = vmax.f32 %v431, 0.0
  %v448 = vmax.f32 %v432, 0.0
  %v449 = vmax.f32 %v433, 0.0
  %v450 = vmax.f32 %v434, 0.0
  %451 = vst.msk [vmem:[%s5] sm:$0xff] %vm74, %v435
  %452 = vst.msk [vmem:[%s5 + $0x8] sm:$0xff] %vm74, %v436
  %453 = vst.msk [vmem:[%s5 + $0x10] sm:$0xff] %vm74, %v437
  %454 = vst.msk [vmem:[%s5 + $0x18] sm:$0xff] %vm74, %v438
  %455 = vst.msk [vmem:[%s5 + $0x20] sm:$0xff] %vm74, %v439
  %456 = vst.msk [vmem:[%s5 + $0x28] sm:$0xff] %vm74, %v440
  %457 = vst.msk [vmem:[%s5 + $0x30] sm:$0xff] %vm74, %v441
  %458 = vst.msk [vmem:[%s5 + $0x38] sm:$0xff] %vm74, %v442
  %459 = vst.msk [vmem:[%s5 + $0x40] sm:$0xff] %vm74, %v443
  %460 = vst.msk [vmem:[%s5 + $0x48] sm:$0xff] %vm74, %v444
  %461 = vst.msk [vmem:[%s5 + $0x50] sm:$0xff] %vm74, %v445
  %462 = vst.msk [vmem:[%s5 + $0x58] sm:$0xff] %vm74, %v446
  %463 = vst.msk [vmem:[%s5 + $0x60] sm:$0xff] %vm74, %v447
  %464 = vst.msk [vmem:[%s5 + $0x68] sm:$0xff] %vm74, %v448
  %465 = vst.msk [vmem:[%s5 + $0x70] sm:$0xff] %vm74, %v449
  %466 = vst.msk [vmem:[%s5 + $0x78] sm:$0xff] %vm74, %v450
  // Predicated region
  $region22: #{encoder_forward_nchw.13} parent=0 // pred_check
    _
  $region23: #{encoder_forward_nchw.13} parent=0 // pred_check_branch
    %468 = sbr.rel (0) target = $region25
  $region24: #{encoder_forward_nchw.13} parent=0 // pred_region
    _
  $region25: #{encoder_forward_nchw.13} parent=0 // pred_fallthru
    _
  // Predicated region
  $region26: #{encoder_forward_nchw.13} parent=0 // pred_check
    _
  $region27: #{encoder_forward_nchw.13} parent=0 // pred_check_branch
    %470 = sbr.rel (0) target = $region29
  $region28: #{encoder_forward_nchw.13} parent=0 // pred_region
    _
  $region29: #{encoder_forward_nchw.13} parent=0 // pred_fallthru
    _

// kernel: encoder_forward_nchw.14
$region0: #{encoder_forward_nchw.14}
  #allocation0 [shape = 'u32[]', space=smem, size = 0x4, offset = 0x4, fixed_abs, tag = 'smem constant byte address 0x4 - core index']
  #allocation1 [shape = 'u32[72,128]{1,0:T(1,128)}', space=vmem, size = 0x9000, scoped, tag = 'internal scratch']
  %s0 = inlined_call_operand.vmem [shape: f32[128,144], index: 0, kind: input, shape index: {}]
  %s1 = inlined_call_operand.vmem [shape: f32[144,16], index: 1, kind: input, shape index: {}]
  %s2 = inlined_call_operand.vmem [shape: f32[1,16], index: 2, kind: input, shape index: {}]
  %s3 = inlined_call_operand.vmem [shape: f32[1,16], index: 3, kind: input, shape index: {}]
  %s4 = inlined_call_operand.vmem [shape: f32[1,16], index: 4, kind: input, shape index: {}]
  %s5 = inlined_call_operand.vmem [shape: f32[128,16], index: 5, kind: input, shape index: {}]
  %s6 = inlined_call_operand.vmem [shape: f32[128,16], index: 6, kind: output, shape index: {}]
  %s7 = sld [smem:[#allocation0]]
  $region34: #{encoder_forward_nchw.14} parent=0
    _
  %s9 = ssub.s32 1, %s7
  %s10 = scalar_select 0, %s9, %s7
  // Predicated region
  $region2: #{encoder_forward_nchw.14} parent=0 // pred_check
    _
  $region3: #{encoder_forward_nchw.14} parent=0 // pred_check_branch
    %12 = sbr.rel (0) target = $region5
  $region4: #{encoder_forward_nchw.14} parent=0 // pred_region
    _
  $region5: #{encoder_forward_nchw.14} parent=0 // pred_fallthru
    _
  // Predicated region
  $region6: #{encoder_forward_nchw.14} parent=0 // pred_check
    _
  $region7: #{encoder_forward_nchw.14} parent=0 // pred_check_branch
    %14 = sbr.rel (0) target = $region9
  $region8: #{encoder_forward_nchw.14} parent=0 // pred_region
    _
  $region9: #{encoder_forward_nchw.14} parent=0 // pred_fallthru
    _
  // Predicated region
  $region10: #{encoder_forward_nchw.14} parent=0 // pred_check
    _
  $region11: #{encoder_forward_nchw.14} parent=0 // pred_check_branch
    %16 = sbr.rel (0) target = $region13
  $region12: #{encoder_forward_nchw.14} parent=0 // pred_region
    _
  $region13: #{encoder_forward_nchw.14} parent=0 // pred_fallthru
    _
  // Predicated region
  $region14: #{encoder_forward_nchw.14} parent=0 // pred_check
    _
  $region15: #{encoder_forward_nchw.14} parent=0 // pred_check_branch
    %18 = sbr.rel (0) target = $region17
  $region16: #{encoder_forward_nchw.14} parent=0 // pred_region
    _
  $region17: #{encoder_forward_nchw.14} parent=0 // pred_fallthru
    _
  // Predicated region
  $region18: #{encoder_forward_nchw.14} parent=0 // pred_check
    _
  $region19: #{encoder_forward_nchw.14} parent=0 // pred_check_branch
    %20 = sbr.rel (0) target = $region21
  $region20: #{encoder_forward_nchw.14} parent=0 // pred_region
    _
  $region21: #{encoder_forward_nchw.14} parent=0 // pred_fallthru
    _
  // Predicated region
  $region22: #{encoder_forward_nchw.14} parent=0 // pred_check
    _
  $region23: #{encoder_forward_nchw.14} parent=0 // pred_check_branch
    %22 = sbr.rel (0) target = $region25
  $region24: #{encoder_forward_nchw.14} parent=0 // pred_region
    _
  $region25: #{encoder_forward_nchw.14} parent=0 // pred_fallthru
    _
  %v23 = vld [vmem:[%s0] sm:$0xff]
  %v24 = vld [vmem:[%s0 + $0x8] sm:$0xff]
  %v25 = vld [vmem:[%s0 + $0x10] sm:$0xff]
  %v26 = vld [vmem:[%s0 + $0x18] sm:$0xff]
  %v27 = vld [vmem:[%s0 + $0x20] sm:$0xff]
  %v28 = vld [vmem:[%s0 + $0x28] sm:$0xff]
  %v29 = vld [vmem:[%s0 + $0x30] sm:$0xff]
  %v30 = vld [vmem:[%s0 + $0x38] sm:$0xff]
  %v31 = vld [vmem:[%s0 + $0x40] sm:$0xff]
  %v32 = vld [vmem:[%s0 + $0x48] sm:$0xff]
  %v33 = vld [vmem:[%s0 + $0x50] sm:$0xff]
  %v34 = vld [vmem:[%s0 + $0x58] sm:$0xff]
  %v35 = vld [vmem:[%s0 + $0x60] sm:$0xff]
  %v36 = vld [vmem:[%s0 + $0x68] sm:$0xff]
  %v37 = vld [vmem:[%s0 + $0x70] sm:$0xff]
  %v38 = vld [vmem:[%s0 + $0x78] sm:$0xff]
  %v39 = vld [vmem:[%s0 + $0x80] sm:$0xff]
  %v40 = vld [vmem:[%s0 + $0x88] sm:$0xff]
  %v41 = vld [vmem:[%s0 + $0x90] sm:$0xff]
  %v42 = vld [vmem:[%s0 + $0x98] sm:$0xff]
  %v43 = vld [vmem:[%s0 + $0xa0] sm:$0xff]
  %v44 = vld [vmem:[%s0 + $0xa8] sm:$0xff]
  %v45 = vld [vmem:[%s0 + $0xb0] sm:$0xff]
  %v46 = vld [vmem:[%s0 + $0xb8] sm:$0xff]
  %v47 = vld [vmem:[%s0 + $0xc0] sm:$0xff]
  %v48 = vld [vmem:[%s0 + $0xc8] sm:$0xff]
  %v49 = vld [vmem:[%s0 + $0xd0] sm:$0xff]
  %v50 = vld [vmem:[%s0 + $0xd8] sm:$0xff]
  %v51 = vld [vmem:[%s0 + $0xe0] sm:$0xff]
  %v52 = vld [vmem:[%s0 + $0xe8] sm:$0xff]
  %v53 = vld [vmem:[%s0 + $0xf0] sm:$0xff]
  %v54 = vld [vmem:[%s0 + $0xf8] sm:$0xff]
  %v55 = vld [vmem:[%s1] sm:$0xff]
  %v56 = vld [vmem:[%s1 + $0x8] sm:$0xff]
  %v57 = vld [vmem:[%s1 + $0x10] sm:$0xff]
  %v58 = vld [vmem:[%s1 + $0x18] sm:$0xff]
  %v59 = vld [vmem:[%s1 + $0x20] sm:$0xff]
  %v60 = vld [vmem:[%s1 + $0x28] sm:$0xff]
  %v61 = vld [vmem:[%s1 + $0x30] sm:$0xff]
  %v62 = vld [vmem:[%s1 + $0x38] sm:$0xff]
  %v63 = vld [vmem:[%s1 + $0x40] sm:$0xff]
  %v64 = vld [vmem:[%s1 + $0x48] sm:$0xff]
  %v65 = vld [vmem:[%s1 + $0x50] sm:$0xff]
  %v66 = vld [vmem:[%s1 + $0x58] sm:$0xff]
  %v67 = vld [vmem:[%s1 + $0x60] sm:$0xff]
  %v68 = vld [vmem:[%s1 + $0x68] sm:$0xff]
  %v69 = vld [vmem:[%s1 + $0x70] sm:$0xff]
  %v70 = vld [vmem:[%s1 + $0x78] sm:$0xff]
  %v71 = vld [vmem:[%s1 + $0x80] sm:$0xff]
  %v72 = vld [vmem:[%s1 + $0x88] sm:$0xff]
  %v73 = vld [vmem:[%s2] sm:$0x1]
  %v75 = vperm.slane %v73, 0
  %vm77 = vcmask 130048
  %v79 = vsel %vm77, %v24, 0
  %v82 = vsel %vm77, %v26, 0
  %v85 = vsel %vm77, %v28, 0
  %v88 = vsel %vm77, %v30, 0
  %v91 = vsel %vm77, %v32, 0
  %v94 = vsel %vm77, %v34, 0
  %v97 = vsel %vm77, %v36, 0
  %v100 = vsel %vm77, %v38, 0
  %v103 = vsel %vm77, %v40, 0
  %v106 = vsel %vm77, %v42, 0
  %v109 = vsel %vm77, %v44, 0
  %v112 = vsel %vm77, %v46, 0
  %v115 = vsel %vm77, %v48, 0
  %v118 = vsel %vm77, %v50, 0
  %v121 = vsel %vm77, %v52, 0
  %v124 = vsel %vm77, %v54, 0
  %126 = vmatpush.msra.mxu0 %v70
  %127 = vmatpush.msra.mxu0 %v69
  %128 = vmatpush.msra.mxu0 %v68
  %129 = vmatpush.msra.mxu0 %v67
  %130 = vmatpush.msra.mxu0 %v66
  %131 = vmatpush.msra.mxu0 %v65
  %132 = vmatpush.msra.mxu0 %v64
  %133 = vmatpush.msra.mxu0 %v63
  %134 = vmatpush.msra.mxu0 %v62
  %135 = vmatpush.msra.mxu0 %v61
  %136 = vmatpush.msra.mxu0 %v60
  %137 = vmatpush.msra.mxu0 %v59
  %138 = vmatpush.msra.mxu0 %v58
  %139 = vmatpush.msra.mxu0 %v57
  %140 = vmatpush.msra.mxu0 %v56
  %141 = vmatpush.msra.mxu0 %v55
  %142 = vmatmul.f32.gmra.mxu0 %v23
  %v143 = vpop.f32.mrf.mxu0
  %v144 = vadd.f32 %v75, %v143
  %145 = vmatmul.f32.gmra.mxu0 %v25
  %v146 = vpop.f32.mrf.mxu0
  %v147 = vadd.f32 %v75, %v146
  %148 = vmatmul.f32.gmra.mxu0 %v27
  %v149 = vpop.f32.mrf.mxu0
  %v150 = vadd.f32 %v75, %v149
  %151 = vmatmul.f32.gmra.mxu0 %v29
  %v152 = vpop.f32.mrf.mxu0
  %v153 = vadd.f32 %v75, %v152
  %154 = vmatmul.f32.gmra.mxu0 %v31
  %v155 = vpop.f32.mrf.mxu0
  %v156 = vadd.f32 %v75, %v155
  %157 = vmatmul.f32.gmra.mxu0 %v33
  %v158 = vpop.f32.mrf.mxu0
  %v159 = vadd.f32 %v75, %v158
  %160 = vmatmul.f32.gmra.mxu0 %v35
  %v161 = vpop.f32.mrf.mxu0
  %v162 = vadd.f32 %v75, %v161
  %163 = vmatmul.f32.gmra.mxu0 %v37
  %v164 = vpop.f32.mrf.mxu0
  %v165 = vadd.f32 %v75, %v164
  %166 = vmatmul.f32.gmra.mxu0 %v39
  %v167 = vpop.f32.mrf.mxu0
  %v168 = vadd.f32 %v75, %v167
  %169 = vmatmul.f32.gmra.mxu0 %v41
  %v170 = vpop.f32.mrf.mxu0
  %v171 = vadd.f32 %v75, %v170
  %172 = vmatmul.f32.gmra.mxu0 %v43
  %v173 = vpop.f32.mrf.mxu0
  %v174 = vadd.f32 %v75, %v173
  %175 = vmatmul.f32.gmra.mxu0 %v45
  %v176 = vpop.f32.mrf.mxu0
  %v177 = vadd.f32 %v75, %v176
  %178 = vmatmul.f32.gmra.mxu0 %v47
  %v179 = vpop.f32.mrf.mxu0
  %v180 = vadd.f32 %v75, %v179
  %181 = vmatmul.f32.gmra.mxu0 %v49
  %v182 = vpop.f32.mrf.mxu0
  %v183 = vadd.f32 %v75, %v182
  %184 = vmatmul.f32.gmra.mxu0 %v51
  %v185 = vpop.f32.mrf.mxu0
  %v186 = vadd.f32 %v75, %v185
  %187 = vmatmul.f32.gmra.mxu0 %v53
  %v188 = vpop.f32.mrf.mxu0
  %v189 = vadd.f32 %v75, %v188
  %190 = vdwg.mxu0
  %191 = vmatpush.msra.mxu0 0.0
  %192 = vmatpush.msra.mxu0 0.0
  %193 = vmatpush.msra.mxu0 0.0
  %194 = vmatpush.msra.mxu0 0.0
  %195 = vmatpush.msra.mxu0 0.0
  %196 = vmatpush.msra.mxu0 0.0
  %197 = vmatpush.msra.mxu0 0.0
  %198 = vmatpush.msra.mxu0 0.0
  %199 = vmatpush.msra.mxu0 0.0
  %200 = vmatpush.msra.mxu0 0.0
  %201 = vmatpush.msra.mxu0 0.0
  %202 = vmatpush.msra.mxu0 0.0
  %203 = vmatpush.msra.mxu0 0.0
  %204 = vmatpush.msra.mxu0 0.0
  %205 = vmatpush.msra.mxu0 %v72
  %206 = vmatpush.msra.mxu0 %v71
  %207 = vmatmul.f32.gmra.mxu0 %v79
  %v208 = vpop.f32.mrf.mxu0
  %v209 = vadd.f32 %v144, %v208
  %210 = vmatmul.f32.gmra.mxu0 %v82
  %v211 = vpop.f32.mrf.mxu0
  %v212 = vadd.f32 %v147, %v211
  %213 = vmatmul.f32.gmra.mxu0 %v85
  %v214 = vpop.f32.mrf.mxu0
  %v215 = vadd.f32 %v150, %v214
  %216 = vmatmul.f32.gmra.mxu0 %v88
  %v217 = vpop.f32.mrf.mxu0
  %v218 = vadd.f32 %v153, %v217
  %219 = vmatmul.f32.gmra.mxu0 %v91
  %v220 = vpop.f32.mrf.mxu0
  %v221 = vadd.f32 %v156, %v220
  %222 = vmatmul.f32.gmra.mxu0 %v94
  %v223 = vpop.f32.mrf.mxu0
  %v224 = vadd.f32 %v159, %v223
  %225 = vmatmul.f32.gmra.mxu0 %v97
  %v226 = vpop.f32.mrf.mxu0
  %v227 = vadd.f32 %v162, %v226
  %228 = vmatmul.f32.gmra.mxu0 %v100
  %v229 = vpop.f32.mrf.mxu0
  %v230 = vadd.f32 %v165, %v229
  %231 = vmatmul.f32.gmra.mxu0 %v103
  %v232 = vpop.f32.mrf.mxu0
  %v233 = vadd.f32 %v168, %v232
  %234 = vmatmul.f32.gmra.mxu0 %v106
  %v235 = vpop.f32.mrf.mxu0
  %v236 = vadd.f32 %v171, %v235
  %237 = vmatmul.f32.gmra.mxu0 %v109
  %v238 = vpop.f32.mrf.mxu0
  %v239 = vadd.f32 %v174, %v238
  %240 = vmatmul.f32.gmra.mxu0 %v112
  %v241 = vpop.f32.mrf.mxu0
  %v242 = vadd.f32 %v177, %v241
  %243 = vmatmul.f32.gmra.mxu0 %v115
  %v244 = vpop.f32.mrf.mxu0
  %v245 = vadd.f32 %v180, %v244
  %246 = vmatmul.f32.gmra.mxu0 %v118
  %v247 = vpop.f32.mrf.mxu0
  %v248 = vadd.f32 %v183, %v247
  %249 = vmatmul.f32.gmra.mxu0 %v121
  %v250 = vpop.f32.mrf.mxu0
  %v251 = vadd.f32 %v186, %v250
  %252 = vmatmul.f32.gmra.mxu0 %v124
  %v253 = vpop.f32.mrf.mxu0
  %v254 = vadd.f32 %v189, %v253
  %255 = vdwg.mxu0
  %v256 = vsel %vm77, %v209, 0.0
  %v257 = vsel %vm77, %v212, 0.0
  %v258 = vadd.f32 %v256, %v257
  %v259 = vsel %vm77, %v215, 0.0
  %v260 = vadd.f32 %v258, %v259
  %v261 = vsel %vm77, %v218, 0.0
  %v262 = vadd.f32 %v260, %v261
  %v263 = vsel %vm77, %v221, 0.0
  %v264 = vadd.f32 %v262, %v263
  %v265 = vsel %vm77, %v224, 0.0
  %v266 = vadd.f32 %v264, %v265
  %v267 = vsel %vm77, %v227, 0.0
  %v268 = vadd.f32 %v266, %v267
  %v269 = vsel %vm77, %v230, 0.0
  %v270 = vadd.f32 %v268, %v269
  %v271 = vsel %vm77, %v233, 0.0
  %v272 = vadd.f32 %v270, %v271
  %v273 = vsel %vm77, %v236, 0.0
  %v274 = vadd.f32 %v272, %v273
  %v275 = vsel %vm77, %v239, 0.0
  %v276 = vadd.f32 %v274, %v275
  %v277 = vsel %vm77, %v242, 0.0
  %v278 = vadd.f32 %v276, %v277
  %v279 = vsel %vm77, %v245, 0.0
  %v280 = vadd.f32 %v278, %v279
  %v281 = vsel %vm77, %v248, 0.0
  %v282 = vadd.f32 %v280, %v281
  %v283 = vsel %vm77, %v251, 0.0
  %v284 = vadd.f32 %v282, %v283
  %v285 = vsel %vm77, %v254, 0.0
  %v286 = vadd.f32 %v284, %v285
  %v287 = vrot.slane %v286, 4
  %v288 = vadd.f32 %v286, %v287
  %v289 = vrot.slane %v288, 2
  %v290 = vadd.f32 %v288, %v289
  %v291 = vrot.slane %v290, 1
  %v292 = vadd.f32 %v290, %v291
  %v293 = vrcp.pop 128.0
  %v294 = vmul.f32 128.0, %v293
  %v295 = vsub.f32 1.0, %v294
  %v296 = vmul.f32 %v293, %v295
  %v297 = vadd.f32 %v293, %v296
  %vm298 = vweird.f32 %v293
  %v299 = vsel %vm298, %v293, %v297
  %v300 = vmul.f32 %v292, %v299
  %v301 = vsub.f32 %v209, %v300
  %v302 = vsub.f32 %v212, %v300
  %v303 = vsub.f32 %v215, %v300
  %v304 = vsub.f32 %v218, %v300
  %v305 = vsub.f32 %v221, %v300
  %v306 = vsub.f32 %v224, %v300
  %v307 = vsub.f32 %v227, %v300
  %v308 = vsub.f32 %v230, %v300
  %v309 = vsub.f32 %v233, %v300
  %v310 = vsub.f32 %v236, %v300
  %v311 = vsub.f32 %v239, %v300
  %v312 = vsub.f32 %v242, %v300
  %v313 = vsub.f32 %v245, %v300
  %v314 = vsub.f32 %v248, %v300
  %v315 = vsub.f32 %v251, %v300
  %v316 = vsub.f32 %v254, %v300
  %v317 = vmul.f32 %v301, %v301
  %v318 = vmul.f32 %v302, %v302
  %v319 = vmul.f32 %v303, %v303
  %v320 = vmul.f32 %v304, %v304
  %v321 = vmul.f32 %v305, %v305
  %v322 = vmul.f32 %v306, %v306
  %v323 = vmul.f32 %v307, %v307
  %v324 = vmul.f32 %v308, %v308
  %v325 = vmul.f32 %v309, %v309
  %v326 = vmul.f32 %v310, %v310
  %v327 = vmul.f32 %v311, %v311
  %v328 = vmul.f32 %v312, %v312
  %v329 = vmul.f32 %v313, %v313
  %v330 = vmul.f32 %v314, %v314
  %v331 = vmul.f32 %v315, %v315
  %v332 = vmul.f32 %v316, %v316
  %v333 = vsel %vm77, %v317, 0.0
  %v334 = vsel %vm77, %v318, 0.0
  %v335 = vadd.f32 %v333, %v334
  %v336 = vsel %vm77, %v319, 0.0
  %v337 = vadd.f32 %v335, %v336
  %v338 = vsel %vm77, %v320, 0.0
  %v339 = vadd.f32 %v337, %v338
  %v340 = vsel %vm77, %v321, 0.0
  %v341 = vadd.f32 %v339, %v340
  %v342 = vsel %vm77, %v322, 0.0
  %v343 = vadd.f32 %v341, %v342
  %v344 = vsel %vm77, %v323, 0.0
  %v345 = vadd.f32 %v343, %v344
  %v346 = vsel %vm77, %v324, 0.0
  %v347 = vadd.f32 %v345, %v346
  %v348 = vsel %vm77, %v325, 0.0
  %v349 = vadd.f32 %v347, %v348
  %v350 = vsel %vm77, %v326, 0.0
  %v351 = vadd.f32 %v349, %v350
  %v352 = vsel %vm77, %v327, 0.0
  %v353 = vadd.f32 %v351, %v352
  %v354 = vsel %vm77, %v328, 0.0
  %v355 = vadd.f32 %v353, %v354
  %v356 = vsel %vm77, %v329, 0.0
  %v357 = vadd.f32 %v355, %v356
  %v358 = vsel %vm77, %v330, 0.0
  %v359 = vadd.f32 %v357, %v358
  %v360 = vsel %vm77, %v331, 0.0
  %v361 = vadd.f32 %v359, %v360
  %v362 = vsel %vm77, %v332, 0.0
  %v363 = vadd.f32 %v361, %v362
  %v364 = vrot.slane %v363, 4
  %v365 = vadd.f32 %v363, %v364
  %v366 = vrot.slane %v365, 2
  %v367 = vadd.f32 %v365, %v366
  %v368 = vrot.slane %v367, 1
  %v369 = vadd.f32 %v367, %v368
  %v370 = vmul.f32 %v369, %v299
  %v371 = vadd.f32 %v370, 1e-05
  %v372 = vrsqrt.pop %v371
  %v373 = vmul.f32 %v372, %v371
  %v374 = vmul.f32 %v373, %v372
  %v375 = vmul.f32 0.5, %v374
  %v376 = vsub.f32 1.5, %v375
  %v377 = vmul.f32 %v372, %v376
  %vm378 = vweird.f32 %v371
  %vm379 = vweird.f32 %v372
  %vm380 = vmor %vm378, %vm379
  %v381 = vsel %vm380, %v372, %v377
  %v382 = vmul.f32 %v301, %v381
  %v383 = vmul.f32 %v302, %v381
  %v384 = vmul.f32 %v303, %v381
  %v385 = vmul.f32 %v304, %v381
  %v386 = vmul.f32 %v305, %v381
  %v387 = vmul.f32 %v306, %v381
  %v388 = vmul.f32 %v307, %v381
  %v389 = vmul.f32 %v308, %v381
  %v390 = vmul.f32 %v309, %v381
  %v391 = vmul.f32 %v310, %v381
  %v392 = vmul.f32 %v311, %v381
  %v393 = vmul.f32 %v312, %v381
  %v394 = vmul.f32 %v313, %v381
  %v395 = vmul.f32 %v314, %v381
  %v396 = vmul.f32 %v315, %v381
  %v397 = vmul.f32 %v316, %v381
  %v398 = vld [vmem:[%s3] sm:$0x1]
  %v400 = vperm.slane %v398, 0
  %v402 = vmul.f32 %v382, %v400
  %v403 = vmul.f32 %v383, %v400
  %v404 = vmul.f32 %v384, %v400
  %v405 = vmul.f32 %v385, %v400
  %v406 = vmul.f32 %v386, %v400
  %v407 = vmul.f32 %v387, %v400
  %v408 = vmul.f32 %v388, %v400
  %v409 = vmul.f32 %v389, %v400
  %v410 = vmul.f32 %v390, %v400
  %v411 = vmul.f32 %v391, %v400
  %v412 = vmul.f32 %v392, %v400
  %v413 = vmul.f32 %v393, %v400
  %v414 = vmul.f32 %v394, %v400
  %v415 = vmul.f32 %v395, %v400
  %v416 = vmul.f32 %v396, %v400
  %v417 = vmul.f32 %v397, %v400
  %v418 = vld [vmem:[%s4] sm:$0x1]
  %v420 = vperm.slane %v418, 0
  %v422 = vadd.f32 %v402, %v420
  %v423 = vadd.f32 %v403, %v420
  %v424 = vadd.f32 %v404, %v420
  %v425 = vadd.f32 %v405, %v420
  %v426 = vadd.f32 %v406, %v420
  %v427 = vadd.f32 %v407, %v420
  %v428 = vadd.f32 %v408, %v420
  %v429 = vadd.f32 %v409, %v420
  %v430 = vadd.f32 %v410, %v420
  %v431 = vadd.f32 %v411, %v420
  %v432 = vadd.f32 %v412, %v420
  %v433 = vadd.f32 %v413, %v420
  %v434 = vadd.f32 %v414, %v420
  %v435 = vadd.f32 %v415, %v420
  %v436 = vadd.f32 %v416, %v420
  %v437 = vadd.f32 %v417, %v420
  %v438 = vld [vmem:[%s5] sm:$0xff]
  %v439 = vld [vmem:[%s5 + $0x8] sm:$0xff]
  %v440 = vld [vmem:[%s5 + $0x10] sm:$0xff]
  %v441 = vld [vmem:[%s5 + $0x18] sm:$0xff]
  %v442 = vld [vmem:[%s5 + $0x20] sm:$0xff]
  %v443 = vld [vmem:[%s5 + $0x28] sm:$0xff]
  %v444 = vld [vmem:[%s5 + $0x30] sm:$0xff]
  %v445 = vld [vmem:[%s5 + $0x38] sm:$0xff]
  %v446 = vld [vmem:[%s5 + $0x40] sm:$0xff]
  %v447 = vld [vmem:[%s5 + $0x48] sm:$0xff]
  %v448 = vld [vmem:[%s5 + $0x50] sm:$0xff]
  %v449 = vld [vmem:[%s5 + $0x58] sm:$0xff]
  %v450 = vld [vmem:[%s5 + $0x60] sm:$0xff]
  %v451 = vld [vmem:[%s5 + $0x68] sm:$0xff]
  %v452 = vld [vmem:[%s5 + $0x70] sm:$0xff]
  %v453 = vld [vmem:[%s5 + $0x78] sm:$0xff]
  %v454 = vadd.f32 %v422, %v438
  %v455 = vadd.f32 %v423, %v439
  %v456 = vadd.f32 %v424, %v440
  %v457 = vadd.f32 %v425, %v441
  %v458 = vadd.f32 %v426, %v442
  %v459 = vadd.f32 %v427, %v443
  %v460 = vadd.f32 %v428, %v444
  %v461 = vadd.f32 %v429, %v445
  %v462 = vadd.f32 %v430, %v446
  %v463 = vadd.f32 %v431, %v447
  %v464 = vadd.f32 %v432, %v448
  %v465 = vadd.f32 %v433, %v449
  %v466 = vadd.f32 %v434, %v450
  %v467 = vadd.f32 %v435, %v451
  %v468 = vadd.f32 %v436, %v452
  %v469 = vadd.f32 %v437, %v453
  %v470 = vmax.f32 %v454, 0.0
  %v471 = vmax.f32 %v455, 0.0
  %v472 = vmax.f32 %v456, 0.0
  %v473 = vmax.f32 %v457, 0.0
  %v474 = vmax.f32 %v458, 0.0
  %v475 = vmax.f32 %v459, 0.0
  %v476 = vmax.f32 %v460, 0.0
  %v477 = vmax.f32 %v461, 0.0
  %v478 = vmax.f32 %v462, 0.0
  %v479 = vmax.f32 %v463, 0.0
  %v480 = vmax.f32 %v464, 0.0
  %v481 = vmax.f32 %v465, 0.0
  %v482 = vmax.f32 %v466, 0.0
  %v483 = vmax.f32 %v467, 0.0
  %v484 = vmax.f32 %v468, 0.0
  %v485 = vmax.f32 %v469, 0.0
  %486 = vst.msk [vmem:[%s6] sm:$0xff] %vm77, %v470
  %487 = vst.msk [vmem:[%s6 + $0x8] sm:$0xff] %vm77, %v471
  %488 = vst.msk [vmem:[%s6 + $0x10] sm:$0xff] %vm77, %v472
  %489 = vst.msk [vmem:[%s6 + $0x18] sm:$0xff] %vm77, %v473
  %490 = vst.msk [vmem:[%s6 + $0x20] sm:$0xff] %vm77, %v474
  %491 = vst.msk [vmem:[%s6 + $0x28] sm:$0xff] %vm77, %v475
  %492 = vst.msk [vmem:[%s6 + $0x30] sm:$0xff] %vm77, %v476
  %493 = vst.msk [vmem:[%s6 + $0x38] sm:$0xff] %vm77, %v477
  %494 = vst.msk [vmem:[%s6 + $0x40] sm:$0xff] %vm77, %v478
  %495 = vst.msk [vmem:[%s6 + $0x48] sm:$0xff] %vm77, %v479
  %496 = vst.msk [vmem:[%s6 + $0x50] sm:$0xff] %vm77, %v480
  %497 = vst.msk [vmem:[%s6 + $0x58] sm:$0xff] %vm77, %v481
  %498 = vst.msk [vmem:[%s6 + $0x60] sm:$0xff] %vm77, %v482
  %499 = vst.msk [vmem:[%s6 + $0x68] sm:$0xff] %vm77, %v483
  %500 = vst.msk [vmem:[%s6 + $0x70] sm:$0xff] %vm77, %v484
  %501 = vst.msk [vmem:[%s6 + $0x78] sm:$0xff] %vm77, %v485
  // Predicated region
  $region26: #{encoder_forward_nchw.14} parent=0 // pred_check
    _
  $region27: #{encoder_forward_nchw.14} parent=0 // pred_check_branch
    %503 = sbr.rel (0) target = $region29
  $region28: #{encoder_forward_nchw.14} parent=0 // pred_region
    _
  $region29: #{encoder_forward_nchw.14} parent=0 // pred_fallthru
    _
  // Predicated region
  $region30: #{encoder_forward_nchw.14} parent=0 // pred_check
    _
  $region31: #{encoder_forward_nchw.14} parent=0 // pred_check_branch
    %505 = sbr.rel (0) target = $region33
  $region32: #{encoder_forward_nchw.14} parent=0 // pred_region
    _
  $region33: #{encoder_forward_nchw.14} parent=0 // pred_fallthru
    _

// kernel: encoder_forward_nchw.15
$region0: #{encoder_forward_nchw.15}
  #allocation0 [shape = 'u32[]', space=smem, size = 0x4, offset = 0x4, fixed_abs, tag = 'smem constant byte address 0x4 - core index']
  #allocation1 [shape = 'u32[72,128]{1,0:T(1,128)}', space=vmem, size = 0x9000, scoped, tag = 'internal scratch']
  %s0 = inlined_call_operand.vmem [shape: f32[32,144], index: 0, kind: input, shape index: {}]
  %s1 = inlined_call_operand.vmem [shape: f32[144,32], index: 1, kind: input, shape index: {}]
  %s2 = inlined_call_operand.vmem [shape: f32[1,32], index: 2, kind: input, shape index: {}]
  %s3 = inlined_call_operand.vmem [shape: f32[1,32], index: 3, kind: input, shape index: {}]
  %s4 = inlined_call_operand.vmem [shape: f32[1,32], index: 4, kind: input, shape index: {}]
  %s5 = inlined_call_operand.vmem [shape: f32[32,32], index: 5, kind: output, shape index: {}]
  %s6 = sld [smem:[#allocation0]]
  $region30: #{encoder_forward_nchw.15} parent=0
    _
  %s8 = ssub.s32 1, %s6
  %s9 = scalar_select 0, %s8, %s6
  // Predicated region
  $region2: #{encoder_forward_nchw.15} parent=0 // pred_check
    _
  $region3: #{encoder_forward_nchw.15} parent=0 // pred_check_branch
    %11 = sbr.rel (0) target = $region5
  $region4: #{encoder_forward_nchw.15} parent=0 // pred_region
    _
  $region5: #{encoder_forward_nchw.15} parent=0 // pred_fallthru
    _
  // Predicated region
  $region6: #{encoder_forward_nchw.15} parent=0 // pred_check
    _
  $region7: #{encoder_forward_nchw.15} parent=0 // pred_check_branch
    %13 = sbr.rel (0) target = $region9
  $region8: #{encoder_forward_nchw.15} parent=0 // pred_region
    _
  $region9: #{encoder_forward_nchw.15} parent=0 // pred_fallthru
    _
  // Predicated region
  $region10: #{encoder_forward_nchw.15} parent=0 // pred_check
    _
  $region11: #{encoder_forward_nchw.15} parent=0 // pred_check_branch
    %15 = sbr.rel (0) target = $region13
  $region12: #{encoder_forward_nchw.15} parent=0 // pred_region
    _
  $region13: #{encoder_forward_nchw.15} parent=0 // pred_fallthru
    _
  // Predicated region
  $region14: #{encoder_forward_nchw.15} parent=0 // pred_check
    _
  $region15: #{encoder_forward_nchw.15} parent=0 // pred_check_branch
    %17 = sbr.rel (0) target = $region17
  $region16: #{encoder_forward_nchw.15} parent=0 // pred_region
    _
  $region17: #{encoder_forward_nchw.15} parent=0 // pred_fallthru
    _
  // Predicated region
  $region18: #{encoder_forward_nchw.15} parent=0 // pred_check
    _
  $region19: #{encoder_forward_nchw.15} parent=0 // pred_check_branch
    %19 = sbr.rel (0) target = $region21
  $region20: #{encoder_forward_nchw.15} parent=0 // pred_region
    _
  $region21: #{encoder_forward_nchw.15} parent=0 // pred_fallthru
    _
  %v20 = vld [vmem:[%s0] sm:$0xff]
  %v21 = vld [vmem:[%s0 + $0x8] sm:$0xff]
  %v22 = vld [vmem:[%s0 + $0x10] sm:$0xff]
  %v23 = vld [vmem:[%s0 + $0x18] sm:$0xff]
  %v24 = vld [vmem:[%s0 + $0x20] sm:$0xff]
  %v25 = vld [vmem:[%s0 + $0x28] sm:$0xff]
  %v26 = vld [vmem:[%s0 + $0x30] sm:$0xff]
  %v27 = vld [vmem:[%s0 + $0x38] sm:$0xff]
  %v28 = vld [vmem:[%s1] sm:$0xff]
  %v29 = vld [vmem:[%s1 + $0x8] sm:$0xff]
  %v30 = vld [vmem:[%s1 + $0x10] sm:$0xff]
  %v31 = vld [vmem:[%s1 + $0x18] sm:$0xff]
  %v32 = vld [vmem:[%s1 + $0x20] sm:$0xff]
  %v33 = vld [vmem:[%s1 + $0x28] sm:$0xff]
  %v34 = vld [vmem:[%s1 + $0x30] sm:$0xff]
  %v35 = vld [vmem:[%s1 + $0x38] sm:$0xff]
  %v36 = vld [vmem:[%s1 + $0x40] sm:$0xff]
  %v37 = vld [vmem:[%s1 + $0x48] sm:$0xff]
  %v38 = vld [vmem:[%s1 + $0x50] sm:$0xff]
  %v39 = vld [vmem:[%s1 + $0x58] sm:$0xff]
  %v40 = vld [vmem:[%s1 + $0x60] sm:$0xff]
  %v41 = vld [vmem:[%s1 + $0x68] sm:$0xff]
  %v42 = vld [vmem:[%s1 + $0x70] sm:$0xff]
  %v43 = vld [vmem:[%s1 + $0x78] sm:$0xff]
  %v44 = vld [vmem:[%s1 + $0x80] sm:$0xff]
  %v45 = vld [vmem:[%s1 + $0x88] sm:$0xff]
  %v46 = vld [vmem:[%s2] sm:$0x1]
  %v48 = vperm.slane %v46, 0
  %vm50 = vcmask 130048
  %v52 = vsel %vm50, %v21, 0
  %v55 = vsel %vm50, %v23, 0
  %v58 = vsel %vm50, %v25, 0
  %v61 = vsel %vm50, %v27, 0
  %63 = vmatpush.msra.mxu0 %v43
  %64 = vmatpush.msra.mxu0 %v42
  %65 = vmatpush.msra.mxu0 %v41
  %66 = vmatpush.msra.mxu0 %v40
  %67 = vmatpush.msra.mxu0 %v39
  %68 = vmatpush.msra.mxu0 %v38
  %69 = vmatpush.msra.mxu0 %v37
  %70 = vmatpush.msra.mxu0 %v36
  %71 = vmatpush.msra.mxu0 %v35
  %72 = vmatpush.msra.mxu0 %v34
  %73 = vmatpush.msra.mxu0 %v33
  %74 = vmatpush.msra.mxu0 %v32
  %75 = vmatpush.msra.mxu0 %v31
  %76 = vmatpush.msra.mxu0 %v30
  %77 = vmatpush.msra.mxu0 %v29
  %78 = vmatpush.msra.mxu0 %v28
  %79 = vmatmul.f32.gmra.mxu0 %v20
  %v80 = vpop.f32.mrf.mxu0
  %v81 = vadd.f32 %v48, %v80
  %82 = vmatmul.f32.gmra.mxu0 %v22
  %v83 = vpop.f32.mrf.mxu0
  %v84 = vadd.f32 %v48, %v83
  %85 = vmatmul.f32.gmra.mxu0 %v24
  %v86 = vpop.f32.mrf.mxu0
  %v87 = vadd.f32 %v48, %v86
  %88 = vmatmul.f32.gmra.mxu0 %v26
  %v89 = vpop.f32.mrf.mxu0
  %v90 = vadd.f32 %v48, %v89
  %91 = vdwg.mxu0
  %92 = vmatpush.msra.mxu0 0.0
  %93 = vmatpush.msra.mxu0 0.0
  %94 = vmatpush.msra.mxu0 0.0
  %95 = vmatpush.msra.mxu0 0.0
  %96 = vmatpush.msra.mxu0 0.0
  %97 = vmatpush.msra.mxu0 0.0
  %98 = vmatpush.msra.mxu0 0.0
  %99 = vmatpush.msra.mxu0 0.0
  %100 = vmatpush.msra.mxu0 0.0
  %101 = vmatpush.msra.mxu0 0.0
  %102 = vmatpush.msra.mxu0 0.0
  %103 = vmatpush.msra.mxu0 0.0
  %104 = vmatpush.msra.mxu0 0.0
  %105 = vmatpush.msra.mxu0 0.0
  %106 = vmatpush.msra.mxu0 %v45
  %107 = vmatpush.msra.mxu0 %v44
  %108 = vmatmul.f32.gmra.mxu0 %v52
  %v109 = vpop.f32.mrf.mxu0
  %v110 = vadd.f32 %v81, %v109
  %111 = vmatmul.f32.gmra.mxu0 %v55
  %v112 = vpop.f32.mrf.mxu0
  %v113 = vadd.f32 %v84, %v112
  %114 = vmatmul.f32.gmra.mxu0 %v58
  %v115 = vpop.f32.mrf.mxu0
  %v116 = vadd.f32 %v87, %v115
  %117 = vmatmul.f32.gmra.mxu0 %v61
  %v118 = vpop.f32.mrf.mxu0
  %v119 = vadd.f32 %v90, %v118
  %120 = vdwg.mxu0
  %vm121 = vcmask 261120
  %v122 = vsel %vm121, %v110, 0.0
  %v123 = vsel %vm121, %v113, 0.0
  %v124 = vadd.f32 %v122, %v123
  %v125 = vsel %vm121, %v116, 0.0
  %v126 = vadd.f32 %v124, %v125
  %v127 = vsel %vm121, %v119, 0.0
  %v128 = vadd.f32 %v126, %v127
  %v129 = vrot.slane %v128, 4
  %v130 = vadd.f32 %v128, %v129
  %v131 = vrot.slane %v130, 2
  %v132 = vadd.f32 %v130, %v131
  %v133 = vrot.slane %v132, 1
  %v134 = vadd.f32 %v132, %v133
  %v135 = vrcp.pop 32.0
  %v136 = vmul.f32 32.0, %v135
  %v137 = vsub.f32 1.0, %v136
  %v138 = vmul.f32 %v135, %v137
  %v139 = vadd.f32 %v135, %v138
  %vm140 = vweird.f32 %v135
  %v141 = vsel %vm140, %v135, %v139
  %v142 = vmul.f32 %v134, %v141
  %v143 = vsub.f32 %v110, %v142
  %v144 = vsub.f32 %v113, %v142
  %v145 = vsub.f32 %v116, %v142
  %v146 = vsub.f32 %v119, %v142
  %v147 = vmul.f32 %v143, %v143
  %v148 = vmul.f32 %v144, %v144
  %v149 = vmul.f32 %v145, %v145
  %v150 = vmul.f32 %v146, %v146
  %v151 = vsel %vm121, %v147, 0.0
  %v152 = vsel %vm121, %v148, 0.0
  %v153 = vadd.f32 %v151, %v152
  %v154 = vsel %vm121, %v149, 0.0
  %v155 = vadd.f32 %v153, %v154
  %v156 = vsel %vm121, %v150, 0.0
  %v157 = vadd.f32 %v155, %v156
  %v158 = vrot.slane %v157, 4
  %v159 = vadd.f32 %v157, %v158
  %v160 = vrot.slane %v159, 2
  %v161 = vadd.f32 %v159, %v160
  %v162 = vrot.slane %v161, 1
  %v163 = vadd.f32 %v161, %v162
  %v164 = vmul.f32 %v163, %v141
  %v165 = vadd.f32 %v164, 1e-05
  %v166 = vrsqrt.pop %v165
  %v167 = vmul.f32 %v166, %v165
  %v168 = vmul.f32 %v167, %v166
  %v169 = vmul.f32 0.5, %v168
  %v170 = vsub.f32 1.5, %v169
  %v171 = vmul.f32 %v166, %v170
  %vm172 = vweird.f32 %v165
  %vm173 = vweird.f32 %v166
  %vm174 = vmor %vm172, %vm173
  %v175 = vsel %vm174, %v166, %v171
  %v176 = vmul.f32 %v143, %v175
  %v177 = vmul.f32 %v144, %v175
  %v178 = vmul.f32 %v145, %v175
  %v179 = vmul.f32 %v146, %v175
  %v180 = vld [vmem:[%s3] sm:$0x1]
  %v182 = vperm.slane %v180, 0
  %v184 = vmul.f32 %v176, %v182
  %v185 = vmul.f32 %v177, %v182
  %v186 = vmul.f32 %v178, %v182
  %v187 = vmul.f32 %v179, %v182
  %v188 = vld [vmem:[%s4] sm:$0x1]
  %v190 = vperm.slane %v188, 0
  %v192 = vadd.f32 %v184, %v190
  %v193 = vadd.f32 %v185, %v190
  %v194 = vadd.f32 %v186, %v190
  %v195 = vadd.f32 %v187, %v190
  %v196 = vmax.f32 %v192, 0.0
  %v197 = vmax.f32 %v193, 0.0
  %v198 = vmax.f32 %v194, 0.0
  %v199 = vmax.f32 %v195, 0.0
  %200 = vst.msk [vmem:[%s5] sm:$0xff] %vm121, %v196
  %201 = vst.msk [vmem:[%s5 + $0x8] sm:$0xff] %vm121, %v197
  %202 = vst.msk [vmem:[%s5 + $0x10] sm:$0xff] %vm121, %v198
  %203 = vst.msk [vmem:[%s5 + $0x18] sm:$0xff] %vm121, %v199
  // Predicated region
  $region22: #{encoder_forward_nchw.15} parent=0 // pred_check
    _
  $region23: #{encoder_forward_nchw.15} parent=0 // pred_check_branch
    %205 = sbr.rel (0) target = $region25
  $region24: #{encoder_forward_nchw.15} parent=0 // pred_region
    _
  $region25: #{encoder_forward_nchw.15} parent=0 // pred_fallthru
    _
  // Predicated region
  $region26: #{encoder_forward_nchw.15} parent=0 // pred_check
    _
  $region27: #{encoder_forward_nchw.15} parent=0 // pred_check_branch
    %207 = sbr.rel (0) target = $region29
  $region28: #{encoder_forward_nchw.15} parent=0 // pred_region
    _
  $region29: #{encoder_forward_nchw.15} parent=0 // pred_fallthru
    _

// kernel: encoder_forward_nchw.16
$region0: #{encoder_forward_nchw.16}
  #allocation0 [shape = 'u32[]', space=smem, size = 0x4, offset = 0x4, fixed_abs, tag = 'smem constant byte address 0x4 - core index']
  #allocation1 [shape = 'u32[72,128]{1,0:T(1,128)}', space=vmem, size = 0x9000, scoped, tag = 'internal scratch']
  %s0 = inlined_call_operand.vmem [shape: f32[32,288], index: 0, kind: input, shape index: {}]
  %s1 = inlined_call_operand.vmem [shape: f32[288,32], index: 1, kind: input, shape index: {}]
  %s2 = inlined_call_operand.vmem [shape: f32[1,32], index: 2, kind: input, shape index: {}]
  %s3 = inlined_call_operand.vmem [shape: f32[1,32], index: 3, kind: input, shape index: {}]
  %s4 = inlined_call_operand.vmem [shape: f32[1,32], index: 4, kind: input, shape index: {}]
  %s5 = inlined_call_operand.vmem [shape: f32[32,32], index: 5, kind: output, shape index: {}]
  %s6 = sld [smem:[#allocation0]]
  $region30: #{encoder_forward_nchw.16} parent=0
    _
  %s8 = ssub.s32 1, %s6
  %s9 = scalar_select 0, %s8, %s6
  // Predicated region
  $region2: #{encoder_forward_nchw.16} parent=0 // pred_check
    _
  $region3: #{encoder_forward_nchw.16} parent=0 // pred_check_branch
    %11 = sbr.rel (0) target = $region5
  $region4: #{encoder_forward_nchw.16} parent=0 // pred_region
    _
  $region5: #{encoder_forward_nchw.16} parent=0 // pred_fallthru
    _
  // Predicated region
  $region6: #{encoder_forward_nchw.16} parent=0 // pred_check
    _
  $region7: #{encoder_forward_nchw.16} parent=0 // pred_check_branch
    %13 = sbr.rel (0) target = $region9
  $region8: #{encoder_forward_nchw.16} parent=0 // pred_region
    _
  $region9: #{encoder_forward_nchw.16} parent=0 // pred_fallthru
    _
  // Predicated region
  $region10: #{encoder_forward_nchw.16} parent=0 // pred_check
    _
  $region11: #{encoder_forward_nchw.16} parent=0 // pred_check_branch
    %15 = sbr.rel (0) target = $region13
  $region12: #{encoder_forward_nchw.16} parent=0 // pred_region
    _
  $region13: #{encoder_forward_nchw.16} parent=0 // pred_fallthru
    _
  // Predicated region
  $region14: #{encoder_forward_nchw.16} parent=0 // pred_check
    _
  $region15: #{encoder_forward_nchw.16} parent=0 // pred_check_branch
    %17 = sbr.rel (0) target = $region17
  $region16: #{encoder_forward_nchw.16} parent=0 // pred_region
    _
  $region17: #{encoder_forward_nchw.16} parent=0 // pred_fallthru
    _
  // Predicated region
  $region18: #{encoder_forward_nchw.16} parent=0 // pred_check
    _
  $region19: #{encoder_forward_nchw.16} parent=0 // pred_check_branch
    %19 = sbr.rel (0) target = $region21
  $region20: #{encoder_forward_nchw.16} parent=0 // pred_region
    _
  $region21: #{encoder_forward_nchw.16} parent=0 // pred_fallthru
    _
  %v20 = vld [vmem:[%s0] sm:$0xff]
  %v21 = vld [vmem:[%s0 + $0x8] sm:$0xff]
  %v22 = vld [vmem:[%s0 + $0x10] sm:$0xff]
  %v23 = vld [vmem:[%s0 + $0x18] sm:$0xff]
  %v24 = vld [vmem:[%s0 + $0x20] sm:$0xff]
  %v25 = vld [vmem:[%s0 + $0x28] sm:$0xff]
  %v26 = vld [vmem:[%s0 + $0x30] sm:$0xff]
  %v27 = vld [vmem:[%s0 + $0x38] sm:$0xff]
  %v28 = vld [vmem:[%s0 + $0x40] sm:$0xff]
  %v29 = vld [vmem:[%s0 + $0x48] sm:$0xff]
  %v30 = vld [vmem:[%s0 + $0x50] sm:$0xff]
  %v31 = vld [vmem:[%s0 + $0x58] sm:$0xff]
  %v32 = vld [vmem:[%s1] sm:$0xff]
  %v33 = vld [vmem:[%s1 + $0x8] sm:$0xff]
  %v34 = vld [vmem:[%s1 + $0x10] sm:$0xff]
  %v35 = vld [vmem:[%s1 + $0x18] sm:$0xff]
  %v36 = vld [vmem:[%s1 + $0x20] sm:$0xff]
  %v37 = vld [vmem:[%s1 + $0x28] sm:$0xff]
  %v38 = vld [vmem:[%s1 + $0x30] sm:$0xff]
  %v39 = vld [vmem:[%s1 + $0x38] sm:$0xff]
  %v40 = vld [vmem:[%s1 + $0x40] sm:$0xff]
  %v41 = vld [vmem:[%s1 + $0x48] sm:$0xff]
  %v42 = vld [vmem:[%s1 + $0x50] sm:$0xff]
  %v43 = vld [vmem:[%s1 + $0x58] sm:$0xff]
  %v44 = vld [vmem:[%s1 + $0x60] sm:$0xff]
  %v45 = vld [vmem:[%s1 + $0x68] sm:$0xff]
  %v46 = vld [vmem:[%s1 + $0x70] sm:$0xff]
  %v47 = vld [vmem:[%s1 + $0x78] sm:$0xff]
  %v48 = vld [vmem:[%s1 + $0x80] sm:$0xff]
  %v49 = vld [vmem:[%s1 + $0x88] sm:$0xff]
  %v50 = vld [vmem:[%s1 + $0x90] sm:$0xff]
  %v51 = vld [vmem:[%s1 + $0x98] sm:$0xff]
  %v52 = vld [vmem:[%s1 + $0xa0] sm:$0xff]
  %v53 = vld [vmem:[%s1 + $0xa8] sm:$0xff]
  %v54 = vld [vmem:[%s1 + $0xb0] sm:$0xff]
  %v55 = vld [vmem:[%s1 + $0xb8] sm:$0xff]
  %v56 = vld [vmem:[%s1 + $0xc0] sm:$0xff]
  %v57 = vld [vmem:[%s1 + $0xc8] sm:$0xff]
  %v58 = vld [vmem:[%s1 + $0xd0] sm:$0xff]
  %v59 = vld [vmem:[%s1 + $0xd8] sm:$0xff]
  %v60 = vld [vmem:[%s1 + $0xe0] sm:$0xff]
  %v61 = vld [vmem:[%s1 + $0xe8] sm:$0xff]
  %v62 = vld [vmem:[%s1 + $0xf0] sm:$0xff]
  %v63 = vld [vmem:[%s1 + $0xf8] sm:$0xff]
  %v64 = vld [vmem:[%s1 + $0x100] sm:$0xff]
  %v65 = vld [vmem:[%s1 + $0x108] sm:$0xff]
  %v66 = vld [vmem:[%s1 + $0x110] sm:$0xff]
  %v67 = vld [vmem:[%s1 + $0x118] sm:$0xff]
  %v68 = vld [vmem:[%s2] sm:$0x1]
  %v70 = vperm.slane %v68, 0
  %vm72 = vcmask 261120
  %v74 = vsel %vm72, %v22, 0
  %v77 = vsel %vm72, %v25, 0
  %v80 = vsel %vm72, %v28, 0
  %v83 = vsel %vm72, %v31, 0
  %85 = vmatpush.msra.mxu0 %v47
  %86 = vmatpush.msra.mxu0 %v46
  %87 = vmatpush.msra.mxu0 %v45
  %88 = vmatpush.msra.mxu0 %v44
  %89 = vmatpush.msra.mxu0 %v43
  %90 = vmatpush.msra.mxu0 %v42
  %91 = vmatpush.msra.mxu0 %v41
  %92 = vmatpush.msra.mxu0 %v40
  %93 = vmatpush.msra.mxu0 %v39
  %94 = vmatpush.msra.mxu0 %v38
  %95 = vmatpush.msra.mxu0 %v37
  %96 = vmatpush.msra.mxu0 %v36
  %97 = vmatpush.msra.mxu0 %v35
  %98 = vmatpush.msra.mxu0 %v34
  %99 = vmatpush.msra.mxu0 %v33
  %100 = vmatpush.msra.mxu0 %v32
  %101 = vmatmul.f32.gmra.mxu0 %v20
  %v102 = vpop.f32.mrf.mxu0
  %v103 = vadd.f32 %v70, %v102
  %104 = vmatmul.f32.gmra.mxu0 %v23
  %v105 = vpop.f32.mrf.mxu0
  %v106 = vadd.f32 %v70, %v105
  %107 = vmatmul.f32.gmra.mxu0 %v26
  %v108 = vpop.f32.mrf.mxu0
  %v109 = vadd.f32 %v70, %v108
  %110 = vmatmul.f32.gmra.mxu0 %v29
  %v111 = vpop.f32.mrf.mxu0
  %v112 = vadd.f32 %v70, %v111
  %113 = vdwg.mxu0
  %114 = vmatpush.msra.mxu0 %v63
  %115 = vmatpush.msra.mxu0 %v62
  %116 = vmatpush.msra.mxu0 %v61
  %117 = vmatpush.msra.mxu0 %v60
  %118 = vmatpush.msra.mxu0 %v59
  %119 = vmatpush.msra.mxu0 %v58
  %120 = vmatpush.msra.mxu0 %v57
  %121 = vmatpush.msra.mxu0 %v56
  %122 = vmatpush.msra.mxu0 %v55
  %123 = vmatpush.msra.mxu0 %v54
  %124 = vmatpush.msra.mxu0 %v53
  %125 = vmatpush.msra.mxu0 %v52
  %126 = vmatpush.msra.mxu0 %v51
  %127 = vmatpush.msra.mxu0 %v50
  %128 = vmatpush.msra.mxu0 %v49
  %129 = vmatpush.msra.mxu0 %v48
  %130 = vmatmul.f32.gmra.mxu0 %v21
  %v131 = vpop.f32.mrf.mxu0
  %v132 = vadd.f32 %v103, %v131
  %133 = vmatmul.f32.gmra.mxu0 %v24
  %v134 = vpop.f32.mrf.mxu0
  %v135 = vadd.f32 %v106, %v134
  %136 = vmatmul.f32.gmra.mxu0 %v27
  %v137 = vpop.f32.mrf.mxu0
  %v138 = vadd.f32 %v109, %v137
  %139 = vmatmul.f32.gmra.mxu0 %v30
  %v140 = vpop.f32.mrf.mxu0
  %v141 = vadd.f32 %v112, %v140
  %142 = vdwg.mxu0
  %143 = vmatpush.msra.mxu0 0.0
  %144 = vmatpush.msra.mxu0 0.0
  %145 = vmatpush.msra.mxu0 0.0
  %146 = vmatpush.msra.mxu0 0.0
  %147 = vmatpush.msra.mxu0 0.0
  %148 = vmatpush.msra.mxu0 0.0
  %149 = vmatpush.msra.mxu0 0.0
  %150 = vmatpush.msra.mxu0 0.0
  %151 = vmatpush.msra.mxu0 0.0
  %152 = vmatpush.msra.mxu0 0.0
  %153 = vmatpush.msra.mxu0 0.0
  %154 = vmatpush.msra.mxu0 0.0
  %155 = vmatpush.msra.mxu0 %v67
  %156 = vmatpush.msra.mxu0 %v66
  %157 = vmatpush.msra.mxu0 %v65
  %158 = vmatpush.msra.mxu0 %v64
  %159 = vmatmul.f32.gmra.mxu0 %v74
  %v160 = vpop.f32.mrf.mxu0
  %v161 = vadd.f32 %v132, %v160
  %162 = vmatmul.f32.gmra.mxu0 %v77
  %v163 = vpop.f32.mrf.mxu0
  %v164 = vadd.f32 %v135, %v163
  %165 = vmatmul.f32.gmra.mxu0 %v80
  %v166 = vpop.f32.mrf.mxu0
  %v167 = vadd.f32 %v138, %v166
  %168 = vmatmul.f32.gmra.mxu0 %v83
  %v169 = vpop.f32.mrf.mxu0
  %v170 = vadd.f32 %v141, %v169
  %171 = vdwg.mxu0
  %v172 = vsel %vm72, %v161, 0.0
  %v173 = vsel %vm72, %v164, 0.0
  %v174 = vadd.f32 %v172, %v173
  %v175 = vsel %vm72, %v167, 0.0
  %v176 = vadd.f32 %v174, %v175
  %v177 = vsel %vm72, %v170, 0.0
  %v178 = vadd.f32 %v176, %v177
  %v179 = vrot.slane %v178, 4
  %v180 = vadd.f32 %v178, %v179
  %v181 = vrot.slane %v180, 2
  %v182 = vadd.f32 %v180, %v181
  %v183 = vrot.slane %v182, 1
  %v184 = vadd.f32 %v182, %v183
  %v185 = vrcp.pop 32.0
  %v186 = vmul.f32 32.0, %v185
  %v187 = vsub.f32 1.0, %v186
  %v188 = vmul.f32 %v185, %v187
  %v189 = vadd.f32 %v185, %v188
  %vm190 = vweird.f32 %v185
  %v191 = vsel %vm190, %v185, %v189
  %v192 = vmul.f32 %v184, %v191
  %v193 = vsub.f32 %v161, %v192
  %v194 = vsub.f32 %v164, %v192
  %v195 = vsub.f32 %v167, %v192
  %v196 = vsub.f32 %v170, %v192
  %v197 = vmul.f32 %v193, %v193
  %v198 = vmul.f32 %v194, %v194
  %v199 = vmul.f32 %v195, %v195
  %v200 = vmul.f32 %v196, %v196
  %v201 = vsel %vm72, %v197, 0.0
  %v202 = vsel %vm72, %v198, 0.0
  %v203 = vadd.f32 %v201, %v202
  %v204 = vsel %vm72, %v199, 0.0
  %v205 = vadd.f32 %v203, %v204
  %v206 = vsel %vm72, %v200, 0.0
  %v207 = vadd.f32 %v205, %v206
  %v208 = vrot.slane %v207, 4
  %v209 = vadd.f32 %v207, %v208
  %v210 = vrot.slane %v209, 2
  %v211 = vadd.f32 %v209, %v210
  %v212 = vrot.slane %v211, 1
  %v213 = vadd.f32 %v211, %v212
  %v214 = vmul.f32 %v213, %v191
  %v215 = vadd.f32 %v214, 1e-05
  %v216 = vrsqrt.pop %v215
  %v217 = vmul.f32 %v216, %v215
  %v218 = vmul.f32 %v217, %v216
  %v219 = vmul.f32 0.5, %v218
  %v220 = vsub.f32 1.5, %v219
  %v221 = vmul.f32 %v216, %v220
  %vm222 = vweird.f32 %v215
  %vm223 = vweird.f32 %v216
  %vm224 = vmor %vm222, %vm223
  %v225 = vsel %vm224, %v216, %v221
  %v226 = vmul.f32 %v193, %v225
  %v227 = vmul.f32 %v194, %v225
  %v228 = vmul.f32 %v195, %v225
  %v229 = vmul.f32 %v196, %v225
  %v230 = vld [vmem:[%s3] sm:$0x1]
  %v232 = vperm.slane %v230, 0
  %v234 = vmul.f32 %v226, %v232
  %v235 = vmul.f32 %v227, %v232
  %v236 = vmul.f32 %v228, %v232
  %v237 = vmul.f32 %v229, %v232
  %v238 = vld [vmem:[%s4] sm:$0x1]
  %v240 = vperm.slane %v238, 0
  %v242 = vadd.f32 %v234, %v240
  %v243 = vadd.f32 %v235, %v240
  %v244 = vadd.f32 %v236, %v240
  %v245 = vadd.f32 %v237, %v240
  %v246 = vmax.f32 %v242, 0.0
  %v247 = vmax.f32 %v243, 0.0
  %v248 = vmax.f32 %v244, 0.0
  %v249 = vmax.f32 %v245, 0.0
  %250 = vst.msk [vmem:[%s5] sm:$0xff] %vm72, %v246
  %251 = vst.msk [vmem:[%s5 + $0x8] sm:$0xff] %vm72, %v247
  %252 = vst.msk [vmem:[%s5 + $0x10] sm:$0xff] %vm72, %v248
  %253 = vst.msk [vmem:[%s5 + $0x18] sm:$0xff] %vm72, %v249
  // Predicated region
  $region22: #{encoder_forward_nchw.16} parent=0 // pred_check
    _
  $region23: #{encoder_forward_nchw.16} parent=0 // pred_check_branch
    %255 = sbr.rel (0) target = $region25
  $region24: #{encoder_forward_nchw.16} parent=0 // pred_region
    _
  $region25: #{encoder_forward_nchw.16} parent=0 // pred_fallthru
    _
  // Predicated region
  $region26: #{encoder_forward_nchw.16} parent=0 // pred_check
    _
  $region27: #{encoder_forward_nchw.16} parent=0 // pred_check_branch
    %257 = sbr.rel (0) target = $region29
  $region28: #{encoder_forward_nchw.16} parent=0 // pred_region
    _
  $region29: #{encoder_forward_nchw.16} parent=0 // pred_fallthru
    _

// kernel: encoder_forward_nchw.17
$region0: #{encoder_forward_nchw.17}
  #allocation0 [shape = 'u32[]', space=smem, size = 0x4, offset = 0x4, fixed_abs, tag = 'smem constant byte address 0x4 - core index']
  #allocation1 [shape = 'u32[72,128]{1,0:T(1,128)}', space=vmem, size = 0x9000, scoped, tag = 'internal scratch']
  %s0 = inlined_call_operand.vmem [shape: f32[32,288], index: 0, kind: input, shape index: {}]
  %s1 = inlined_call_operand.vmem [shape: f32[288,32], index: 1, kind: input, shape index: {}]
  %s2 = inlined_call_operand.vmem [shape: f32[1,32], index: 2, kind: input, shape index: {}]
  %s3 = inlined_call_operand.vmem [shape: f32[1,32], index: 3, kind: input, shape index: {}]
  %s4 = inlined_call_operand.vmem [shape: f32[1,32], index: 4, kind: input, shape index: {}]
  %s5 = inlined_call_operand.vmem [shape: f32[32,32], index: 5, kind: input, shape index: {}]
  %s6 = inlined_call_operand.hbm [shape: f32[32,32], index: 6, kind: output, shape index: {}]
  %s7 = sld [smem:[#allocation0]]
  $region34: #{encoder_forward_nchw.17} parent=0
    _
  %s9 = ssub.s32 1, %s7
  %s10 = scalar_select 0, %s9, %s7
  $region1: #{encoder_forward_nchw.17} parent=0
    #allocation2 [shape = 'u8[16384]{0}', space=vmem, size = 0x4000, scoped, tag = 'output window, operand 0, single buffered']
    #allocation3 [shape = 's32[1]{0}', space=sflag, size = 0x4, scoped, tag = 'scoped memory for encoder_forward_nchw.17']
    %11 = vsyncpa [#allocation3], 0
    // Predicated region
    $region2: #{encoder_forward_nchw.17} parent=1 // pred_check
      _
    $region3: #{encoder_forward_nchw.17} parent=1 // pred_check_branch
      %13 = sbr.rel (0) target = $region5
    $region4: #{encoder_forward_nchw.17} parent=1 // pred_region
      _
    $region5: #{encoder_forward_nchw.17} parent=1 // pred_fallthru
      _
    // Predicated region
    $region6: #{encoder_forward_nchw.17} parent=1 // pred_check
      _
    $region7: #{encoder_forward_nchw.17} parent=1 // pred_check_branch
      %15 = sbr.rel (0) target = $region9
    $region8: #{encoder_forward_nchw.17} parent=1 // pred_region
      _
    $region9: #{encoder_forward_nchw.17} parent=1 // pred_fallthru
      _
    // Predicated region
    $region10: #{encoder_forward_nchw.17} parent=1 // pred_check
      _
    $region11: #{encoder_forward_nchw.17} parent=1 // pred_check_branch
      %17 = sbr.rel (0) target = $region13
    $region12: #{encoder_forward_nchw.17} parent=1 // pred_region
      _
    $region13: #{encoder_forward_nchw.17} parent=1 // pred_fallthru
      _
    // Predicated region
    $region14: #{encoder_forward_nchw.17} parent=1 // pred_check
      _
    $region15: #{encoder_forward_nchw.17} parent=1 // pred_check_branch
      %19 = sbr.rel (0) target = $region17
    $region16: #{encoder_forward_nchw.17} parent=1 // pred_region
      _
    $region17: #{encoder_forward_nchw.17} parent=1 // pred_fallthru
      _
    // Predicated region
    $region18: #{encoder_forward_nchw.17} parent=1 // pred_check
      _
    $region19: #{encoder_forward_nchw.17} parent=1 // pred_check_branch
      %21 = sbr.rel (0) target = $region21
    $region20: #{encoder_forward_nchw.17} parent=1 // pred_region
      _
    $region21: #{encoder_forward_nchw.17} parent=1 // pred_fallthru
      _
    // Predicated region
    $region22: #{encoder_forward_nchw.17} parent=1 // pred_check
      _
    $region23: #{encoder_forward_nchw.17} parent=1 // pred_check_branch
      %23 = sbr.rel (0) target = $region25
    $region24: #{encoder_forward_nchw.17} parent=1 // pred_region
      _
    $region25: #{encoder_forward_nchw.17} parent=1 // pred_fallthru
      _
    %v24 = vld [vmem:[%s0] sm:$0xff]
    %v25 = vld [vmem:[%s0 + $0x8] sm:$0xff]
    %v26 = vld [vmem:[%s0 + $0x10] sm:$0xff]
    %v27 = vld [vmem:[%s0 + $0x18] sm:$0xff]
    %v28 = vld [vmem:[%s0 + $0x20] sm:$0xff]
    %v29 = vld [vmem:[%s0 + $0x28] sm:$0xff]
    %v30 = vld [vmem:[%s0 + $0x30] sm:$0xff]
    %v31 = vld [vmem:[%s0 + $0x38] sm:$0xff]
    %v32 = vld [vmem:[%s0 + $0x40] sm:$0xff]
    %v33 = vld [vmem:[%s0 + $0x48] sm:$0xff]
    %v34 = vld [vmem:[%s0 + $0x50] sm:$0xff]
    %v35 = vld [vmem:[%s0 + $0x58] sm:$0xff]
    %v36 = vld [vmem:[%s1] sm:$0xff]
    %v37 = vld [vmem:[%s1 + $0x8] sm:$0xff]
    %v38 = vld [vmem:[%s1 + $0x10] sm:$0xff]
    %v39 = vld [vmem:[%s1 + $0x18] sm:$0xff]
    %v40 = vld [vmem:[%s1 + $0x20] sm:$0xff]
    %v41 = vld [vmem:[%s1 + $0x28] sm:$0xff]
    %v42 = vld [vmem:[%s1 + $0x30] sm:$0xff]
    %v43 = vld [vmem:[%s1 + $0x38] sm:$0xff]
    %v44 = vld [vmem:[%s1 + $0x40] sm:$0xff]
    %v45 = vld [vmem:[%s1 + $0x48] sm:$0xff]
    %v46 = vld [vmem:[%s1 + $0x50] sm:$0xff]
    %v47 = vld [vmem:[%s1 + $0x58] sm:$0xff]
    %v48 = vld [vmem:[%s1 + $0x60] sm:$0xff]
    %v49 = vld [vmem:[%s1 + $0x68] sm:$0xff]
    %v50 = vld [vmem:[%s1 + $0x70] sm:$0xff]
    %v51 = vld [vmem:[%s1 + $0x78] sm:$0xff]
    %v52 = vld [vmem:[%s1 + $0x80] sm:$0xff]
    %v53 = vld [vmem:[%s1 + $0x88] sm:$0xff]
    %v54 = vld [vmem:[%s1 + $0x90] sm:$0xff]
    %v55 = vld [vmem:[%s1 + $0x98] sm:$0xff]
    %v56 = vld [vmem:[%s1 + $0xa0] sm:$0xff]
    %v57 = vld [vmem:[%s1 + $0xa8] sm:$0xff]
    %v58 = vld [vmem:[%s1 + $0xb0] sm:$0xff]
    %v59 = vld [vmem:[%s1 + $0xb8] sm:$0xff]
    %v60 = vld [vmem:[%s1 + $0xc0] sm:$0xff]
    %v61 = vld [vmem:[%s1 + $0xc8] sm:$0xff]
    %v62 = vld [vmem:[%s1 + $0xd0] sm:$0xff]
    %v63 = vld [vmem:[%s1 + $0xd8] sm:$0xff]
    %v64 = vld [vmem:[%s1 + $0xe0] sm:$0xff]
    %v65 = vld [vmem:[%s1 + $0xe8] sm:$0xff]
    %v66 = vld [vmem:[%s1 + $0xf0] sm:$0xff]
    %v67 = vld [vmem:[%s1 + $0xf8] sm:$0xff]
    %v68 = vld [vmem:[%s1 + $0x100] sm:$0xff]
    %v69 = vld [vmem:[%s1 + $0x108] sm:$0xff]
    %v70 = vld [vmem:[%s1 + $0x110] sm:$0xff]
    %v71 = vld [vmem:[%s1 + $0x118] sm:$0xff]
    %v72 = vld [vmem:[%s2] sm:$0x1]
    %v74 = vperm.slane %v72, 0
    %vm76 = vcmask 261120
    %v78 = vsel %vm76, %v26, 0
    %v81 = vsel %vm76, %v29, 0
    %v84 = vsel %vm76, %v32, 0
    %v87 = vsel %vm76, %v35, 0
    %89 = vmatpush.msra.mxu0 %v51
    %90 = vmatpush.msra.mxu0 %v50
    %91 = vmatpush.msra.mxu0 %v49
    %92 = vmatpush.msra.mxu0 %v48
    %93 = vmatpush.msra.mxu0 %v47
    %94 = vmatpush.msra.mxu0 %v46
    %95 = vmatpush.msra.mxu0 %v45
    %96 = vmatpush.msra.mxu0 %v44
    %97 = vmatpush.msra.mxu0 %v43
    %98 = vmatpush.msra.mxu0 %v42
    %99 = vmatpush.msra.mxu0 %v41
    %100 = vmatpush.msra.mxu0 %v40
    %101 = vmatpush.msra.mxu0 %v39
    %102 = vmatpush.msra.mxu0 %v38
    %103 = vmatpush.msra.mxu0 %v37
    %104 = vmatpush.msra.mxu0 %v36
    %105 = vmatmul.f32.gmra.mxu0 %v24
    %v106 = vpop.f32.mrf.mxu0
    %v107 = vadd.f32 %v74, %v106
    %108 = vmatmul.f32.gmra.mxu0 %v27
    %v109 = vpop.f32.mrf.mxu0
    %v110 = vadd.f32 %v74, %v109
    %111 = vmatmul.f32.gmra.mxu0 %v30
    %v112 = vpop.f32.mrf.mxu0
    %v113 = vadd.f32 %v74, %v112
    %114 = vmatmul.f32.gmra.mxu0 %v33
    %v115 = vpop.f32.mrf.mxu0
    %v116 = vadd.f32 %v74, %v115
    %117 = vdwg.mxu0
    %118 = vmatpush.msra.mxu0 %v67
    %119 = vmatpush.msra.mxu0 %v66
    %120 = vmatpush.msra.mxu0 %v65
    %121 = vmatpush.msra.mxu0 %v64
    %122 = vmatpush.msra.mxu0 %v63
    %123 = vmatpush.msra.mxu0 %v62
    %124 = vmatpush.msra.mxu0 %v61
    %125 = vmatpush.msra.mxu0 %v60
    %126 = vmatpush.msra.mxu0 %v59
    %127 = vmatpush.msra.mxu0 %v58
    %128 = vmatpush.msra.mxu0 %v57
    %129 = vmatpush.msra.mxu0 %v56
    %130 = vmatpush.msra.mxu0 %v55
    %131 = vmatpush.msra.mxu0 %v54
    %132 = vmatpush.msra.mxu0 %v53
    %133 = vmatpush.msra.mxu0 %v52
    %134 = vmatmul.f32.gmra.mxu0 %v25
    %v135 = vpop.f32.mrf.mxu0
    %v136 = vadd.f32 %v107, %v135
    %137 = vmatmul.f32.gmra.mxu0 %v28
    %v138 = vpop.f32.mrf.mxu0
    %v139 = vadd.f32 %v110, %v138
    %140 = vmatmul.f32.gmra.mxu0 %v31
    %v141 = vpop.f32.mrf.mxu0
    %v142 = vadd.f32 %v113, %v141
    %143 = vmatmul.f32.gmra.mxu0 %v34
    %v144 = vpop.f32.mrf.mxu0
    %v145 = vadd.f32 %v116, %v144
    %146 = vdwg.mxu0
    %147 = vmatpush.msra.mxu0 0.0
    %148 = vmatpush.msra.mxu0 0.0
    %149 = vmatpush.msra.mxu0 0.0
    %150 = vmatpush.msra.mxu0 0.0
    %151 = vmatpush.msra.mxu0 0.0
    %152 = vmatpush.msra.mxu0 0.0
    %153 = vmatpush.msra.mxu0 0.0
    %154 = vmatpush.msra.mxu0 0.0
    %155 = vmatpush.msra.mxu0 0.0
    %156 = vmatpush.msra.mxu0 0.0
    %157 = vmatpush.msra.mxu0 0.0
    %158 = vmatpush.msra.mxu0 0.0
    %159 = vmatpush.msra.mxu0 %v71
    %160 = vmatpush.msra.mxu0 %v70
    %161 = vmatpush.msra.mxu0 %v69
    %162 = vmatpush.msra.mxu0 %v68
    %163 = vmatmul.f32.gmra.mxu0 %v78
    %v164 = vpop.f32.mrf.mxu0
    %v165 = vadd.f32 %v136, %v164
    %166 = vmatmul.f32.gmra.mxu0 %v81
    %v167 = vpop.f32.mrf.mxu0
    %v168 = vadd.f32 %v139, %v167
    %169 = vmatmul.f32.gmra.mxu0 %v84
    %v170 = vpop.f32.mrf.mxu0
    %v171 = vadd.f32 %v142, %v170
    %172 = vmatmul.f32.gmra.mxu0 %v87
    %v173 = vpop.f32.mrf.mxu0
    %v174 = vadd.f32 %v145, %v173
    %175 = vdwg.mxu0
    %v176 = vsel %vm76, %v165, 0.0
    %v177 = vsel %vm76, %v168, 0.0
    %v178 = vadd.f32 %v176, %v177
    %v179 = vsel %vm76, %v171, 0.0
    %v180 = vadd.f32 %v178, %v179
    %v181 = vsel %vm76, %v174, 0.0
    %v182 = vadd.f32 %v180, %v181
    %v183 = vrot.slane %v182, 4
    %v184 = vadd.f32 %v182, %v183
    %v185 = vrot.slane %v184, 2
    %v186 = vadd.f32 %v184, %v185
    %v187 = vrot.slane %v186, 1
    %v188 = vadd.f32 %v186, %v187
    %v189 = vrcp.pop 32.0
    %v190 = vmul.f32 32.0, %v189
    %v191 = vsub.f32 1.0, %v190
    %v192 = vmul.f32 %v189, %v191
    %v193 = vadd.f32 %v189, %v192
    %vm194 = vweird.f32 %v189
    %v195 = vsel %vm194, %v189, %v193
    %v196 = vmul.f32 %v188, %v195
    %v197 = vsub.f32 %v165, %v196
    %v198 = vsub.f32 %v168, %v196
    %v199 = vsub.f32 %v171, %v196
    %v200 = vsub.f32 %v174, %v196
    %v201 = vmul.f32 %v197, %v197
    %v202 = vmul.f32 %v198, %v198
    %v203 = vmul.f32 %v199, %v199
    %v204 = vmul.f32 %v200, %v200
    %v205 = vsel %vm76, %v201, 0.0
    %v206 = vsel %vm76, %v202, 0.0
    %v207 = vadd.f32 %v205, %v206
    %v208 = vsel %vm76, %v203, 0.0
    %v209 = vadd.f32 %v207, %v208
    %v210 = vsel %vm76, %v204, 0.0
    %v211 = vadd.f32 %v209, %v210
    %v212 = vrot.slane %v211, 4
    %v213 = vadd.f32 %v211, %v212
    %v214 = vrot.slane %v213, 2
    %v215 = vadd.f32 %v213, %v214
    %v216 = vrot.slane %v215, 1
    %v217 = vadd.f32 %v215, %v216
    %v218 = vmul.f32 %v217, %v195
    %v219 = vadd.f32 %v218, 1e-05
    %v220 = vrsqrt.pop %v219
    %v221 = vmul.f32 %v220, %v219
    %v222 = vmul.f32 %v221, %v220
    %v223 = vmul.f32 0.5, %v222
    %v224 = vsub.f32 1.5, %v223
    %v225 = vmul.f32 %v220, %v224
    %vm226 = vweird.f32 %v219
    %vm227 = vweird.f32 %v220
    %vm228 = vmor %vm226, %vm227
    %v229 = vsel %vm228, %v220, %v225
    %v230 = vmul.f32 %v197, %v229
    %v231 = vmul.f32 %v198, %v229
    %v232 = vmul.f32 %v199, %v229
    %v233 = vmul.f32 %v200, %v229
    %v234 = vld [vmem:[%s3] sm:$0x1]
    %v236 = vperm.slane %v234, 0
    %v238 = vmul.f32 %v230, %v236
    %v239 = vmul.f32 %v231, %v236
    %v240 = vmul.f32 %v232, %v236
    %v241 = vmul.f32 %v233, %v236
    %v242 = vld [vmem:[%s4] sm:$0x1]
    %v244 = vperm.slane %v242, 0
    %v246 = vadd.f32 %v238, %v244
    %v247 = vadd.f32 %v239, %v244
    %v248 = vadd.f32 %v240, %v244
    %v249 = vadd.f32 %v241, %v244
    %v250 = vld [vmem:[%s5] sm:$0xff]
    %v251 = vld [vmem:[%s5 + $0x8] sm:$0xff]
    %v252 = vld [vmem:[%s5 + $0x10] sm:$0xff]
    %v253 = vld [vmem:[%s5 + $0x18] sm:$0xff]
    %v254 = vadd.f32 %v246, %v250
    %v255 = vadd.f32 %v247, %v251
    %v256 = vadd.f32 %v248, %v252
    %v257 = vadd.f32 %v249, %v253
    %v258 = vmax.f32 %v254, 0.0
    %v259 = vmax.f32 %v255, 0.0
    %v260 = vmax.f32 %v256, 0.0
    %v261 = vmax.f32 %v257, 0.0
    %262 = vst.msk [vmem:[#allocation2] sm:$0xff] %vm76, %v258
    %263 = vst.msk [vmem:[#allocation2 + $0x8] sm:$0xff] %vm76, %v259
    %264 = vst.msk [vmem:[#allocation2 + $0x10] sm:$0xff] %vm76, %v260
    %265 = vst.msk [vmem:[#allocation2 + $0x18] sm:$0xff] %vm76, %v261
    // Predicated region
    $region26: #{encoder_forward_nchw.17} parent=1 // pred_check
      _
    $region27: #{encoder_forward_nchw.17} parent=1 // pred_check_branch
      %267 = sbr.rel (0) target = $region29
    $region28: #{encoder_forward_nchw.17} parent=1 // pred_region
      %269 = vsyncadd [#allocation3], 0
      %s270 = sshll.u32 [#allocation2], 4
      %s271 = int_to_ptr.vmem [resolvable:$true] %s270
      %s272 = sshll.u32 %s6, 4
      %s273 = int_to_ptr.hbm [resolvable:$true] %s272
      %278 = dma.vmem_to_hbm [thread:$0]  %s271, 512, %s273, [#allocation3], 128, 128, 8
    $region29: #{encoder_forward_nchw.17} parent=1 // pred_fallthru
      _
    // Predicated region
    $region30: #{encoder_forward_nchw.17} parent=1 // pred_check
      _
    $region31: #{encoder_forward_nchw.17} parent=1 // pred_check_branch
      %280 = sbr.rel (0) target = $region33
    $region32: #{encoder_forward_nchw.17} parent=1 // pred_region
      %282 = dma.done [#allocation3], 512
    $region33: #{encoder_forward_nchw.17} parent=1 // pred_fallthru
      _
    %283 = vsyncpa [#allocation3], 1

</llo_original>
